<compile_context>
chip_gen: v7x
topology: tpu7x:2x2x1
jax: 0.10.0
libtpu: 0.0.40
codegen_flags: <defaults>
</compile_context>

<pallas_src>
import jax
import jax.numpy as jnp
import numpy as np
from jax import lax
from jax.experimental import pallas as pl
from jax.experimental.pallas import tpu as pltpu

EPS = 1e-5
LANE = 128
_VMEM_LIMIT = 48 * 1024 * 1024   # <= 48 MiB: safe on v7x (64 MiB/TC), ample v5e/v6e


def _round_up(x, m):
    return (x + m - 1) // m * m


def _pad_weight(w, cin_p, cout_p):
    kh, kw, cin, cout = w.shape
    return jnp.pad(w, ((0, 0), (0, 0), (0, cin_p - cin),
                       (0, cout_p - cout))).astype(jnp.bfloat16)


def _pad_vec(v, c_p, fill):
    return jnp.pad(v, (0, c_p - v.shape[0]),
                   constant_values=fill).astype(jnp.float32)


# ----------------------------------------------------------------------------
# Conv (3x3 / 1x1, no bias) + fused per-channel BN statistics
# ----------------------------------------------------------------------------
def conv2d_stats_pallas(x_nhwc, w_hwio, stride, padding):
    """Conv on channel-padded bf16 NHWC input with fused BN statistics.

    Returns:
      out:   (N, Ho_pad, Wq, Cout_p) bf16 slab.  Valid pixels live at
             [:, :Ho, :Wo, :]; columns >= Wo and rows >= Ho are junk that the
             epilogue kernels slice/ignore (no HBM clean-up copy is made).
      stats: (2, Cout_p) f32 [sum, sum_sq] of the bf16-rounded conv output
             over the N*Ho*Wo valid positions.
      (Ho, Wo): logical output spatial dims.
    """
    N, H, W, Cin_p = x_nhwc.shape
    kh, kw, wcin, Cout_p = w_hwio.shape
    assert wcin == Cin_p
    Ho = (H + 2 * padding - kh) // stride + 1
    Wo = (W + 2 * padding - kw) // stride + 1

    # 256-wide Cout tiles fill the v6e/v7x 256x256 MXU; 128 is v5e-native.
    tn = 256 if Cout_p % 256 == 0 else LANE
    J = Cout_p // tn

    xb = x_nhwc.astype(jnp.bfloat16)
    if padding:
        xb = jnp.pad(xb, ((0, 0), (padding, padding), (padding, padding), (0, 0)))

    # Phase (space-to-depth) decomposition: every 3x3 tap becomes a contiguous
    # row shift of a flattened (slab_len, Cin_p) phase slab.
    sh_max = (kh - 1) // stride
    sw_max = (kw - 1) // stride
    Hq, Wq = Ho + sh_max, Wo + sw_max
    phase_keys = sorted({(dy % stride, dx % stride)
                         for dy in range(kh) for dx in range(kw)})

    # Row-chunking of the flattened Ho*Wq output slab; one chunk's f32
    # accumulator stays in vregs and is stored exactly once.
    L = Ho * Wq
    target_rows = 256 if tn == LANE else 128
    n_chunks = max(1, -(-L // target_rows))
    TL = _round_up(-(-L // n_chunks), 8)
    L_pad = n_chunks * TL
    max_off = sh_max * Wq + sw_max
    slab_len = L_pad + max_off
    Ho_pad = -(-L_pad // Wq)
    L_out = Ho_pad * Wq                      # rows [L_pad, L_out) never written

    phases = []
    for (py, px) in phase_keys:
        ph = xb[:, py::stride, px::stride, :][:, :Hq, :Wq, :]
        ph = ph.reshape(N, Hq * Wq, Cin_p)
        if slab_len > Hq * Wq:
            ph = jnp.pad(ph, ((0, 0), (0, slab_len - Hq * Wq), (0, 0)))
        else:
            ph = ph[:, :slab_len, :]
        phases.append(ph)
    P = len(phases)

    taps = [(phase_keys.index((dy % stride, dx % stride)),
             (dy // stride) * Wq + (dx // stride))
            for dy in range(kh) for dx in range(kw)]
    n_taps = len(taps)
    w3 = w_hwio.reshape(n_taps, Cin_p, Cout_p).astype(jnp.bfloat16)

    # Mask for the BN statistics: 1 for valid output positions, 0 for junk
    # columns (col >= Wo) and padded chunk rows (row >= L).
    use_mask = (Wq != Wo) or (L_pad != L)
    mask = None
    if use_mask:
        m = (np.arange(L_pad) % Wq < Wo) & (np.arange(L_pad) < L)
        mask = jnp.asarray(m.astype(np.float32).reshape(L_pad, 1))

    def kernel(*refs):
        x_refs = refs[:P]
        w_ref = refs[P]
        idx = P + 1
        mask_ref = None
        if use_mask:
            mask_ref = refs[idx]
            idx += 1
        o_ref, st_ref = refs[idx], refs[idx + 1]

        def do_chunk(base, s1, s2):
            # Accumulator initialised from the first tap (no zero-fill).
            p0, off0 = taps[0]
            acc = jnp.dot(x_refs[p0][0, pl.ds(base + off0, TL), :], w_ref[0],
                          preferred_element_type=jnp.float32)
            for t in range(1, n_taps):
                p, off = taps[t]
                acc = acc + jnp.dot(x_refs[p][0, pl.ds(base + off, TL), :],
                                    w_ref[t],
                                    preferred_element_type=jnp.float32)
            ab = acc.astype(o_ref.dtype)
            o_ref[0, pl.ds(base, TL), :] = ab          # single store per chunk
            accr = ab.astype(jnp.float32)              # stats on stored values
            if use_mask:
                accm = accr * mask_ref[pl.ds(base, TL), :]
            else:
                accm = accr
            s1 = s1 + jnp.sum(accm, axis=0, keepdims=True)
            s2 = s2 + jnp.sum(accm * accr, axis=0, keepdims=True)
            return s1, s2

        z = jnp.zeros((1, tn), jnp.float32)
        if n_chunks == 1:
            s1, s2 = do_chunk(0, z, z)
        else:
            def body(r, carry):
                base = pl.multiple_of(r * TL, 8)
                return do_chunk(base, carry[0], carry[1])
            s1, s2 = lax.fori_loop(0, n_chunks, body, (z, z))

        st_ref[0, 0:1, :] = s1
        st_ref[0, 1:2, :] = s2

    in_specs = ([pl.BlockSpec((1, slab_len, Cin_p), lambda n, j: (n, 0, 0))
                 for _ in range(P)]
                + [pl.BlockSpec((n_taps, Cin_p, tn), lambda n, j: (0, 0, j))])
    args = list(phases) + [w3]
    if use_mask:
        in_specs.append(pl.BlockSpec((L_pad, 1), lambda n, j: (0, 0)))
        args.append(mask)

    out_specs = (pl.BlockSpec((1, L_out, tn), lambda n, j: (n, 0, j)),
                 pl.BlockSpec((1, 2, tn), lambda n, j: (n, 0, j)))

    out_flat, stats = pl.pallas_call(
        kernel,
        grid=(N, J),
        in_specs=in_specs,
        out_specs=out_specs,
        out_shape=(jax.ShapeDtypeStruct((N, L_out, Cout_p), jnp.bfloat16),
                   jax.ShapeDtypeStruct((N, 2, Cout_p), jnp.float32)),
        compiler_params=pltpu.CompilerParams(
            dimension_semantics=("parallel", "parallel"),
            vmem_limit_bytes=_VMEM_LIMIT),
    )(*args)

    out = out_flat.reshape(N, Ho_pad, Wq, Cout_p)   # free row-major split
    stats = jnp.sum(stats, axis=0)                  # (2, Cout_p), tiny
    return out, stats, (Ho, Wo)


def _bn_scale_shift(stats, gamma_p, beta_p, count, eps=EPS):
    """Per-channel scale/shift from fused [sum, sumsq] stats (O(C) glue, f32)."""
    mean = stats[0] / count
    var = jnp.maximum(stats[1] / count - mean * mean, 0.0)   # biased variance
    inv = lax.rsqrt(var + eps)
    scale = gamma_p * inv
    shift = beta_p - mean * scale
    return (scale.reshape(1, -1).astype(jnp.float32),
            shift.reshape(1, -1).astype(jnp.float32))


# ----------------------------------------------------------------------------
# Fused BN-apply (+ residual BN) + ReLU epilogues on conv slabs
# ----------------------------------------------------------------------------
def _pick_h_tile(Ho, row_bytes, target=4 << 20):
    """Largest divisor of Ho whose block stays under ~4 MiB (lane-dense, big)."""
    max_th = max(1, min(Ho, target // max(row_bytes, 1)))
    for th in range(max_th, 0, -1):
        if Ho % th == 0:
            return th
    return 1


def bn_relu_pallas(slab, scale, shift, Ho, Wo, out_dtype=jnp.bfloat16):
    """y = relu(slab*scale + shift) on the valid (Ho, Wo) window; compact out."""
    N, _, Wq, C = slab.shape
    th = _pick_h_tile(Ho, Wq * C * 2)

    def kernel(x_ref, sc_ref, sh_ref, o_ref):
        sc = sc_ref[...].reshape(1, 1, -1)
        sh = sh_ref[...].reshape(1, 1, -1)
        x = x_ref[0, :, :Wo, :].astype(jnp.float32)
        o_ref[0] = jnp.maximum(x * sc + sh, 0.0).astype(o_ref.dtype)

    return pl.pallas_call(
        kernel,
        grid=(N, Ho // th),
        in_specs=[pl.BlockSpec((1, th, Wq, C), lambda n, i: (n, i, 0, 0)),
                  pl.BlockSpec((1, C), lambda n, i: (0, 0)),
                  pl.BlockSpec((1, C), lambda n, i: (0, 0))],
        out_specs=pl.BlockSpec((1, th, Wo, C), lambda n, i: (n, i, 0, 0)),
        out_shape=jax.ShapeDtypeStruct((N, Ho, Wo, C), out_dtype),
        compiler_params=pltpu.CompilerParams(
            dimension_semantics=("parallel", "parallel"),
            vmem_limit_bytes=_VMEM_LIMIT),
    )(slab, scale, shift)


def bn_add_relu_pallas(slab, scale, shift, res, res_scale, res_shift,
                       Ho, Wo, out_dtype=jnp.bfloat16):
    """relu(slab*scale + shift + res*res_scale + res_shift), compact output."""
    N, _, Wq, C = slab.shape
    Nr, Hr, Wr, Cr = res.shape
    assert Nr == N and Cr == C and Hr >= Ho and Wr >= Wo
    th = _pick_h_tile(Ho, (Wq + Wr) * C * 2)

    def kernel(x_ref, sc_ref, sh_ref, r_ref, rsc_ref, rsh_ref, o_ref):
        sc = sc_ref[...].reshape(1, 1, -1)
        sh = sh_ref[...].reshape(1, 1, -1)
        rsc = rsc_ref[...].reshape(1, 1, -1)
        rsh = rsh_ref[...].reshape(1, 1, -1)
        x = x_ref[0, :, :Wo, :].astype(jnp.float32)
        r = r_ref[0, :, :Wo, :].astype(jnp.float32)
        y = x * sc + sh + r * rsc + rsh
        o_ref[0] = jnp.maximum(y, 0.0).astype(o_ref.dtype)

    return pl.pallas_call(
        kernel,
        grid=(N, Ho // th),
        in_specs=[pl.BlockSpec((1, th, Wq, C), lambda n, i: (n, i, 0, 0)),
                  pl.BlockSpec((1, C), lambda n, i: (0, 0)),
                  pl.BlockSpec((1, C), lambda n, i: (0, 0)),
                  pl.BlockSpec((1, th, Wr, C), lambda n, i: (n, i, 0, 0)),
                  pl.BlockSpec((1, C), lambda n, i: (0, 0)),
                  pl.BlockSpec((1, C), lambda n, i: (0, 0))],
        out_specs=pl.BlockSpec((1, th, Wo, C), lambda n, i: (n, i, 0, 0)),
        out_shape=jax.ShapeDtypeStruct((N, Ho, Wo, C), out_dtype),
        compiler_params=pltpu.CompilerParams(
            dimension_semantics=("parallel", "parallel"),
            vmem_limit_bytes=_VMEM_LIMIT),
    )(slab, scale, shift, res, res_scale, res_shift)


# ----------------------------------------------------------------------------
# BasicBlock module (Pallas)
# ----------------------------------------------------------------------------
class BasicBlockPallas:
    expansion = 1

    def __init__(self, in_planes, planes, stride, key):
        self.in_planes = in_planes
        self.planes = planes
        self.stride = stride
        self.has_shortcut = (stride != 1) or (in_planes != self.expansion * planes)

        ks = jax.random.split(key, 8)
        # conv weights stored in HWIO layout (kh, kw, Cin, Cout), f32 master copy
        self.w1 = 0.1 * jax.random.normal(ks[0], (3, 3, in_planes, planes), jnp.float32)
        self.w2 = 0.1 * jax.random.normal(ks[1], (3, 3, planes, planes), jnp.float32)
        self.g1 = 1.0 + 0.1 * jax.random.normal(ks[2], (planes,), jnp.float32)
        self.b1 = 0.1 * jax.random.normal(ks[3], (planes,), jnp.float32)
        self.g2 = 1.0 + 0.1 * jax.random.normal(ks[4], (planes,), jnp.float32)
        self.b2 = 0.1 * jax.random.normal(ks[5], (planes,), jnp.float32)
        if self.has_shortcut:
            self.ws = 0.1 * jax.random.normal(ks[6], (1, 1, in_planes, planes), jnp.float32)
            self.gs = 1.0 + 0.1 * jax.random.normal(ks[7], (planes,), jnp.float32)
            self.bs = jnp.zeros((planes,), jnp.float32)

        # Lane-padded (multiple-of-128 channels) bf16 parameters for the kernels.
        self.cin_p = _round_up(in_planes, LANE)
        self.cout_p = _round_up(planes, LANE)
        self.w1_p = _pad_weight(self.w1, self.cin_p, self.cout_p)
        self.w2_p = _pad_weight(self.w2, self.cout_p, self.cout_p)
        self.g1_p = _pad_vec(self.g1, self.cout_p, 1.0)
        self.b1_p = _pad_vec(self.b1, self.cout_p, 0.0)
        self.g2_p = _pad_vec(self.g2, self.cout_p, 1.0)
        self.b2_p = _pad_vec(self.b2, self.cout_p, 0.0)
        if self.has_shortcut:
            self.ws_p = _pad_weight(self.ws, self.cin_p, self.cout_p)
            self.gs_p = _pad_vec(self.gs, self.cout_p, 1.0)
            self.bs_p = _pad_vec(self.bs, self.cout_p, 0.0)

    def __call__(self, x_nchw):
        N = x_nchw.shape[0]
        # NCHW (PyTorch) -> NHWC, lane-padded channels, bf16 activations.
        x = jnp.transpose(x_nchw, (0, 2, 3, 1))
        x = jnp.pad(x, ((0, 0), (0, 0), (0, 0), (0, self.cin_p - self.in_planes)))
        x = x.astype(jnp.bfloat16)

        # conv1 (3x3, stride s) with fused per-channel stats -> bn1 + relu
        c1, st1, (Ho, Wo) = conv2d_stats_pallas(x, self.w1_p, self.stride, 1)
        count = N * Ho * Wo
        sc1, sh1 = _bn_scale_shift(st1, self.g1_p, self.b1_p, count)
        out1 = bn_relu_pallas(c1, sc1, sh1, Ho, Wo)          # (N,Ho,Wo,Cp) bf16
        # TODO(synk): fold this BN1-apply + ReLU (and conv2's spatial zero-pad)
        # into the conv2 input path to drop one more HBM round trip.

        # conv2 (3x3, stride 1) with fused stats
        c2, st2, _ = conv2d_stats_pallas(out1, self.w2_p, 1, 1)
        sc2, sh2 = _bn_scale_shift(st2, self.g2_p, self.b2_p, count)

        # shortcut branch: its BN is folded into the final fused epilogue
        if self.has_shortcut:
            cs, sts, _ = conv2d_stats_pallas(x, self.ws_p, self.stride, 0)
            scs, shs = _bn_scale_shift(sts, self.gs_p, self.bs_p, count)
            res = cs                                          # slab, Wq == Wo
        else:
            assert self.cin_p == self.cout_p and self.stride == 1
            assert x.shape[1] == Ho and x.shape[2] == Wo
            res = x                                           # identity (bf16)
            scs = jnp.ones((1, self.cout_p), jnp.float32)
            shs = jnp.zeros((1, self.cout_p), jnp.float32)

        # bn2 + (shortcut bn) residual add + relu, fused; compact bf16 output.
        out = bn_add_relu_pallas(c2, sc2, sh2, res, scs, shs, Ho, Wo)

        out = out[..., :self.planes]
        return jnp.transpose(out, (0, 3, 1, 2)).astype(jnp.float32)   # NCHW f32


# ----------------------------------------------------------------------------
# Pure-JAX reference (mirrors the bf16 operand / bf16-storage rounding)
# ----------------------------------------------------------------------------
def reference_forward(block, x_nchw):
    x = jnp.transpose(x_nchw, (0, 2, 3, 1)).astype(jnp.float32)

    def conv(v, w, stride, pad):
        return lax.conv_general_dilated(
            v.astype(jnp.bfloat16), w.astype(jnp.bfloat16),
            (stride, stride), [(pad, pad), (pad, pad)],
            dimension_numbers=("NHWC", "HWIO", "NHWC"),
            preferred_element_type=jnp.float32)

    def bn(y, g, b):
        y = y.astype(jnp.bfloat16).astype(jnp.float32)    # conv outs stored bf16
        m = jnp.mean(y, axis=(0, 1, 2), keepdims=True)
        v = jnp.mean((y - m) ** 2, axis=(0, 1, 2), keepdims=True)
        return (y - m) * lax.rsqrt(v + EPS) * g + b

    out = jax.nn.relu(bn(conv(x, block.w1, block.stride, 1), block.g1, block.b1))
    out = bn(conv(out, block.w2, 1, 1), block.g2, block.b2)
    if block.has_shortcut:
        sc = bn(conv(x, block.ws, block.stride, 0), block.gs, block.bs)
    else:
        sc = x.astype(jnp.bfloat16).astype(jnp.float32)
    out = jax.nn.relu(out + sc)
    return jnp.transpose(out, (0, 3, 1, 2))


# ----------------------------------------------------------------------------
if __name__ == "__main__":
    key = jax.random.PRNGKey(0)
    k_x, k_p, k_x2, k_p2 = jax.random.split(key, 4)

    # Config A: stride-2 block with 1x1-conv + BN shortcut (in_planes != planes)
    N, C_IN, H, W = 2, 4, 16, 16
    PLANES, STRIDE = 8, 2
    x = jax.random.normal(k_x, (N, C_IN, H, W), jnp.float32)
    block = BasicBlockPallas(C_IN, PLANES, STRIDE, k_p)

    out = jax.block_until_ready(jax.jit(block.__call__)(x))
    ref = jax.block_until_ready(reference_forward(block, x))
    assert out.shape == (N, PLANES, H // STRIDE, W // STRIDE), out.shape
    np.testing.assert_allclose(np.asarray(out), np.asarray(ref),
                               rtol=2e-2, atol=2e-2)

    # Config B: stride-1 block with identity shortcut
    x2 = jax.random.normal(k_x2, (2, 8, 16, 16), jnp.float32)
    block2 = BasicBlockPallas(8, 8, 1, k_p2)
    out2 = jax.block_until_ready(jax.jit(block2.__call__)(x2))
    ref2 = jax.block_until_ready(reference_forward(block2, x2))
    assert out2.shape == (2, 8, 16, 16), out2.shape
    np.testing.assert_allclose(np.asarray(out2), np.asarray(ref2),
                               rtol=2e-2, atol=2e-2)

    print("KERNEL_OK")
</pallas_src>

<mosaic_0001>
module attributes {stable_mosaic.version = 11 : i64} {
  func.func @kernel(%arg0: i32, %arg1: i32, %arg2: memref<1x64x128xbf16, #tpu.memory_space<vmem>>, %arg3: memref<1x128x128xbf16, #tpu.memory_space<vmem>>, %arg4: memref<1x64x128xbf16, #tpu.memory_space<vmem>>, %arg5: memref<1x2x128xf32, #tpu.memory_space<vmem>>) attributes {dimension_semantics = [#tpu.dimension_semantics<parallel>, #tpu.dimension_semantics<parallel>], iteration_bounds = array<i64: 2, 1>, scalar_prefetch = 0 : i64, scratch_operands = 0 : i64, tpu.core_type = #tpu.core_type<tc>, window_params = [{transform_indices = @transform_0, window_bounds = array<i64: 1, 64, 128>}, {transform_indices = @transform_1, window_bounds = array<i64: 1, 128, 128>}, {transform_indices = @transform_2, window_bounds = array<i64: 1, 64, 128>}, {transform_indices = @transform_3, window_bounds = array<i64: 1, 2, 128>}]} {
    %cst = arith.constant 0.000000e+00 : f32
    %0 = vector.broadcast %cst : f32 to vector<1x128xf32>
    %c0 = arith.constant 0 : index
    %c0_0 = arith.constant 0 : index
    %c0_1 = arith.constant 0 : index
    %1 = vector.load %arg2[%c0, %c0_0, %c0_1] : memref<1x64x128xbf16, #tpu.memory_space<vmem>>, vector<1x64x128xbf16>
    %2 = vector.shape_cast %1 : vector<1x64x128xbf16> to vector<64x128xbf16>
    %c0_2 = arith.constant 0 : index
    %c0_3 = arith.constant 0 : index
    %c0_4 = arith.constant 0 : index
    %3 = vector.load %arg3[%c0_2, %c0_3, %c0_4] : memref<1x128x128xbf16, #tpu.memory_space<vmem>>, vector<1x128x128xbf16>
    %4 = vector.shape_cast %3 : vector<1x128x128xbf16> to vector<128x128xbf16>
    %cst_5 = arith.constant dense<0.000000e+00> : vector<64x128xf32>
    %5 = tpu.matmul %2, %4, %cst_5 {dimension_numbers = #tpu.dot_dimension_numbers<[1], [0], [0], [1], [0, 0, 1, 1], [], []>} : vector<64x128xbf16>, vector<128x128xbf16>, vector<64x128xf32> -> vector<64x128xf32>
    %6 = arith.truncf %5 : vector<64x128xf32> to vector<64x128xbf16>
    %c0_6 = arith.constant 0 : index
    %c0_7 = arith.constant 0 : index
    %c0_8 = arith.constant 0 : index
    %7 = vector.load %arg4[%c0_6, %c0_7, %c0_8] : memref<1x64x128xbf16, #tpu.memory_space<vmem>>, vector<1x64x128xbf16>
    %8 = vector.shape_cast %7 : vector<1x64x128xbf16> to vector<64x128xbf16>
    %9 = vector.shape_cast %6 : vector<64x128xbf16> to vector<1x64x128xbf16>
    tpu.vector_store %arg4[%c0_6, %c0_7, %c0_8], %9 {strides = array<i32>} : memref<1x64x128xbf16, #tpu.memory_space<vmem>>, vector<1x64x128xbf16>,
    %10 = arith.extf %6 : vector<64x128xbf16> to vector<64x128xf32>
    %cst_9 = arith.constant dense<0.000000e+00> : vector<128xf32>
    %11 = vector.multi_reduction <add>, %10, %cst_9 [0] : vector<64x128xf32> to vector<128xf32>
    %12 = vector.shape_cast %11 : vector<128xf32> to vector<1x128xf32>
    %13 = arith.addf %0, %12 : vector<1x128xf32>
    %14 = arith.mulf %10, %10 : vector<64x128xf32>
    %cst_10 = arith.constant dense<0.000000e+00> : vector<128xf32>
    %15 = vector.multi_reduction <add>, %14, %cst_10 [0] : vector<64x128xf32> to vector<128xf32>
    %16 = vector.shape_cast %15 : vector<128xf32> to vector<1x128xf32>
    %17 = arith.addf %0, %16 : vector<1x128xf32>
    %c0_11 = arith.constant 0 : index
    %c0_12 = arith.constant 0 : index
    %c0_13 = arith.constant 0 : index
    %18 = vector.load %arg5[%c0_11, %c0_12, %c0_13] : memref<1x2x128xf32, #tpu.memory_space<vmem>>, vector<1x1x128xf32>
    %19 = vector.shape_cast %18 : vector<1x1x128xf32> to vector<1x128xf32>
    %20 = vector.shape_cast %13 : vector<1x128xf32> to vector<1x1x128xf32>
    tpu.vector_store %arg5[%c0_11, %c0_12, %c0_13], %20 {strides = array<i32>} : memref<1x2x128xf32, #tpu.memory_space<vmem>>, vector<1x1x128xf32>,
    %c0_14 = arith.constant 0 : index
    %c1 = arith.constant 1 : index
    %c0_15 = arith.constant 0 : index
    %21 = vector.load %arg5[%c0_14, %c1, %c0_15] : memref<1x2x128xf32, #tpu.memory_space<vmem>>, vector<1x1x128xf32>
    %22 = vector.shape_cast %21 : vector<1x1x128xf32> to vector<1x128xf32>
    %23 = vector.shape_cast %17 : vector<1x128xf32> to vector<1x1x128xf32>
    tpu.vector_store %arg5[%c0_14, %c1, %c0_15], %23 {strides = array<i32>} : memref<1x2x128xf32, #tpu.memory_space<vmem>>, vector<1x1x128xf32>,
    return
  }
  func.func @transform_0(%arg0: i32, %arg1: i32) -> (i32, i32, i32) {
    %c0_i32 = arith.constant 0 : i32
    %c0_i32_0 = arith.constant 0 : i32
    %c0_i32_1 = arith.constant 0 : i32
    return %arg0, %c0_i32, %c0_i32_0 : i32, i32, i32
  }
  func.func @transform_1(%arg0: i32, %arg1: i32) -> (i32, i32, i32) {
    %c0_i32 = arith.constant 0 : i32
    %c0_i32_0 = arith.constant 0 : i32
    %c0_i32_1 = arith.constant 0 : i32
    return %c0_i32, %c0_i32_0, %arg1 : i32, i32, i32
  }
  func.func @transform_2(%arg0: i32, %arg1: i32) -> (i32, i32, i32) {
    %c0_i32 = arith.constant 0 : i32
    %c0_i32_0 = arith.constant 0 : i32
    return %arg0, %c0_i32, %arg1 : i32, i32, i32
  }
  func.func @transform_3(%arg0: i32, %arg1: i32) -> (i32, i32, i32) {
    %c0_i32 = arith.constant 0 : i32
    %c0_i32_0 = arith.constant 0 : i32
    return %arg0, %c0_i32, %arg1 : i32, i32, i32
  }
}

module attributes {stable_mosaic.version = 11 : i64} {
  func.func @kernel(%arg0: i32, %arg1: i32, %arg2: memref<1x82x128xbf16, #tpu.memory_space<vmem>>, %arg3: memref<1x82x128xbf16, #tpu.memory_space<vmem>>, %arg4: memref<1x82x128xbf16, #tpu.memory_space<vmem>>, %arg5: memref<1x82x128xbf16, #tpu.memory_space<vmem>>, %arg6: memref<9x128x128xbf16, #tpu.memory_space<vmem>>, %arg7: memref<72x1xf32, #tpu.memory_space<vmem>>, %arg8: memref<1x72x128xbf16, #tpu.memory_space<vmem>>, %arg9: memref<1x2x128xf32, #tpu.memory_space<vmem>>) attributes {dimension_semantics = [#tpu.dimension_semantics<parallel>, #tpu.dimension_semantics<parallel>], iteration_bounds = array<i64: 2, 1>, scalar_prefetch = 0 : i64, scratch_operands = 0 : i64, tpu.core_type = #tpu.core_type<tc>, window_params = [{transform_indices = @transform_0, window_bounds = array<i64: 1, 82, 128>}, {transform_indices = @transform_1, window_bounds = array<i64: 1, 82, 128>}, {transform_indices = @transform_2, window_bounds = array<i64: 1, 82, 128>}, {transform_indices = @transform_3, window_bounds = array<i64: 1, 82, 128>}, {transform_indices = @transform_4, window_bounds = array<i64: 9, 128, 128>}, {pipeline_mode = #tpu.pipeline_mode<synchronous>, transform_indices = @transform_5, window_bounds = array<i64: 72, 1>}, {transform_indices = @transform_6, window_bounds = array<i64: 1, 72, 128>}, {transform_indices = @transform_7, window_bounds = array<i64: 1, 2, 128>}]} {
    %cst = arith.constant 0.000000e+00 : f32
    %0 = vector.broadcast %cst : f32 to vector<1x128xf32>
    %c0 = arith.constant 0 : index
    %c0_0 = arith.constant 0 : index
    %c0_1 = arith.constant 0 : index
    %1 = vector.load %arg2[%c0, %c0_0, %c0_1] : memref<1x82x128xbf16, #tpu.memory_space<vmem>>, vector<1x72x128xbf16>
    %2 = vector.shape_cast %1 : vector<1x72x128xbf16> to vector<72x128xbf16>
    %c0_2 = arith.constant 0 : index
    %c0_3 = arith.constant 0 : index
    %c0_4 = arith.constant 0 : index
    %3 = vector.load %arg6[%c0_2, %c0_3, %c0_4] : memref<9x128x128xbf16, #tpu.memory_space<vmem>>, vector<1x128x128xbf16>
    %4 = vector.shape_cast %3 : vector<1x128x128xbf16> to vector<128x128xbf16>
    %cst_5 = arith.constant dense<0.000000e+00> : vector<72x128xf32>
    %5 = tpu.matmul %2, %4, %cst_5 {dimension_numbers = #tpu.dot_dimension_numbers<[1], [0], [0], [1], [0, 0, 1, 1], [], []>} : vector<72x128xbf16>, vector<128x128xbf16>, vector<72x128xf32> -> vector<72x128xf32>
    %c0_6 = arith.constant 0 : index
    %c0_7 = arith.constant 0 : index
    %c0_8 = arith.constant 0 : index
    %6 = vector.load %arg3[%c0_6, %c0_7, %c0_8] : memref<1x82x128xbf16, #tpu.memory_space<vmem>>, vector<1x72x128xbf16>
    %7 = vector.shape_cast %6 : vector<1x72x128xbf16> to vector<72x128xbf16>
    %c1 = arith.constant 1 : index
    %c0_9 = arith.constant 0 : index
    %c0_10 = arith.constant 0 : index
    %8 = vector.load %arg6[%c1, %c0_9, %c0_10] : memref<9x128x128xbf16, #tpu.memory_space<vmem>>, vector<1x128x128xbf16>
    %9 = vector.shape_cast %8 : vector<1x128x128xbf16> to vector<128x128xbf16>
    %cst_11 = arith.constant dense<0.000000e+00> : vector<72x128xf32>
    %10 = tpu.matmul %7, %9, %cst_11 {dimension_numbers = #tpu.dot_dimension_numbers<[1], [0], [0], [1], [0, 0, 1, 1], [], []>} : vector<72x128xbf16>, vector<128x128xbf16>, vector<72x128xf32> -> vector<72x128xf32>
    %11 = arith.addf %5, %10 : vector<72x128xf32>
    %c0_12 = arith.constant 0 : index
    %c1_13 = arith.constant 1 : index
    %c0_14 = arith.constant 0 : index
    %12 = vector.load %arg2[%c0_12, %c1_13, %c0_14] : memref<1x82x128xbf16, #tpu.memory_space<vmem>>, vector<1x72x128xbf16>
    %13 = vector.shape_cast %12 : vector<1x72x128xbf16> to vector<72x128xbf16>
    %c2 = arith.constant 2 : index
    %c0_15 = arith.constant 0 : index
    %c0_16 = arith.constant 0 : index
    %14 = vector.load %arg6[%c2, %c0_15, %c0_16] : memref<9x128x128xbf16, #tpu.memory_space<vmem>>, vector<1x128x128xbf16>
    %15 = vector.shape_cast %14 : vector<1x128x128xbf16> to vector<128x128xbf16>
    %cst_17 = arith.constant dense<0.000000e+00> : vector<72x128xf32>
    %16 = tpu.matmul %13, %15, %cst_17 {dimension_numbers = #tpu.dot_dimension_numbers<[1], [0], [0], [1], [0, 0, 1, 1], [], []>} : vector<72x128xbf16>, vector<128x128xbf16>, vector<72x128xf32> -> vector<72x128xf32>
    %17 = arith.addf %11, %16 : vector<72x128xf32>
    %c0_18 = arith.constant 0 : index
    %c0_19 = arith.constant 0 : index
    %c0_20 = arith.constant 0 : index
    %18 = vector.load %arg4[%c0_18, %c0_19, %c0_20] : memref<1x82x128xbf16, #tpu.memory_space<vmem>>, vector<1x72x128xbf16>
    %19 = vector.shape_cast %18 : vector<1x72x128xbf16> to vector<72x128xbf16>
    %c3 = arith.constant 3 : index
    %c0_21 = arith.constant 0 : index
    %c0_22 = arith.constant 0 : index
    %20 = vector.load %arg6[%c3, %c0_21, %c0_22] : memref<9x128x128xbf16, #tpu.memory_space<vmem>>, vector<1x128x128xbf16>
    %21 = vector.shape_cast %20 : vector<1x128x128xbf16> to vector<128x128xbf16>
    %cst_23 = arith.constant dense<0.000000e+00> : vector<72x128xf32>
    %22 = tpu.matmul %19, %21, %cst_23 {dimension_numbers = #tpu.dot_dimension_numbers<[1], [0], [0], [1], [0, 0, 1, 1], [], []>} : vector<72x128xbf16>, vector<128x128xbf16>, vector<72x128xf32> -> vector<72x128xf32>
    %23 = arith.addf %17, %22 : vector<72x128xf32>
    %c0_24 = arith.constant 0 : index
    %c0_25 = arith.constant 0 : index
    %c0_26 = arith.constant 0 : index
    %24 = vector.load %arg5[%c0_24, %c0_25, %c0_26] : memref<1x82x128xbf16, #tpu.memory_space<vmem>>, vector<1x72x128xbf16>
    %25 = vector.shape_cast %24 : vector<1x72x128xbf16> to vector<72x128xbf16>
    %c4 = arith.constant 4 : index
    %c0_27 = arith.constant 0 : index
    %c0_28 = arith.constant 0 : index
    %26 = vector.load %arg6[%c4, %c0_27, %c0_28] : memref<9x128x128xbf16, #tpu.memory_space<vmem>>, vector<1x128x128xbf16>
    %27 = vector.shape_cast %26 : vector<1x128x128xbf16> to vector<128x128xbf16>
    %cst_29 = arith.constant dense<0.000000e+00> : vector<72x128xf32>
    %28 = tpu.matmul %25, %27, %cst_29 {dimension_numbers = #tpu.dot_dimension_numbers<[1], [0], [0], [1], [0, 0, 1, 1], [], []>} : vector<72x128xbf16>, vector<128x128xbf16>, vector<72x128xf32> -> vector<72x128xf32>
    %29 = arith.addf %23, %28 : vector<72x128xf32>
    %c0_30 = arith.constant 0 : index
    %c1_31 = arith.constant 1 : index
    %c0_32 = arith.constant 0 : index
    %30 = vector.load %arg4[%c0_30, %c1_31, %c0_32] : memref<1x82x128xbf16, #tpu.memory_space<vmem>>, vector<1x72x128xbf16>
    %31 = vector.shape_cast %30 : vector<1x72x128xbf16> to vector<72x128xbf16>
    %c5 = arith.constant 5 : index
    %c0_33 = arith.constant 0 : index
    %c0_34 = arith.constant 0 : index
    %32 = vector.load %arg6[%c5, %c0_33, %c0_34] : memref<9x128x128xbf16, #tpu.memory_space<vmem>>, vector<1x128x128xbf16>
    %33 = vector.shape_cast %32 : vector<1x128x128xbf16> to vector<128x128xbf16>
    %cst_35 = arith.constant dense<0.000000e+00> : vector<72x128xf32>
    %34 = tpu.matmul %31, %33, %cst_35 {dimension_numbers = #tpu.dot_dimension_numbers<[1], [0], [0], [1], [0, 0, 1, 1], [], []>} : vector<72x128xbf16>, vector<128x128xbf16>, vector<72x128xf32> -> vector<72x128xf32>
    %35 = arith.addf %29, %34 : vector<72x128xf32>
    %c0_36 = arith.constant 0 : index
    %c9 = arith.constant 9 : index
    %c0_37 = arith.constant 0 : index
    %36 = vector.load %arg2[%c0_36, %c9, %c0_37] : memref<1x82x128xbf16, #tpu.memory_space<vmem>>, vector<1x72x128xbf16>
    %37 = vector.shape_cast %36 : vector<1x72x128xbf16> to vector<72x128xbf16>
    %c6 = arith.constant 6 : index
    %c0_38 = arith.constant 0 : index
    %c0_39 = arith.constant 0 : index
    %38 = vector.load %arg6[%c6, %c0_38, %c0_39] : memref<9x128x128xbf16, #tpu.memory_space<vmem>>, vector<1x128x128xbf16>
    %39 = vector.shape_cast %38 : vector<1x128x128xbf16> to vector<128x128xbf16>
    %cst_40 = arith.constant dense<0.000000e+00> : vector<72x128xf32>
    %40 = tpu.matmul %37, %39, %cst_40 {dimension_numbers = #tpu.dot_dimension_numbers<[1], [0], [0], [1], [0, 0, 1, 1], [], []>} : vector<72x128xbf16>, vector<128x128xbf16>, vector<72x128xf32> -> vector<72x128xf32>
    %41 = arith.addf %35, %40 : vector<72x128xf32>
    %c0_41 = arith.constant 0 : index
    %c9_42 = arith.constant 9 : index
    %c0_43 = arith.constant 0 : index
    %42 = vector.load %arg3[%c0_41, %c9_42, %c0_43] : memref<1x82x128xbf16, #tpu.memory_space<vmem>>, vector<1x72x128xbf16>
    %43 = vector.shape_cast %42 : vector<1x72x128xbf16> to vector<72x128xbf16>
    %c7 = arith.constant 7 : index
    %c0_44 = arith.constant 0 : index
    %c0_45 = arith.constant 0 : index
    %44 = vector.load %arg6[%c7, %c0_44, %c0_45] : memref<9x128x128xbf16, #tpu.memory_space<vmem>>, vector<1x128x128xbf16>
    %45 = vector.shape_cast %44 : vector<1x128x128xbf16> to vector<128x128xbf16>
    %cst_46 = arith.constant dense<0.000000e+00> : vector<72x128xf32>
    %46 = tpu.matmul %43, %45, %cst_46 {dimension_numbers = #tpu.dot_dimension_numbers<[1], [0], [0], [1], [0, 0, 1, 1], [], []>} : vector<72x128xbf16>, vector<128x128xbf16>, vector<72x128xf32> -> vector<72x128xf32>
    %47 = arith.addf %41, %46 : vector<72x128xf32>
    %c0_47 = arith.constant 0 : index
    %c10 = arith.constant 10 : index
    %c0_48 = arith.constant 0 : index
    %48 = vector.load %arg2[%c0_47, %c10, %c0_48] : memref<1x82x128xbf16, #tpu.memory_space<vmem>>, vector<1x72x128xbf16>
    %49 = vector.shape_cast %48 : vector<1x72x128xbf16> to vector<72x128xbf16>
    %c8 = arith.constant 8 : index
    %c0_49 = arith.constant 0 : index
    %c0_50 = arith.constant 0 : index
    %50 = vector.load %arg6[%c8, %c0_49, %c0_50] : memref<9x128x128xbf16, #tpu.memory_space<vmem>>, vector<1x128x128xbf16>
    %51 = vector.shape_cast %50 : vector<1x128x128xbf16> to vector<128x128xbf16>
    %cst_51 = arith.constant dense<0.000000e+00> : vector<72x128xf32>
    %52 = tpu.matmul %49, %51, %cst_51 {dimension_numbers = #tpu.dot_dimension_numbers<[1], [0], [0], [1], [0, 0, 1, 1], [], []>} : vector<72x128xbf16>, vector<128x128xbf16>, vector<72x128xf32> -> vector<72x128xf32>
    %53 = arith.addf %47, %52 : vector<72x128xf32>
    %54 = arith.truncf %53 : vector<72x128xf32> to vector<72x128xbf16>
    %c0_52 = arith.constant 0 : index
    %c0_53 = arith.constant 0 : index
    %c0_54 = arith.constant 0 : index
    %55 = vector.load %arg8[%c0_52, %c0_53, %c0_54] : memref<1x72x128xbf16, #tpu.memory_space<vmem>>, vector<1x72x128xbf16>
    %56 = vector.shape_cast %55 : vector<1x72x128xbf16> to vector<72x128xbf16>
    %57 = vector.shape_cast %54 : vector<72x128xbf16> to vector<1x72x128xbf16>
    tpu.vector_store %arg8[%c0_52, %c0_53, %c0_54], %57 {strides = array<i32>} : memref<1x72x128xbf16, #tpu.memory_space<vmem>>, vector<1x72x128xbf16>,
    %58 = arith.extf %54 : vector<72x128xbf16> to vector<72x128xf32>
    %c0_55 = arith.constant 0 : index
    %c0_56 = arith.constant 0 : index
    %59 = vector.load %arg7[%c0_55, %c0_56] : memref<72x1xf32, #tpu.memory_space<vmem>>, vector<72x1xf32>
    %60 = vector.broadcast %59 : vector<72x1xf32> to vector<72x128xf32>
    %61 = arith.mulf %58, %60 : vector<72x128xf32>
    %cst_57 = arith.constant dense<0.000000e+00> : vector<128xf32>
    %62 = vector.multi_reduction <add>, %61, %cst_57 [0] : vector<72x128xf32> to vector<128xf32>
    %63 = vector.shape_cast %62 : vector<128xf32> to vector<1x128xf32>
    %64 = arith.addf %0, %63 : vector<1x128xf32>
    %65 = arith.mulf %61, %58 : vector<72x128xf32>
    %cst_58 = arith.constant dense<0.000000e+00> : vector<128xf32>
    %66 = vector.multi_reduction <add>, %65, %cst_58 [0] : vector<72x128xf32> to vector<128xf32>
    %67 = vector.shape_cast %66 : vector<128xf32> to vector<1x128xf32>
    %68 = arith.addf %0, %67 : vector<1x128xf32>
    %c0_59 = arith.constant 0 : index
    %c0_60 = arith.constant 0 : index
    %c0_61 = arith.constant 0 : index
    %69 = vector.load %arg9[%c0_59, %c0_60, %c0_61] : memref<1x2x128xf32, #tpu.memory_space<vmem>>, vector<1x1x128xf32>
    %70 = vector.shape_cast %69 : vector<1x1x128xf32> to vector<1x128xf32>
    %71 = vector.shape_cast %64 : vector<1x128xf32> to vector<1x1x128xf32>
    tpu.vector_store %arg9[%c0_59, %c0_60, %c0_61], %71 {strides = array<i32>} : memref<1x2x128xf32, #tpu.memory_space<vmem>>, vector<1x1x128xf32>,
    %c0_62 = arith.constant 0 : index
    %c1_63 = arith.constant 1 : index
    %c0_64 = arith.constant 0 : index
    %72 = vector.load %arg9[%c0_62, %c1_63, %c0_64] : memref<1x2x128xf32, #tpu.memory_space<vmem>>, vector<1x1x128xf32>
    %73 = vector.shape_cast %72 : vector<1x1x128xf32> to vector<1x128xf32>
    %74 = vector.shape_cast %68 : vector<1x128xf32> to vector<1x1x128xf32>
    tpu.vector_store %arg9[%c0_62, %c1_63, %c0_64], %74 {strides = array<i32>} : memref<1x2x128xf32, #tpu.memory_space<vmem>>, vector<1x1x128xf32>,
    return
  }
  func.func @transform_0(%arg0: i32, %arg1: i32) -> (i32, i32, i32) {
    %c0_i32 = arith.constant 0 : i32
    %c0_i32_0 = arith.constant 0 : i32
    %c0_i32_1 = arith.constant 0 : i32
    return %arg0, %c0_i32, %c0_i32_0 : i32, i32, i32
  }
  func.func @transform_1(%arg0: i32, %arg1: i32) -> (i32, i32, i32) {
    %c0_i32 = arith.constant 0 : i32
    %c0_i32_0 = arith.constant 0 : i32
    %c0_i32_1 = arith.constant 0 : i32
    return %arg0, %c0_i32, %c0_i32_0 : i32, i32, i32
  }
  func.func @transform_2(%arg0: i32, %arg1: i32) -> (i32, i32, i32) {
    %c0_i32 = arith.constant 0 : i32
    %c0_i32_0 = arith.constant 0 : i32
    %c0_i32_1 = arith.constant 0 : i32
    return %arg0, %c0_i32, %c0_i32_0 : i32, i32, i32
  }
  func.func @transform_3(%arg0: i32, %arg1: i32) -> (i32, i32, i32) {
    %c0_i32 = arith.constant 0 : i32
    %c0_i32_0 = arith.constant 0 : i32
    %c0_i32_1 = arith.constant 0 : i32
    return %arg0, %c0_i32, %c0_i32_0 : i32, i32, i32
  }
  func.func @transform_4(%arg0: i32, %arg1: i32) -> (i32, i32, i32) {
    %c0_i32 = arith.constant 0 : i32
    %c0_i32_0 = arith.constant 0 : i32
    %c0_i32_1 = arith.constant 0 : i32
    return %c0_i32, %c0_i32_0, %arg1 : i32, i32, i32
  }
  func.func @transform_5(%arg0: i32, %arg1: i32) -> (i32, i32) {
    %c0_i32 = arith.constant 0 : i32
    %c0_i32_0 = arith.constant 0 : i32
    %c0_i32_1 = arith.constant 0 : i32
    return %c0_i32, %c0_i32_0 : i32, i32
  }
  func.func @transform_6(%arg0: i32, %arg1: i32) -> (i32, i32, i32) {
    %c0_i32 = arith.constant 0 : i32
    %c0_i32_0 = arith.constant 0 : i32
    return %arg0, %c0_i32, %arg1 : i32, i32, i32
  }
  func.func @transform_7(%arg0: i32, %arg1: i32) -> (i32, i32, i32) {
    %c0_i32 = arith.constant 0 : i32
    %c0_i32_0 = arith.constant 0 : i32
    return %arg0, %c0_i32, %arg1 : i32, i32, i32
  }
}

module attributes {stable_mosaic.version = 11 : i64} {
  func.func @kernel(%arg0: i32, %arg1: i32, %arg2: memref<1x8x9x128xbf16, #tpu.memory_space<vmem>>, %arg3: memref<1x128xf32, #tpu.memory_space<vmem>>, %arg4: memref<1x128xf32, #tpu.memory_space<vmem>>, %arg5: memref<1x8x8x128xbf16, #tpu.memory_space<vmem>>) attributes {dimension_semantics = [#tpu.dimension_semantics<parallel>, #tpu.dimension_semantics<parallel>], iteration_bounds = array<i64: 2, 1>, scalar_prefetch = 0 : i64, scratch_operands = 0 : i64, tpu.core_type = #tpu.core_type<tc>, window_params = [{transform_indices = @transform_0, window_bounds = array<i64: 1, 8, 9, 128>}, {pipeline_mode = #tpu.pipeline_mode<synchronous>, transform_indices = @transform_1, window_bounds = array<i64: 1, 128>}, {pipeline_mode = #tpu.pipeline_mode<synchronous>, transform_indices = @transform_2, window_bounds = array<i64: 1, 128>}, {transform_indices = @transform_3, window_bounds = array<i64: 1, 8, 8, 128>}]} {
    %c0 = arith.constant 0 : index
    %c0_0 = arith.constant 0 : index
    %0 = vector.load %arg3[%c0, %c0_0] : memref<1x128xf32, #tpu.memory_space<vmem>>, vector<1x128xf32>
    %1 = vector.shape_cast %0 : vector<1x128xf32> to vector<1x1x128xf32>
    %c0_1 = arith.constant 0 : index
    %c0_2 = arith.constant 0 : index
    %2 = vector.load %arg4[%c0_1, %c0_2] : memref<1x128xf32, #tpu.memory_space<vmem>>, vector<1x128xf32>
    %3 = vector.shape_cast %2 : vector<1x128xf32> to vector<1x1x128xf32>
    %c0_3 = arith.constant 0 : index
    %c0_4 = arith.constant 0 : index
    %c0_5 = arith.constant 0 : index
    %c0_6 = arith.constant 0 : index
    %4 = vector.load %arg2[%c0_3, %c0_4, %c0_5, %c0_6] : memref<1x8x9x128xbf16, #tpu.memory_space<vmem>>, vector<1x8x8x128xbf16>
    %5 = vector.shape_cast %4 : vector<1x8x8x128xbf16> to vector<8x8x128xbf16>
    %6 = arith.extf %5 : vector<8x8x128xbf16> to vector<8x8x128xf32>
    %7 = vector.broadcast %1 : vector<1x1x128xf32> to vector<8x8x128xf32>
    %8 = arith.mulf %6, %7 : vector<8x8x128xf32>
    %9 = vector.broadcast %3 : vector<1x1x128xf32> to vector<8x8x128xf32>
    %10 = arith.addf %8, %9 : vector<8x8x128xf32>
    %cst = arith.constant 0.000000e+00 : f32
    %11 = vector.broadcast %cst : f32 to vector<8x8x128xf32>
    %12 = arith.maximumf %10, %11 : vector<8x8x128xf32>
    %13 = arith.truncf %12 : vector<8x8x128xf32> to vector<8x8x128xbf16>
    %c0_7 = arith.constant 0 : index
    %c0_8 = arith.constant 0 : index
    %c0_9 = arith.constant 0 : index
    %c0_10 = arith.constant 0 : index
    %14 = vector.load %arg5[%c0_7, %c0_8, %c0_9, %c0_10] : memref<1x8x8x128xbf16, #tpu.memory_space<vmem>>, vector<1x8x8x128xbf16>
    %15 = vector.shape_cast %14 : vector<1x8x8x128xbf16> to vector<8x8x128xbf16>
    %16 = vector.shape_cast %13 : vector<8x8x128xbf16> to vector<1x8x8x128xbf16>
    tpu.vector_store %arg5[%c0_7, %c0_8, %c0_9, %c0_10], %16 {strides = array<i32>} : memref<1x8x8x128xbf16, #tpu.memory_space<vmem>>, vector<1x8x8x128xbf16>,
    return
  }
  func.func @transform_0(%arg0: i32, %arg1: i32) -> (i32, i32, i32, i32) {
    %c0_i32 = arith.constant 0 : i32
    %c0_i32_0 = arith.constant 0 : i32
    %c0_i32_1 = arith.constant 0 : i32
    return %arg0, %arg1, %c0_i32, %c0_i32_0 : i32, i32, i32, i32
  }
  func.func @transform_1(%arg0: i32, %arg1: i32) -> (i32, i32) {
    %c0_i32 = arith.constant 0 : i32
    %c0_i32_0 = arith.constant 0 : i32
    %c0_i32_1 = arith.constant 0 : i32
    return %c0_i32, %c0_i32_0 : i32, i32
  }
  func.func @transform_2(%arg0: i32, %arg1: i32) -> (i32, i32) {
    %c0_i32 = arith.constant 0 : i32
    %c0_i32_0 = arith.constant 0 : i32
    %c0_i32_1 = arith.constant 0 : i32
    return %c0_i32, %c0_i32_0 : i32, i32
  }
  func.func @transform_3(%arg0: i32, %arg1: i32) -> (i32, i32, i32, i32) {
    %c0_i32 = arith.constant 0 : i32
    %c0_i32_0 = arith.constant 0 : i32
    %c0_i32_1 = arith.constant 0 : i32
    return %arg0, %arg1, %c0_i32, %c0_i32_0 : i32, i32, i32, i32
  }
}

module attributes {stable_mosaic.version = 11 : i64} {
  func.func @kernel(%arg0: i32, %arg1: i32, %arg2: memref<1x102x128xbf16, #tpu.memory_space<vmem>>, %arg3: memref<9x128x128xbf16, #tpu.memory_space<vmem>>, %arg4: memref<80x1xf32, #tpu.memory_space<vmem>>, %arg5: memref<1x80x128xbf16, #tpu.memory_space<vmem>>, %arg6: memref<1x2x128xf32, #tpu.memory_space<vmem>>) attributes {dimension_semantics = [#tpu.dimension_semantics<parallel>, #tpu.dimension_semantics<parallel>], iteration_bounds = array<i64: 2, 1>, scalar_prefetch = 0 : i64, scratch_operands = 0 : i64, tpu.core_type = #tpu.core_type<tc>, window_params = [{transform_indices = @transform_0, window_bounds = array<i64: 1, 102, 128>}, {transform_indices = @transform_1, window_bounds = array<i64: 9, 128, 128>}, {pipeline_mode = #tpu.pipeline_mode<synchronous>, transform_indices = @transform_2, window_bounds = array<i64: 80, 1>}, {transform_indices = @transform_3, window_bounds = array<i64: 1, 80, 128>}, {transform_indices = @transform_4, window_bounds = array<i64: 1, 2, 128>}]} {
    %cst = arith.constant 0.000000e+00 : f32
    %0 = vector.broadcast %cst : f32 to vector<1x128xf32>
    %c0 = arith.constant 0 : index
    %c0_0 = arith.constant 0 : index
    %c0_1 = arith.constant 0 : index
    %1 = vector.load %arg2[%c0, %c0_0, %c0_1] : memref<1x102x128xbf16, #tpu.memory_space<vmem>>, vector<1x80x128xbf16>
    %2 = vector.shape_cast %1 : vector<1x80x128xbf16> to vector<80x128xbf16>
    %c0_2 = arith.constant 0 : index
    %c0_3 = arith.constant 0 : index
    %c0_4 = arith.constant 0 : index
    %3 = vector.load %arg3[%c0_2, %c0_3, %c0_4] : memref<9x128x128xbf16, #tpu.memory_space<vmem>>, vector<1x128x128xbf16>
    %4 = vector.shape_cast %3 : vector<1x128x128xbf16> to vector<128x128xbf16>
    %cst_5 = arith.constant dense<0.000000e+00> : vector<80x128xf32>
    %5 = tpu.matmul %2, %4, %cst_5 {dimension_numbers = #tpu.dot_dimension_numbers<[1], [0], [0], [1], [0, 0, 1, 1], [], []>} : vector<80x128xbf16>, vector<128x128xbf16>, vector<80x128xf32> -> vector<80x128xf32>
    %c0_6 = arith.constant 0 : index
    %c1 = arith.constant 1 : index
    %c0_7 = arith.constant 0 : index
    %6 = vector.load %arg2[%c0_6, %c1, %c0_7] : memref<1x102x128xbf16, #tpu.memory_space<vmem>>, vector<1x80x128xbf16>
    %7 = vector.shape_cast %6 : vector<1x80x128xbf16> to vector<80x128xbf16>
    %c1_8 = arith.constant 1 : index
    %c0_9 = arith.constant 0 : index
    %c0_10 = arith.constant 0 : index
    %8 = vector.load %arg3[%c1_8, %c0_9, %c0_10] : memref<9x128x128xbf16, #tpu.memory_space<vmem>>, vector<1x128x128xbf16>
    %9 = vector.shape_cast %8 : vector<1x128x128xbf16> to vector<128x128xbf16>
    %cst_11 = arith.constant dense<0.000000e+00> : vector<80x128xf32>
    %10 = tpu.matmul %7, %9, %cst_11 {dimension_numbers = #tpu.dot_dimension_numbers<[1], [0], [0], [1], [0, 0, 1, 1], [], []>} : vector<80x128xbf16>, vector<128x128xbf16>, vector<80x128xf32> -> vector<80x128xf32>
    %11 = arith.addf %5, %10 : vector<80x128xf32>
    %c0_12 = arith.constant 0 : index
    %c2 = arith.constant 2 : index
    %c0_13 = arith.constant 0 : index
    %12 = vector.load %arg2[%c0_12, %c2, %c0_13] : memref<1x102x128xbf16, #tpu.memory_space<vmem>>, vector<1x80x128xbf16>
    %13 = vector.shape_cast %12 : vector<1x80x128xbf16> to vector<80x128xbf16>
    %c2_14 = arith.constant 2 : index
    %c0_15 = arith.constant 0 : index
    %c0_16 = arith.constant 0 : index
    %14 = vector.load %arg3[%c2_14, %c0_15, %c0_16] : memref<9x128x128xbf16, #tpu.memory_space<vmem>>, vector<1x128x128xbf16>
    %15 = vector.shape_cast %14 : vector<1x128x128xbf16> to vector<128x128xbf16>
    %cst_17 = arith.constant dense<0.000000e+00> : vector<80x128xf32>
    %16 = tpu.matmul %13, %15, %cst_17 {dimension_numbers = #tpu.dot_dimension_numbers<[1], [0], [0], [1], [0, 0, 1, 1], [], []>} : vector<80x128xbf16>, vector<128x128xbf16>, vector<80x128xf32> -> vector<80x128xf32>
    %17 = arith.addf %11, %16 : vector<80x128xf32>
    %c0_18 = arith.constant 0 : index
    %c10 = arith.constant 10 : index
    %c0_19 = arith.constant 0 : index
    %18 = vector.load %arg2[%c0_18, %c10, %c0_19] : memref<1x102x128xbf16, #tpu.memory_space<vmem>>, vector<1x80x128xbf16>
    %19 = vector.shape_cast %18 : vector<1x80x128xbf16> to vector<80x128xbf16>
    %c3 = arith.constant 3 : index
    %c0_20 = arith.constant 0 : index
    %c0_21 = arith.constant 0 : index
    %20 = vector.load %arg3[%c3, %c0_20, %c0_21] : memref<9x128x128xbf16, #tpu.memory_space<vmem>>, vector<1x128x128xbf16>
    %21 = vector.shape_cast %20 : vector<1x128x128xbf16> to vector<128x128xbf16>
    %cst_22 = arith.constant dense<0.000000e+00> : vector<80x128xf32>
    %22 = tpu.matmul %19, %21, %cst_22 {dimension_numbers = #tpu.dot_dimension_numbers<[1], [0], [0], [1], [0, 0, 1, 1], [], []>} : vector<80x128xbf16>, vector<128x128xbf16>, vector<80x128xf32> -> vector<80x128xf32>
    %23 = arith.addf %17, %22 : vector<80x128xf32>
    %c0_23 = arith.constant 0 : index
    %c11 = arith.constant 11 : index
    %c0_24 = arith.constant 0 : index
    %24 = vector.load %arg2[%c0_23, %c11, %c0_24] : memref<1x102x128xbf16, #tpu.memory_space<vmem>>, vector<1x80x128xbf16>
    %25 = vector.shape_cast %24 : vector<1x80x128xbf16> to vector<80x128xbf16>
    %c4 = arith.constant 4 : index
    %c0_25 = arith.constant 0 : index
    %c0_26 = arith.constant 0 : index
    %26 = vector.load %arg3[%c4, %c0_25, %c0_26] : memref<9x128x128xbf16, #tpu.memory_space<vmem>>, vector<1x128x128xbf16>
    %27 = vector.shape_cast %26 : vector<1x128x128xbf16> to vector<128x128xbf16>
    %cst_27 = arith.constant dense<0.000000e+00> : vector<80x128xf32>
    %28 = tpu.matmul %25, %27, %cst_27 {dimension_numbers = #tpu.dot_dimension_numbers<[1], [0], [0], [1], [0, 0, 1, 1], [], []>} : vector<80x128xbf16>, vector<128x128xbf16>, vector<80x128xf32> -> vector<80x128xf32>
    %29 = arith.addf %23, %28 : vector<80x128xf32>
    %c0_28 = arith.constant 0 : index
    %c12 = arith.constant 12 : index
    %c0_29 = arith.constant 0 : index
    %30 = vector.load %arg2[%c0_28, %c12, %c0_29] : memref<1x102x128xbf16, #tpu.memory_space<vmem>>, vector<1x80x128xbf16>
    %31 = vector.shape_cast %30 : vector<1x80x128xbf16> to vector<80x128xbf16>
    %c5 = arith.constant 5 : index
    %c0_30 = arith.constant 0 : index
    %c0_31 = arith.constant 0 : index
    %32 = vector.load %arg3[%c5, %c0_30, %c0_31] : memref<9x128x128xbf16, #tpu.memory_space<vmem>>, vector<1x128x128xbf16>
    %33 = vector.shape_cast %32 : vector<1x128x128xbf16> to vector<128x128xbf16>
    %cst_32 = arith.constant dense<0.000000e+00> : vector<80x128xf32>
    %34 = tpu.matmul %31, %33, %cst_32 {dimension_numbers = #tpu.dot_dimension_numbers<[1], [0], [0], [1], [0, 0, 1, 1], [], []>} : vector<80x128xbf16>, vector<128x128xbf16>, vector<80x128xf32> -> vector<80x128xf32>
    %35 = arith.addf %29, %34 : vector<80x128xf32>
    %c0_33 = arith.constant 0 : index
    %c20 = arith.constant 20 : index
    %c0_34 = arith.constant 0 : index
    %36 = vector.load %arg2[%c0_33, %c20, %c0_34] : memref<1x102x128xbf16, #tpu.memory_space<vmem>>, vector<1x80x128xbf16>
    %37 = vector.shape_cast %36 : vector<1x80x128xbf16> to vector<80x128xbf16>
    %c6 = arith.constant 6 : index
    %c0_35 = arith.constant 0 : index
    %c0_36 = arith.constant 0 : index
    %38 = vector.load %arg3[%c6, %c0_35, %c0_36] : memref<9x128x128xbf16, #tpu.memory_space<vmem>>, vector<1x128x128xbf16>
    %39 = vector.shape_cast %38 : vector<1x128x128xbf16> to vector<128x128xbf16>
    %cst_37 = arith.constant dense<0.000000e+00> : vector<80x128xf32>
    %40 = tpu.matmul %37, %39, %cst_37 {dimension_numbers = #tpu.dot_dimension_numbers<[1], [0], [0], [1], [0, 0, 1, 1], [], []>} : vector<80x128xbf16>, vector<128x128xbf16>, vector<80x128xf32> -> vector<80x128xf32>
    %41 = arith.addf %35, %40 : vector<80x128xf32>
    %c0_38 = arith.constant 0 : index
    %c21 = arith.constant 21 : index
    %c0_39 = arith.constant 0 : index
    %42 = vector.load %arg2[%c0_38, %c21, %c0_39] : memref<1x102x128xbf16, #tpu.memory_space<vmem>>, vector<1x80x128xbf16>
    %43 = vector.shape_cast %42 : vector<1x80x128xbf16> to vector<80x128xbf16>
    %c7 = arith.constant 7 : index
    %c0_40 = arith.constant 0 : index
    %c0_41 = arith.constant 0 : index
    %44 = vector.load %arg3[%c7, %c0_40, %c0_41] : memref<9x128x128xbf16, #tpu.memory_space<vmem>>, vector<1x128x128xbf16>
    %45 = vector.shape_cast %44 : vector<1x128x128xbf16> to vector<128x128xbf16>
    %cst_42 = arith.constant dense<0.000000e+00> : vector<80x128xf32>
    %46 = tpu.matmul %43, %45, %cst_42 {dimension_numbers = #tpu.dot_dimension_numbers<[1], [0], [0], [1], [0, 0, 1, 1], [], []>} : vector<80x128xbf16>, vector<128x128xbf16>, vector<80x128xf32> -> vector<80x128xf32>
    %47 = arith.addf %41, %46 : vector<80x128xf32>
    %c0_43 = arith.constant 0 : index
    %c22 = arith.constant 22 : index
    %c0_44 = arith.constant 0 : index
    %48 = vector.load %arg2[%c0_43, %c22, %c0_44] : memref<1x102x128xbf16, #tpu.memory_space<vmem>>, vector<1x80x128xbf16>
    %49 = vector.shape_cast %48 : vector<1x80x128xbf16> to vector<80x128xbf16>
    %c8 = arith.constant 8 : index
    %c0_45 = arith.constant 0 : index
    %c0_46 = arith.constant 0 : index
    %50 = vector.load %arg3[%c8, %c0_45, %c0_46] : memref<9x128x128xbf16, #tpu.memory_space<vmem>>, vector<1x128x128xbf16>
    %51 = vector.shape_cast %50 : vector<1x128x128xbf16> to vector<128x128xbf16>
    %cst_47 = arith.constant dense<0.000000e+00> : vector<80x128xf32>
    %52 = tpu.matmul %49, %51, %cst_47 {dimension_numbers = #tpu.dot_dimension_numbers<[1], [0], [0], [1], [0, 0, 1, 1], [], []>} : vector<80x128xbf16>, vector<128x128xbf16>, vector<80x128xf32> -> vector<80x128xf32>
    %53 = arith.addf %47, %52 : vector<80x128xf32>
    %54 = arith.truncf %53 : vector<80x128xf32> to vector<80x128xbf16>
    %c0_48 = arith.constant 0 : index
    %c0_49 = arith.constant 0 : index
    %c0_50 = arith.constant 0 : index
    %55 = vector.load %arg5[%c0_48, %c0_49, %c0_50] : memref<1x80x128xbf16, #tpu.memory_space<vmem>>, vector<1x80x128xbf16>
    %56 = vector.shape_cast %55 : vector<1x80x128xbf16> to vector<80x128xbf16>
    %57 = vector.shape_cast %54 : vector<80x128xbf16> to vector<1x80x128xbf16>
    tpu.vector_store %arg5[%c0_48, %c0_49, %c0_50], %57 {strides = array<i32>} : memref<1x80x128xbf16, #tpu.memory_space<vmem>>, vector<1x80x128xbf16>,
    %58 = arith.extf %54 : vector<80x128xbf16> to vector<80x128xf32>
    %c0_51 = arith.constant 0 : index
    %c0_52 = arith.constant 0 : index
    %59 = vector.load %arg4[%c0_51, %c0_52] : memref<80x1xf32, #tpu.memory_space<vmem>>, vector<80x1xf32>
    %60 = vector.broadcast %59 : vector<80x1xf32> to vector<80x128xf32>
    %61 = arith.mulf %58, %60 : vector<80x128xf32>
    %cst_53 = arith.constant dense<0.000000e+00> : vector<128xf32>
    %62 = vector.multi_reduction <add>, %61, %cst_53 [0] : vector<80x128xf32> to vector<128xf32>
    %63 = vector.shape_cast %62 : vector<128xf32> to vector<1x128xf32>
    %64 = arith.addf %0, %63 : vector<1x128xf32>
    %65 = arith.mulf %61, %58 : vector<80x128xf32>
    %cst_54 = arith.constant dense<0.000000e+00> : vector<128xf32>
    %66 = vector.multi_reduction <add>, %65, %cst_54 [0] : vector<80x128xf32> to vector<128xf32>
    %67 = vector.shape_cast %66 : vector<128xf32> to vector<1x128xf32>
    %68 = arith.addf %0, %67 : vector<1x128xf32>
    %c0_55 = arith.constant 0 : index
    %c0_56 = arith.constant 0 : index
    %c0_57 = arith.constant 0 : index
    %69 = vector.load %arg6[%c0_55, %c0_56, %c0_57] : memref<1x2x128xf32, #tpu.memory_space<vmem>>, vector<1x1x128xf32>
    %70 = vector.shape_cast %69 : vector<1x1x128xf32> to vector<1x128xf32>
    %71 = vector.shape_cast %64 : vector<1x128xf32> to vector<1x1x128xf32>
    tpu.vector_store %arg6[%c0_55, %c0_56, %c0_57], %71 {strides = array<i32>} : memref<1x2x128xf32, #tpu.memory_space<vmem>>, vector<1x1x128xf32>,
    %c0_58 = arith.constant 0 : index
    %c1_59 = arith.constant 1 : index
    %c0_60 = arith.constant 0 : index
    %72 = vector.load %arg6[%c0_58, %c1_59, %c0_60] : memref<1x2x128xf32, #tpu.memory_space<vmem>>, vector<1x1x128xf32>
    %73 = vector.shape_cast %72 : vector<1x1x128xf32> to vector<1x128xf32>
    %74 = vector.shape_cast %68 : vector<1x128xf32> to vector<1x1x128xf32>
    tpu.vector_store %arg6[%c0_58, %c1_59, %c0_60], %74 {strides = array<i32>} : memref<1x2x128xf32, #tpu.memory_space<vmem>>, vector<1x1x128xf32>,
    return
  }
  func.func @transform_0(%arg0: i32, %arg1: i32) -> (i32, i32, i32) {
    %c0_i32 = arith.constant 0 : i32
    %c0_i32_0 = arith.constant 0 : i32
    %c0_i32_1 = arith.constant 0 : i32
    return %arg0, %c0_i32, %c0_i32_0 : i32, i32, i32
  }
  func.func @transform_1(%arg0: i32, %arg1: i32) -> (i32, i32, i32) {
    %c0_i32 = arith.constant 0 : i32
    %c0_i32_0 = arith.constant 0 : i32
    %c0_i32_1 = arith.constant 0 : i32
    return %c0_i32, %c0_i32_0, %arg1 : i32, i32, i32
  }
  func.func @transform_2(%arg0: i32, %arg1: i32) -> (i32, i32) {
    %c0_i32 = arith.constant 0 : i32
    %c0_i32_0 = arith.constant 0 : i32
    %c0_i32_1 = arith.constant 0 : i32
    return %c0_i32, %c0_i32_0 : i32, i32
  }
  func.func @transform_3(%arg0: i32, %arg1: i32) -> (i32, i32, i32) {
    %c0_i32 = arith.constant 0 : i32
    %c0_i32_0 = arith.constant 0 : i32
    return %arg0, %c0_i32, %arg1 : i32, i32, i32
  }
  func.func @transform_4(%arg0: i32, %arg1: i32) -> (i32, i32, i32) {
    %c0_i32 = arith.constant 0 : i32
    %c0_i32_0 = arith.constant 0 : i32
    return %arg0, %c0_i32, %arg1 : i32, i32, i32
  }
}

module attributes {stable_mosaic.version = 11 : i64} {
  func.func @kernel(%arg0: i32, %arg1: i32, %arg2: memref<1x8x10x128xbf16, #tpu.memory_space<vmem>>, %arg3: memref<1x128xf32, #tpu.memory_space<vmem>>, %arg4: memref<1x128xf32, #tpu.memory_space<vmem>>, %arg5: memref<1x8x8x128xbf16, #tpu.memory_space<vmem>>, %arg6: memref<1x128xf32, #tpu.memory_space<vmem>>, %arg7: memref<1x128xf32, #tpu.memory_space<vmem>>, %arg8: memref<1x8x8x128xbf16, #tpu.memory_space<vmem>>) attributes {dimension_semantics = [#tpu.dimension_semantics<parallel>, #tpu.dimension_semantics<parallel>], iteration_bounds = array<i64: 2, 1>, scalar_prefetch = 0 : i64, scratch_operands = 0 : i64, tpu.core_type = #tpu.core_type<tc>, window_params = [{transform_indices = @transform_0, window_bounds = array<i64: 1, 8, 10, 128>}, {pipeline_mode = #tpu.pipeline_mode<synchronous>, transform_indices = @transform_1, window_bounds = array<i64: 1, 128>}, {pipeline_mode = #tpu.pipeline_mode<synchronous>, transform_indices = @transform_2, window_bounds = array<i64: 1, 128>}, {transform_indices = @transform_3, window_bounds = array<i64: 1, 8, 8, 128>}, {pipeline_mode = #tpu.pipeline_mode<synchronous>, transform_indices = @transform_4, window_bounds = array<i64: 1, 128>}, {pipeline_mode = #tpu.pipeline_mode<synchronous>, transform_indices = @transform_5, window_bounds = array<i64: 1, 128>}, {transform_indices = @transform_6, window_bounds = array<i64: 1, 8, 8, 128>}]} {
    %c0 = arith.constant 0 : index
    %c0_0 = arith.constant 0 : index
    %0 = vector.load %arg3[%c0, %c0_0] : memref<1x128xf32, #tpu.memory_space<vmem>>, vector<1x128xf32>
    %1 = vector.shape_cast %0 : vector<1x128xf32> to vector<1x1x128xf32>
    %c0_1 = arith.constant 0 : index
    %c0_2 = arith.constant 0 : index
    %2 = vector.load %arg4[%c0_1, %c0_2] : memref<1x128xf32, #tpu.memory_space<vmem>>, vector<1x128xf32>
    %3 = vector.shape_cast %2 : vector<1x128xf32> to vector<1x1x128xf32>
    %c0_3 = arith.constant 0 : index
    %c0_4 = arith.constant 0 : index
    %4 = vector.load %arg6[%c0_3, %c0_4] : memref<1x128xf32, #tpu.memory_space<vmem>>, vector<1x128xf32>
    %5 = vector.shape_cast %4 : vector<1x128xf32> to vector<1x1x128xf32>
    %c0_5 = arith.constant 0 : index
    %c0_6 = arith.constant 0 : index
    %6 = vector.load %arg7[%c0_5, %c0_6] : memref<1x128xf32, #tpu.memory_space<vmem>>, vector<1x128xf32>
    %7 = vector.shape_cast %6 : vector<1x128xf32> to vector<1x1x128xf32>
    %c0_7 = arith.constant 0 : index
    %c0_8 = arith.constant 0 : index
    %c0_9 = arith.constant 0 : index
    %c0_10 = arith.constant 0 : index
    %8 = vector.load %arg2[%c0_7, %c0_8, %c0_9, %c0_10] : memref<1x8x10x128xbf16, #tpu.memory_space<vmem>>, vector<1x8x8x128xbf16>
    %9 = vector.shape_cast %8 : vector<1x8x8x128xbf16> to vector<8x8x128xbf16>
    %10 = arith.extf %9 : vector<8x8x128xbf16> to vector<8x8x128xf32>
    %c0_11 = arith.constant 0 : index
    %c0_12 = arith.constant 0 : index
    %c0_13 = arith.constant 0 : index
    %c0_14 = arith.constant 0 : index
    %11 = vector.load %arg5[%c0_11, %c0_12, %c0_13, %c0_14] : memref<1x8x8x128xbf16, #tpu.memory_space<vmem>>, vector<1x8x8x128xbf16>
    %12 = vector.shape_cast %11 : vector<1x8x8x128xbf16> to vector<8x8x128xbf16>
    %13 = arith.extf %12 : vector<8x8x128xbf16> to vector<8x8x128xf32>
    %14 = vector.broadcast %1 : vector<1x1x128xf32> to vector<8x8x128xf32>
    %15 = arith.mulf %10, %14 : vector<8x8x128xf32>
    %16 = vector.broadcast %3 : vector<1x1x128xf32> to vector<8x8x128xf32>
    %17 = arith.addf %15, %16 : vector<8x8x128xf32>
    %18 = vector.broadcast %5 : vector<1x1x128xf32> to vector<8x8x128xf32>
    %19 = arith.mulf %13, %18 : vector<8x8x128xf32>
    %20 = arith.addf %17, %19 : vector<8x8x128xf32>
    %21 = vector.broadcast %7 : vector<1x1x128xf32> to vector<8x8x128xf32>
    %22 = arith.addf %20, %21 : vector<8x8x128xf32>
    %cst = arith.constant 0.000000e+00 : f32
    %23 = vector.broadcast %cst : f32 to vector<8x8x128xf32>
    %24 = arith.maximumf %22, %23 : vector<8x8x128xf32>
    %25 = arith.truncf %24 : vector<8x8x128xf32> to vector<8x8x128xbf16>
    %c0_15 = arith.constant 0 : index
    %c0_16 = arith.constant 0 : index
    %c0_17 = arith.constant 0 : index
    %c0_18 = arith.constant 0 : index
    %26 = vector.load %arg8[%c0_15, %c0_16, %c0_17, %c0_18] : memref<1x8x8x128xbf16, #tpu.memory_space<vmem>>, vector<1x8x8x128xbf16>
    %27 = vector.shape_cast %26 : vector<1x8x8x128xbf16> to vector<8x8x128xbf16>
    %28 = vector.shape_cast %25 : vector<8x8x128xbf16> to vector<1x8x8x128xbf16>
    tpu.vector_store %arg8[%c0_15, %c0_16, %c0_17, %c0_18], %28 {strides = array<i32>} : memref<1x8x8x128xbf16, #tpu.memory_space<vmem>>, vector<1x8x8x128xbf16>,
    return
  }
  func.func @transform_0(%arg0: i32, %arg1: i32) -> (i32, i32, i32, i32) {
    %c0_i32 = arith.constant 0 : i32
    %c0_i32_0 = arith.constant 0 : i32
    %c0_i32_1 = arith.constant 0 : i32
    return %arg0, %arg1, %c0_i32, %c0_i32_0 : i32, i32, i32, i32
  }
  func.func @transform_1(%arg0: i32, %arg1: i32) -> (i32, i32) {
    %c0_i32 = arith.constant 0 : i32
    %c0_i32_0 = arith.constant 0 : i32
    %c0_i32_1 = arith.constant 0 : i32
    return %c0_i32, %c0_i32_0 : i32, i32
  }
  func.func @transform_2(%arg0: i32, %arg1: i32) -> (i32, i32) {
    %c0_i32 = arith.constant 0 : i32
    %c0_i32_0 = arith.constant 0 : i32
    %c0_i32_1 = arith.constant 0 : i32
    return %c0_i32, %c0_i32_0 : i32, i32
  }
  func.func @transform_3(%arg0: i32, %arg1: i32) -> (i32, i32, i32, i32) {
    %c0_i32 = arith.constant 0 : i32
    %c0_i32_0 = arith.constant 0 : i32
    %c0_i32_1 = arith.constant 0 : i32
    return %arg0, %arg1, %c0_i32, %c0_i32_0 : i32, i32, i32, i32
  }
  func.func @transform_4(%arg0: i32, %arg1: i32) -> (i32, i32) {
    %c0_i32 = arith.constant 0 : i32
    %c0_i32_0 = arith.constant 0 : i32
    %c0_i32_1 = arith.constant 0 : i32
    return %c0_i32, %c0_i32_0 : i32, i32
  }
  func.func @transform_5(%arg0: i32, %arg1: i32) -> (i32, i32) {
    %c0_i32 = arith.constant 0 : i32
    %c0_i32_0 = arith.constant 0 : i32
    %c0_i32_1 = arith.constant 0 : i32
    return %c0_i32, %c0_i32_0 : i32, i32
  }
  func.func @transform_6(%arg0: i32, %arg1: i32) -> (i32, i32, i32, i32) {
    %c0_i32 = arith.constant 0 : i32
    %c0_i32_0 = arith.constant 0 : i32
    %c0_i32_1 = arith.constant 0 : i32
    return %arg0, %arg1, %c0_i32, %c0_i32_0 : i32, i32, i32, i32
  }
}

</mosaic_0001>

<llo_original>
// kernel: a_call__.8
$region0: #{a_call__.8}
  #allocation0 [shape = 'u32[]', space=smem, size = 0x4, offset = 0x4, fixed_abs, tag = 'smem constant byte address 0x4 - core index']
  #allocation1 [shape = 'u32[144,128]{1,0:T(1,128)}', space=vmem, size = 0x12000, scoped, tag = 'internal scratch']
  %s0 = inlined_call_operand.vmem [shape: bf16[2,64,128], index: 0, kind: input, shape index: {}]
  %s1 = inlined_call_operand.vmem [shape: bf16[1,128,128], index: 1, kind: input, shape index: {}]
  %s2 = inlined_call_operand.vmem [shape: bf16[2,64,128], index: 2, kind: output, shape index: {0}]
  %s3 = inlined_call_operand.vmem [shape: f32[2,2,128], index: 3, kind: output, shape index: {1}]
  %4 = xla_tuple %s2, %s3
  %s5 = sld [smem:[#allocation0]]
  $region49: #{a_call__.8} parent=0
    _
  %s7 = ssub.s32 1, %s5
  %s8 = scalar_select 0, %s7, %s5
  loop: start=0, step=1, limit=4
  $region2: #{a_call__.8} parent=0 // loop_pre_header
    _
  $region3: #{a_call__.8} parent=0 // loop_header
    %s10 = sphi 0, %s14
    %p11 = scmp.ge.s32.totalorder %s10, 4
    %s17 = sphi 0, %s29
    %s18 = sphi 0, %s25
    %s19 = sphi 0, %s17
    %s20 = sphi 0, %s18
    %s21 = sphi 0, %s19
    %s22 = sphi 0, %s20
    %s32 = sphi 0, %s34
    %s35 = sphi 0, %s32
    %s36 = sphi 0, %s35
    %s52 = sphi 0, %s36
    %s58 = sphi 0, %s60
    %s61 = sphi 0, %s58
    %s62 = sphi 0, %s61
    %s78 = sphi 0, %s62
    %s86 = sphi 0, %s88
    %s89 = sphi 0, %s86
    %s90 = sphi 0, %s89
    %s106 = sphi 0, %s90
    %s114 = sphi 0, %s116
    %s117 = sphi 0, %s114
    %s118 = sphi 0, %s117
    %s134 = sphi 0, %s118
  $region4: #{a_call__.8} parent=0 // loop_header_branch
    %13 = sbr.rel (%p11) target = $region8
  $region5: #{a_call__.8} parent=0 // loop_body
    %s15 = ssub.s32 %s10, 1
    %s16 = ssub.s32 %s10, 2
    %s23 = sadd.s32 1, %s18
    %p24 = scmp.ge.s32.totalorder %s23, 1
    %s25 = scalar_select %p24, 0, %s23
    %s26 = sadd.s32 1, %s17
    %s27 = scalar_select %p24, %s26, %s17
    %p28 = scmp.ge.s32.totalorder %s27, 2
    %s29 = scalar_select %p28, 0, %s27
    %s30 = ssub.s32 %s17, %s29
    %p31 = scmp.eq.s32.totalorder %s30, 0
    %s33 = sadd.s32 %s32, 1
    %s34 = scalar_select %p31, %s32, %s33
    %p37 = pneg %p31
    %p38 = scmp.eq.s32.totalorder %s10, 1
    %p39 = por %p37, %p38
    %p40 = scmp.ne.s32.totalorder %s32, %s35
    %p41 = scmp.eq.s32.totalorder %s10, 0
    %p42 = por %p40, %p41
    %p43 = scmp.ne.s32.totalorder %s32, %s35
    %p44 = scmp.eq.s32.totalorder %s15, 1
    %p45 = por %p43, %p44
    %p46 = scmp.ne.s32.totalorder %s35, %s36
    %p47 = scmp.eq.s32.totalorder %s15, 0
    %p48 = por %p46, %p47
    %p49 = scmp.ne.s32.totalorder %s35, %s36
    %p50 = scmp.eq.s32.totalorder %s16, 1
    %p51 = por %p49, %p50
    %p53 = scmp.ne.s32.totalorder %s36, %s52
    %p54 = scmp.eq.s32.totalorder %s16, 0
    %p55 = por %p53, %p54
    %s56 = ssub.s32 %s18, %s25
    %p57 = scmp.eq.s32.totalorder %s56, 0
    %s59 = sadd.s32 %s58, 1
    %s60 = scalar_select %p57, %s58, %s59
    %p63 = pneg %p57
    %p64 = scmp.eq.s32.totalorder %s10, 1
    %p65 = por %p63, %p64
    %p66 = scmp.ne.s32.totalorder %s58, %s61
    %p67 = scmp.eq.s32.totalorder %s10, 0
    %p68 = por %p66, %p67
    %p69 = scmp.ne.s32.totalorder %s58, %s61
    %p70 = scmp.eq.s32.totalorder %s15, 1
    %p71 = por %p69, %p70
    %p72 = scmp.ne.s32.totalorder %s61, %s62
    %p73 = scmp.eq.s32.totalorder %s15, 0
    %p74 = por %p72, %p73
    %p75 = scmp.ne.s32.totalorder %s61, %s62
    %p76 = scmp.eq.s32.totalorder %s16, 1
    %p77 = por %p75, %p76
    %p79 = scmp.ne.s32.totalorder %s62, %s78
    %p80 = scmp.eq.s32.totalorder %s16, 0
    %p81 = por %p79, %p80
    %s82 = ssub.s32 %s17, %s29
    %s83 = ssub.s32 %s18, %s25
    %s84 = sor.u32 %s82, %s83
    %p85 = scmp.eq.s32.totalorder %s84, 0
    %s87 = sadd.s32 %s86, 1
    %s88 = scalar_select %p85, %s86, %s87
    %p91 = pneg %p85
    %p92 = scmp.eq.s32.totalorder %s10, 1
    %p93 = por %p91, %p92
    %p94 = scmp.ne.s32.totalorder %s86, %s89
    %p95 = scmp.eq.s32.totalorder %s10, 0
    %p96 = por %p94, %p95
    %p97 = scmp.ne.s32.totalorder %s86, %s89
    %p98 = scmp.eq.s32.totalorder %s15, 1
    %p99 = por %p97, %p98
    %p100 = scmp.ne.s32.totalorder %s89, %s90
    %p101 = scmp.eq.s32.totalorder %s15, 0
    %p102 = por %p100, %p101
    %p103 = scmp.ne.s32.totalorder %s89, %s90
    %p104 = scmp.eq.s32.totalorder %s16, 1
    %p105 = por %p103, %p104
    %p107 = scmp.ne.s32.totalorder %s90, %s106
    %p108 = scmp.eq.s32.totalorder %s16, 0
    %p109 = por %p107, %p108
    %s110 = ssub.s32 %s17, %s29
    %s111 = ssub.s32 %s18, %s25
    %s112 = sor.u32 %s110, %s111
    %p113 = scmp.eq.s32.totalorder %s112, 0
    %s115 = sadd.s32 %s114, 1
    %s116 = scalar_select %p113, %s114, %s115
    %p119 = pneg %p113
    %p120 = scmp.eq.s32.totalorder %s10, 1
    %p121 = por %p119, %p120
    %p122 = scmp.ne.s32.totalorder %s114, %s117
    %p123 = scmp.eq.s32.totalorder %s10, 0
    %p124 = por %p122, %p123
    %p125 = scmp.ne.s32.totalorder %s114, %s117
    %p126 = scmp.eq.s32.totalorder %s15, 1
    %p127 = por %p125, %p126
    %p128 = scmp.ne.s32.totalorder %s117, %s118
    %p129 = scmp.eq.s32.totalorder %s15, 0
    %p130 = por %p128, %p129
    %p131 = scmp.ne.s32.totalorder %s117, %s118
    %p132 = scmp.eq.s32.totalorder %s16, 1
    %p133 = por %p131, %p132
    %p135 = scmp.ne.s32.totalorder %s118, %s134
    %p136 = scmp.eq.s32.totalorder %s16, 0
    %p137 = por %p135, %p136
    %p138 = scmp.le.s32.totalorder 1, %s10
    %p139 = scmp.lt.s32.totalorder %s10, 3
    %p140 = pnand %p138, %p139
    %p141 = pneg %p140
    // Predicated region
    $region9: #{a_call__.8} parent=5 // pred_check
      _
    $region10: #{a_call__.8} parent=5 // pred_check_branch
      %143 = sbr.rel (%p140) target = $region12
    $region11: #{a_call__.8} parent=5 // pred_region
      %s144 = ssub.s32 %s10, 1
      // Predicated region
      $region13: #{a_call__.8} parent=11 // pred_check
        %p145 = pneg %p74
      $region14: #{a_call__.8} parent=11 // pred_check_branch
        %147 = sbr.rel (%p145) target = $region16
      $region15: #{a_call__.8} parent=11 // pred_region
        %p148 = scmp.lt.s32.totalorder %s20, 0
        %s149 = scalar_select %p148, %s20, 0
        %s150 = smul.addr %s149, 4
        %s151 = scalar_lea.vmem %s1, %s150
      $region16: #{a_call__.8} parent=11 // pred_fallthru
        _
    $region12: #{a_call__.8} parent=5 // pred_fallthru
      _
    %p152 = scmp.lt.s32.totalorder %s10, 2
    // Predicated region
    $region17: #{a_call__.8} parent=5 // pred_check
      %p153 = pneg %p152
    $region18: #{a_call__.8} parent=5 // pred_check_branch
      %155 = sbr.rel (%p153) target = $region20
    $region19: #{a_call__.8} parent=5 // pred_region
      // Predicated region
      $region21: #{a_call__.8} parent=19 // pred_check
        %p156 = pneg %p42
      $region22: #{a_call__.8} parent=19 // pred_check_branch
        %158 = sbr.rel (%p156) target = $region24
      $region23: #{a_call__.8} parent=19 // pred_region
        %p159 = scmp.lt.s32.totalorder %s17, 1
        %s160 = scalar_select %p159, %s17, 1
        %s161 = smul.addr %s160, 8
        %s162 = smul.addr %s161, 4
        %s163 = scalar_lea.vmem %s0, %s162
      $region24: #{a_call__.8} parent=19 // pred_fallthru
        _
    $region20: #{a_call__.8} parent=5 // pred_fallthru
      _
    %p164 = scmp.le.s32.totalorder 1, %s10
    %p165 = scmp.lt.s32.totalorder %s10, 3
    %p166 = pnand %p164, %p165
    %p167 = pneg %p166
    // Predicated region
    $region25: #{a_call__.8} parent=5 // pred_check
      _
    $region26: #{a_call__.8} parent=5 // pred_check_branch
      %169 = sbr.rel (%p166) target = $region28
    $region27: #{a_call__.8} parent=5 // pred_region
      %s170 = ssub.s32 %s10, 1
      %p171 = scmp.lt.s32.totalorder %s19, 1
      %s172 = scalar_select %p171, %s19, 1
      %s173 = smul.addr %s172, 8
      %s174 = smul.addr %s173, 4
      %s175 = scalar_lea.vmem %s0, %s174
      %p176 = pneg %p48
      %p177 = pneg %p45
      %p178 = scmp.lt.s32.totalorder %s20, 0
      %s179 = scalar_select %p178, %s20, 0
      %s180 = smul.addr %s179, 4
      %s181 = scalar_lea.vmem %s1, %s180
      %p182 = pneg %p74
      %p183 = pneg %p71
      %p184 = pneg %p102
      %p185 = pneg %p99
      %p186 = scmp.lt.s32.totalorder %s19, 1
      %s187 = scalar_select %p186, %s19, 1
      %p188 = scmp.lt.s32.totalorder %s20, 0
      %s189 = scalar_select %p188, %s20, 0
      %s190 = smul.addr %s187, 8
      %s191 = sadd.s32 %s189, %s190
      %s192 = smul.addr %s191, 4
      %s193 = scalar_lea.vmem %s2, %s192
      %p194 = pneg %p130
      %p195 = pneg %p127
      %p196 = scmp.lt.s32.totalorder %s19, 1
      %s197 = scalar_select %p196, %s19, 1
      %p198 = scmp.lt.s32.totalorder %s20, 0
      %s199 = scalar_select %p198, %s20, 0
      %s200 = sadd.s32 %s199, %s197
      %s201 = smul.addr %s200, 2
      %s202 = scalar_lea.vmem %s3, %s201
      %p203 = scmp.lt.s32.totalorder %s19, 1
      %s204 = scalar_select %p203, %s19, 1
      %s205 = smul.addr %s204, 8
      %s206 = smul.addr %s205, 4
      %s207 = scalar_lea.vmem %s0, %s206
      %p208 = scmp.lt.s32.totalorder %s20, 0
      %s209 = scalar_select %p208, %s20, 0
      %s210 = smul.addr %s209, 4
      %s211 = scalar_lea.vmem %s1, %s210
      %p212 = scmp.lt.s32.totalorder %s19, 1
      %s213 = scalar_select %p212, %s19, 1
      %p214 = scmp.lt.s32.totalorder %s20, 0
      %s215 = scalar_select %p214, %s20, 0
      %s216 = smul.addr %s213, 8
      %s217 = sadd.s32 %s215, %s216
      %s218 = smul.addr %s217, 4
      %s219 = scalar_lea.vmem %s2, %s218
      %p220 = scmp.lt.s32.totalorder %s19, 1
      %s221 = scalar_select %p220, %s19, 1
      %p222 = scmp.lt.s32.totalorder %s20, 0
      %s223 = scalar_select %p222, %s20, 0
      %s224 = sadd.s32 %s223, %s221
      %s225 = smul.addr %s224, 2
      %s226 = scalar_lea.vmem %s3, %s225
      %v228 = vld [vmem:[%s207] sm:$0xf]
      %v229 = vld [vmem:[%s207 + $0x4] sm:$0xf]
      %v230 = vld [vmem:[%s207 + $0x8] sm:$0xf]
      %v231 = vld [vmem:[%s207 + $0xc] sm:$0xf]
      %v232 = vld [vmem:[%s207 + $0x10] sm:$0xf]
      %v233 = vld [vmem:[%s207 + $0x14] sm:$0xf]
      %v234 = vld [vmem:[%s207 + $0x18] sm:$0xf]
      %v235 = vld [vmem:[%s207 + $0x1c] sm:$0xf]
      %v236 = vld [vmem:[%s211] sm:$0xf]
      %v237 = vld [vmem:[%s211 + $0x4] sm:$0xf]
      %v238 = vld [vmem:[%s211 + $0x8] sm:$0xf]
      %v239 = vld [vmem:[%s211 + $0xc] sm:$0xf]
      %v240 = vld [vmem:[%s211 + $0x10] sm:$0xf]
      %v241 = vld [vmem:[%s211 + $0x14] sm:$0xf]
      %v242 = vld [vmem:[%s211 + $0x18] sm:$0xf]
      %v243 = vld [vmem:[%s211 + $0x1c] sm:$0xf]
      %v244 = vld [vmem:[%s211 + $0x20] sm:$0xf]
      %v245 = vld [vmem:[%s211 + $0x24] sm:$0xf]
      %v246 = vld [vmem:[%s211 + $0x28] sm:$0xf]
      %v247 = vld [vmem:[%s211 + $0x2c] sm:$0xf]
      %v248 = vld [vmem:[%s211 + $0x30] sm:$0xf]
      %v249 = vld [vmem:[%s211 + $0x34] sm:$0xf]
      %v250 = vld [vmem:[%s211 + $0x38] sm:$0xf]
      %v251 = vld [vmem:[%s211 + $0x3c] sm:$0xf]
      %v260 = vunpack.c.l.b16 %v228
      %v261 = vunpack.c.l.b16 %v229
      %v262 = vunpack.c.l.b16 %v230
      %v263 = vunpack.c.l.b16 %v231
      %v264 = vunpack.c.l.b16 %v232
      %v265 = vunpack.c.l.b16 %v233
      %v266 = vunpack.c.l.b16 %v234
      %v267 = vunpack.c.l.b16 %v235
      %v268 = vpack.c.b16 %v261, %v260
      %v269 = vpack.c.b16 %v263, %v262
      %v270 = vpack.c.b16 %v265, %v264
      %v271 = vpack.c.b16 %v267, %v266
      %v292 = vunpack.c.l.b16 %v236
      %v293 = vunpack.c.l.b16 %v237
      %v294 = vunpack.c.l.b16 %v238
      %v295 = vunpack.c.l.b16 %v239
      %v296 = vunpack.c.l.b16 %v240
      %v297 = vunpack.c.l.b16 %v241
      %v298 = vunpack.c.l.b16 %v242
      %v299 = vunpack.c.l.b16 %v243
      %v300 = vunpack.c.l.b16 %v244
      %v301 = vunpack.c.l.b16 %v245
      %v302 = vunpack.c.l.b16 %v246
      %v303 = vunpack.c.l.b16 %v247
      %v304 = vunpack.c.l.b16 %v248
      %v305 = vunpack.c.l.b16 %v249
      %v306 = vunpack.c.l.b16 %v250
      %v307 = vunpack.c.l.b16 %v251
      %v308 = vpack.c.b16 %v293, %v292
      %v309 = vpack.c.b16 %v295, %v294
      %v310 = vpack.c.b16 %v297, %v296
      %v311 = vpack.c.b16 %v299, %v298
      %v312 = vpack.c.b16 %v301, %v300
      %v313 = vpack.c.b16 %v303, %v302
      %v314 = vpack.c.b16 %v305, %v304
      %v315 = vpack.c.b16 %v307, %v306
      %324 = vmatprep.subr.bf16.mxu0 0
      %325 = vmatpush1.bf16.msra.mxu0 %v308
      %326 = vmatprep.subr.bf16.mxu0 0
      %327 = vmatpush1.bf16.msra.mxu0 %v309
      %328 = vmatprep.subr.bf16.mxu0 0
      %329 = vmatpush1.bf16.msra.mxu0 %v310
      %330 = vmatprep.subr.bf16.mxu0 0
      %331 = vmatpush1.bf16.msra.mxu0 %v311
      %332 = vmatprep.subr.bf16.mxu0 0
      %333 = vmatpush1.bf16.msra.mxu0 %v312
      %334 = vmatprep.subr.bf16.mxu0 0
      %335 = vmatpush1.bf16.msra.mxu0 %v313
      %336 = vmatprep.subr.bf16.mxu0 0
      %337 = vmatpush1.bf16.msra.mxu0 %v314
      %338 = vmatprep.subr.bf16.mxu0 0
      %339 = vmatpush1.bf16.msra.mxu0 %v315
      %340 = vmatprep.subr.bf16.mxu0 0
      %341 = vmatpush1.bf16.msra.mxu0 0
      %342 = vmatprep.subr.bf16.mxu0 0
      %343 = vmatpush1.bf16.msra.mxu0 0
      %344 = vmatprep.subr.bf16.mxu0 0
      %345 = vmatpush1.bf16.msra.mxu0 0
      %346 = vmatprep.subr.bf16.mxu0 0
      %347 = vmatpush1.bf16.msra.mxu0 0
      %348 = vmatprep.subr.bf16.mxu0 0
      %349 = vmatpush1.bf16.msra.mxu0 0
      %350 = vmatprep.subr.bf16.mxu0 0
      %351 = vmatpush1.bf16.msra.mxu0 0
      %352 = vmatprep.subr.bf16.mxu0 0
      %353 = vmatpush1.bf16.msra.mxu0 0
      %354 = vmatprep.subr.bf16.mxu0 0
      %355 = vmatpush1.bf16.msra.mxu0 0
      %356 = vmatprep.mubr.bf16.mxu0 0
      %357 = vmatmul.mubr.bf16.gmra.mrb[0].mxu0 %v268
      %v358 = vpop.f32.mrb[0].mxu0
      %v359 = vadd.f32 0.0, %v358
      %v360 = vpop.f32.mrb[0].mxu0
      %v361 = vpop.f32.mrb[0].mxu0
      %v362 = vadd.f32 0.0, %v361
      %v363 = vpop.f32.mrb[0].mxu0
      %364 = vmatprep.mubr.bf16.mxu0 0
      %365 = vmatmul.mubr.bf16.gmra.mrb[0].mxu0 %v269
      %v366 = vpop.f32.mrb[0].mxu0
      %v367 = vadd.f32 0.0, %v366
      %v368 = vpop.f32.mrb[0].mxu0
      %v369 = vpop.f32.mrb[0].mxu0
      %v370 = vadd.f32 0.0, %v369
      %v371 = vpop.f32.mrb[0].mxu0
      %372 = vmatprep.mubr.bf16.mxu0 0
      %373 = vmatmul.mubr.bf16.gmra.mrb[0].mxu0 %v270
      %v374 = vpop.f32.mrb[0].mxu0
      %v375 = vadd.f32 0.0, %v374
      %v376 = vpop.f32.mrb[0].mxu0
      %v377 = vpop.f32.mrb[0].mxu0
      %v378 = vadd.f32 0.0, %v377
      %v379 = vpop.f32.mrb[0].mxu0
      %380 = vmatprep.mubr.bf16.mxu0 0
      %381 = vmatmul.mubr.bf16.gmra.mrb[0].mxu0 %v271
      %v382 = vpop.f32.mrb[0].mxu0
      %v383 = vadd.f32 0.0, %v382
      %v384 = vpop.f32.mrb[0].mxu0
      %v385 = vpop.f32.mrb[0].mxu0
      %v386 = vadd.f32 0.0, %v385
      %v387 = vpop.f32.mrb[0].mxu0
      %388 = vdwg.mxu0
      %v389 = vpack.c.bf16 %v362, %v359
      %v390 = vpack.c.bf16 %v370, %v367
      %v391 = vpack.c.bf16 %v378, %v375
      %v392 = vpack.c.bf16 %v386, %v383
      %v397 = vunpack.c.l.b16 %v389
      %v398 = vunpack.c.h.b16 %v389
      %v399 = vunpack.c.l.b16 %v390
      %v400 = vunpack.c.h.b16 %v390
      %v401 = vunpack.c.l.b16 %v391
      %v402 = vunpack.c.h.b16 %v391
      %v403 = vunpack.c.l.b16 %v392
      %v404 = vunpack.c.h.b16 %v392
      %v405 = vpack.c.b16 %v397, %v397
      %v406 = vpack.c.b16 %v398, %v398
      %v407 = vpack.c.b16 %v399, %v399
      %v408 = vpack.c.b16 %v400, %v400
      %v409 = vpack.c.b16 %v401, %v401
      %v410 = vpack.c.b16 %v402, %v402
      %v411 = vpack.c.b16 %v403, %v403
      %v412 = vpack.c.b16 %v404, %v404
      %421 = vst [vmem:[%s219] sm:$0xf] %v405
      %422 = vst [vmem:[%s219 + $0x4] sm:$0xf] %v406
      %423 = vst [vmem:[%s219 + $0x8] sm:$0xf] %v407
      %424 = vst [vmem:[%s219 + $0xc] sm:$0xf] %v408
      %425 = vst [vmem:[%s219 + $0x10] sm:$0xf] %v409
      %426 = vst [vmem:[%s219 + $0x14] sm:$0xf] %v410
      %427 = vst [vmem:[%s219 + $0x18] sm:$0xf] %v411
      %428 = vst [vmem:[%s219 + $0x1c] sm:$0xf] %v412
      %v429 = vunpack.c.l.bf16 %v389
      %v430 = vunpack.c.h.bf16 %v389
      %v431 = vunpack.c.l.bf16 %v390
      %v432 = vunpack.c.h.bf16 %v390
      %v433 = vunpack.c.l.bf16 %v391
      %v434 = vunpack.c.h.bf16 %v391
      %v435 = vunpack.c.l.bf16 %v392
      %v436 = vunpack.c.h.bf16 %v392
      %v437 = vadd.f32 %v429, %v430
      %v438 = vadd.f32 %v437, %v431
      %v439 = vadd.f32 %v438, %v432
      %v440 = vadd.f32 %v439, %v433
      %v441 = vadd.f32 %v440, %v434
      %v442 = vadd.f32 %v441, %v435
      %v443 = vadd.f32 %v442, %v436
      %v444 = vrot.slane %v443, 4
      %v445 = vadd.f32 %v443, %v444
      %v446 = vrot.slane %v445, 2
      %v447 = vadd.f32 %v445, %v446
      %v448 = vrot.slane %v447, 1
      %v449 = vadd.f32 %v447, %v448
      %v450 = vadd.f32 %v449, 0.0
      %v451 = vmul.f32 %v429, %v429
      %v452 = vmul.f32 %v430, %v430
      %v453 = vmul.f32 %v431, %v431
      %v454 = vmul.f32 %v432, %v432
      %v455 = vmul.f32 %v433, %v433
      %v456 = vmul.f32 %v434, %v434
      %v457 = vmul.f32 %v435, %v435
      %v458 = vmul.f32 %v436, %v436
      %v459 = vadd.f32 %v451, %v452
      %v460 = vadd.f32 %v459, %v453
      %v461 = vadd.f32 %v460, %v454
      %v462 = vadd.f32 %v461, %v455
      %v463 = vadd.f32 %v462, %v456
      %v464 = vadd.f32 %v463, %v457
      %v465 = vadd.f32 %v464, %v458
      %v466 = vrot.slane %v465, 4
      %v467 = vadd.f32 %v465, %v466
      %v468 = vrot.slane %v467, 2
      %v469 = vadd.f32 %v467, %v468
      %v470 = vrot.slane %v469, 1
      %v471 = vadd.f32 %v469, %v470
      %v472 = vadd.f32 %v471, 0.0
      %473 = vst [vmem:[%s226] sm:$0x1] %v450
      %474 = vst [vmem:[%s226 + $0x1] sm:$0x1] %v472
      %p475 = scmp.lt.s32.totalorder %s19, 1
      %s476 = scalar_select %p475, %s19, 1
      %p477 = scmp.lt.s32.totalorder %s20, 0
      %s478 = scalar_select %p477, %s20, 0
      %s479 = smul.addr %s476, 8
      %s480 = sadd.s32 %s478, %s479
      %s481 = smul.addr %s480, 4
      %s482 = scalar_lea.vmem %s2, %s481
      %p483 = scmp.lt.s32.totalorder %s19, 1
      %s484 = scalar_select %p483, %s19, 1
      %p485 = scmp.lt.s32.totalorder %s20, 0
      %s486 = scalar_select %p485, %s20, 0
      %s487 = sadd.s32 %s486, %s484
      %s488 = smul.addr %s487, 2
      %s489 = scalar_lea.vmem %s3, %s488
      // Predicated region
      $region29: #{a_call__.8} parent=27 // pred_check
        %p490 = pneg %p99
      $region30: #{a_call__.8} parent=27 // pred_check_branch
        %492 = sbr.rel (%p490) target = $region32
      $region31: #{a_call__.8} parent=27 // pred_region
        _
      $region32: #{a_call__.8} parent=27 // pred_fallthru
        _
      // Predicated region
      $region33: #{a_call__.8} parent=27 // pred_check
        %p493 = pneg %p127
      $region34: #{a_call__.8} parent=27 // pred_check_branch
        %495 = sbr.rel (%p493) target = $region36
      $region35: #{a_call__.8} parent=27 // pred_region
        _
      $region36: #{a_call__.8} parent=27 // pred_fallthru
        _
    $region28: #{a_call__.8} parent=5 // pred_fallthru
      _
    %p496 = scmp.le.s32.totalorder 2, %s10
    // Predicated region
    $region37: #{a_call__.8} parent=5 // pred_check
      %p497 = pneg %p496
    $region38: #{a_call__.8} parent=5 // pred_check_branch
      %499 = sbr.rel (%p497) target = $region40
    $region39: #{a_call__.8} parent=5 // pred_region
      %s500 = ssub.s32 %s10, 2
      // Predicated region
      $region41: #{a_call__.8} parent=39 // pred_check
        %p501 = pneg %p105
      $region42: #{a_call__.8} parent=39 // pred_check_branch
        %503 = sbr.rel (%p501) target = $region44
      $region43: #{a_call__.8} parent=39 // pred_region
        %p504 = scmp.lt.s32.totalorder %s21, 1
        %s505 = scalar_select %p504, %s21, 1
        %p506 = scmp.lt.s32.totalorder %s22, 0
        %s507 = scalar_select %p506, %s22, 0
        %s508 = smul.addr %s505, 8
        %s509 = sadd.s32 %s507, %s508
        %s510 = smul.addr %s509, 4
        %s511 = scalar_lea.vmem %s2, %s510
      $region44: #{a_call__.8} parent=39 // pred_fallthru
        _
      // Predicated region
      $region45: #{a_call__.8} parent=39 // pred_check
        %p512 = pneg %p133
      $region46: #{a_call__.8} parent=39 // pred_check_branch
        %514 = sbr.rel (%p512) target = $region48
      $region47: #{a_call__.8} parent=39 // pred_region
        %p515 = scmp.lt.s32.totalorder %s21, 1
        %s516 = scalar_select %p515, %s21, 1
        %p517 = scmp.lt.s32.totalorder %s22, 0
        %s518 = scalar_select %p517, %s22, 0
        %s519 = sadd.s32 %s518, %s516
        %s520 = smul.addr %s519, 2
        %s521 = scalar_lea.vmem %s3, %s520
      $region48: #{a_call__.8} parent=39 // pred_fallthru
        _
    $region40: #{a_call__.8} parent=5 // pred_fallthru
      _
  $region6: #{a_call__.8} parent=0 // loop_footer
    %s14 = sadd.s32 1, %s10
  $region7: #{a_call__.8} parent=0 // loop_footer_branch
    %9 = sbr.rel target = $region3
  $region8: #{a_call__.8} parent=0 // loop_exit
    _

// kernel: a_call__.5
$region0: #{a_call__.5}
  #allocation0 [shape = 'u32[]', space=smem, size = 0x4, offset = 0x4, fixed_abs, tag = 'smem constant byte address 0x4 - core index']
  #allocation1 [shape = 'u32[144,128]{1,0:T(1,128)}', space=vmem, size = 0x12000, scoped, tag = 'internal scratch']
  %s0 = inlined_call_operand.vmem [shape: bf16[2,82,128], index: 0, kind: input, shape index: {}]
  %s1 = inlined_call_operand.vmem [shape: bf16[2,82,128], index: 1, kind: input, shape index: {}]
  %s2 = inlined_call_operand.vmem [shape: bf16[2,82,128], index: 2, kind: input, shape index: {}]
  %s3 = inlined_call_operand.vmem [shape: bf16[2,82,128], index: 3, kind: input, shape index: {}]
  %s4 = inlined_call_operand.vmem [shape: bf16[9,128,128], index: 4, kind: input, shape index: {}]
  %s5 = inlined_call_operand.vmem [shape: f32[72,1], index: 5, kind: input, shape index: {}]
  %s6 = inlined_call_operand.vmem [shape: bf16[2,72,128], index: 6, kind: output, shape index: {0}]
  %s7 = inlined_call_operand.vmem [shape: f32[2,2,128], index: 7, kind: output, shape index: {1}]
  %8 = xla_tuple %s6, %s7
  %s9 = sld [smem:[#allocation0]]
  $region65: #{a_call__.5} parent=0
    _
  %s11 = ssub.s32 1, %s9
  %s12 = scalar_select 0, %s11, %s9
  loop: start=0, step=1, limit=4
  $region2: #{a_call__.5} parent=0 // loop_pre_header
    _
  $region3: #{a_call__.5} parent=0 // loop_header
    %s14 = sphi 0, %s18
    %p15 = scmp.ge.s32.totalorder %s14, 4
    %s21 = sphi 0, %s33
    %s22 = sphi 0, %s29
    %s23 = sphi 0, %s21
    %s24 = sphi 0, %s22
    %s25 = sphi 0, %s23
    %s26 = sphi 0, %s24
    %s36 = sphi 0, %s38
    %s39 = sphi 0, %s36
    %s40 = sphi 0, %s39
    %s56 = sphi 0, %s40
    %s62 = sphi 0, %s64
    %s65 = sphi 0, %s62
    %s66 = sphi 0, %s65
    %s82 = sphi 0, %s66
    %s88 = sphi 0, %s90
    %s91 = sphi 0, %s88
    %s92 = sphi 0, %s91
    %s108 = sphi 0, %s92
    %s114 = sphi 0, %s116
    %s117 = sphi 0, %s114
    %s118 = sphi 0, %s117
    %s134 = sphi 0, %s118
    %s140 = sphi 0, %s142
    %s143 = sphi 0, %s140
    %s144 = sphi 0, %s143
    %s160 = sphi 0, %s144
    %s164 = sphi 0, %s164
    %s166 = sphi 0, %s164
    %s167 = sphi 0, %s166
    %s181 = sphi 0, %s167
    %s189 = sphi 0, %s191
    %s192 = sphi 0, %s189
    %s193 = sphi 0, %s192
    %s209 = sphi 0, %s193
    %s217 = sphi 0, %s219
    %s220 = sphi 0, %s217
    %s221 = sphi 0, %s220
    %s237 = sphi 0, %s221
  $region4: #{a_call__.5} parent=0 // loop_header_branch
    %17 = sbr.rel (%p15) target = $region8
  $region5: #{a_call__.5} parent=0 // loop_body
    %s19 = ssub.s32 %s14, 1
    %s20 = ssub.s32 %s14, 2
    %s27 = sadd.s32 1, %s22
    %p28 = scmp.ge.s32.totalorder %s27, 1
    %s29 = scalar_select %p28, 0, %s27
    %s30 = sadd.s32 1, %s21
    %s31 = scalar_select %p28, %s30, %s21
    %p32 = scmp.ge.s32.totalorder %s31, 2
    %s33 = scalar_select %p32, 0, %s31
    %s34 = ssub.s32 %s21, %s33
    %p35 = scmp.eq.s32.totalorder %s34, 0
    %s37 = sadd.s32 %s36, 1
    %s38 = scalar_select %p35, %s36, %s37
    %p41 = pneg %p35
    %p42 = scmp.eq.s32.totalorder %s14, 1
    %p43 = por %p41, %p42
    %p44 = scmp.ne.s32.totalorder %s36, %s39
    %p45 = scmp.eq.s32.totalorder %s14, 0
    %p46 = por %p44, %p45
    %p47 = scmp.ne.s32.totalorder %s36, %s39
    %p48 = scmp.eq.s32.totalorder %s19, 1
    %p49 = por %p47, %p48
    %p50 = scmp.ne.s32.totalorder %s39, %s40
    %p51 = scmp.eq.s32.totalorder %s19, 0
    %p52 = por %p50, %p51
    %p53 = scmp.ne.s32.totalorder %s39, %s40
    %p54 = scmp.eq.s32.totalorder %s20, 1
    %p55 = por %p53, %p54
    %p57 = scmp.ne.s32.totalorder %s40, %s56
    %p58 = scmp.eq.s32.totalorder %s20, 0
    %p59 = por %p57, %p58
    %s60 = ssub.s32 %s21, %s33
    %p61 = scmp.eq.s32.totalorder %s60, 0
    %s63 = sadd.s32 %s62, 1
    %s64 = scalar_select %p61, %s62, %s63
    %p67 = pneg %p61
    %p68 = scmp.eq.s32.totalorder %s14, 1
    %p69 = por %p67, %p68
    %p70 = scmp.ne.s32.totalorder %s62, %s65
    %p71 = scmp.eq.s32.totalorder %s14, 0
    %p72 = por %p70, %p71
    %p73 = scmp.ne.s32.totalorder %s62, %s65
    %p74 = scmp.eq.s32.totalorder %s19, 1
    %p75 = por %p73, %p74
    %p76 = scmp.ne.s32.totalorder %s65, %s66
    %p77 = scmp.eq.s32.totalorder %s19, 0
    %p78 = por %p76, %p77
    %p79 = scmp.ne.s32.totalorder %s65, %s66
    %p80 = scmp.eq.s32.totalorder %s20, 1
    %p81 = por %p79, %p80
    %p83 = scmp.ne.s32.totalorder %s66, %s82
    %p84 = scmp.eq.s32.totalorder %s20, 0
    %p85 = por %p83, %p84
    %s86 = ssub.s32 %s21, %s33
    %p87 = scmp.eq.s32.totalorder %s86, 0
    %s89 = sadd.s32 %s88, 1
    %s90 = scalar_select %p87, %s88, %s89
    %p93 = pneg %p87
    %p94 = scmp.eq.s32.totalorder %s14, 1
    %p95 = por %p93, %p94
    %p96 = scmp.ne.s32.totalorder %s88, %s91
    %p97 = scmp.eq.s32.totalorder %s14, 0
    %p98 = por %p96, %p97
    %p99 = scmp.ne.s32.totalorder %s88, %s91
    %p100 = scmp.eq.s32.totalorder %s19, 1
    %p101 = por %p99, %p100
    %p102 = scmp.ne.s32.totalorder %s91, %s92
    %p103 = scmp.eq.s32.totalorder %s19, 0
    %p104 = por %p102, %p103
    %p105 = scmp.ne.s32.totalorder %s91, %s92
    %p106 = scmp.eq.s32.totalorder %s20, 1
    %p107 = por %p105, %p106
    %p109 = scmp.ne.s32.totalorder %s92, %s108
    %p110 = scmp.eq.s32.totalorder %s20, 0
    %p111 = por %p109, %p110
    %s112 = ssub.s32 %s21, %s33
    %p113 = scmp.eq.s32.totalorder %s112, 0
    %s115 = sadd.s32 %s114, 1
    %s116 = scalar_select %p113, %s114, %s115
    %p119 = pneg %p113
    %p120 = scmp.eq.s32.totalorder %s14, 1
    %p121 = por %p119, %p120
    %p122 = scmp.ne.s32.totalorder %s114, %s117
    %p123 = scmp.eq.s32.totalorder %s14, 0
    %p124 = por %p122, %p123
    %p125 = scmp.ne.s32.totalorder %s114, %s117
    %p126 = scmp.eq.s32.totalorder %s19, 1
    %p127 = por %p125, %p126
    %p128 = scmp.ne.s32.totalorder %s117, %s118
    %p129 = scmp.eq.s32.totalorder %s19, 0
    %p130 = por %p128, %p129
    %p131 = scmp.ne.s32.totalorder %s117, %s118
    %p132 = scmp.eq.s32.totalorder %s20, 1
    %p133 = por %p131, %p132
    %p135 = scmp.ne.s32.totalorder %s118, %s134
    %p136 = scmp.eq.s32.totalorder %s20, 0
    %p137 = por %p135, %p136
    %s138 = ssub.s32 %s22, %s29
    %p139 = scmp.eq.s32.totalorder %s138, 0
    %s141 = sadd.s32 %s140, 1
    %s142 = scalar_select %p139, %s140, %s141
    %p145 = pneg %p139
    %p146 = scmp.eq.s32.totalorder %s14, 1
    %p147 = por %p145, %p146
    %p148 = scmp.ne.s32.totalorder %s140, %s143
    %p149 = scmp.eq.s32.totalorder %s14, 0
    %p150 = por %p148, %p149
    %p151 = scmp.ne.s32.totalorder %s140, %s143
    %p152 = scmp.eq.s32.totalorder %s19, 1
    %p153 = por %p151, %p152
    %p154 = scmp.ne.s32.totalorder %s143, %s144
    %p155 = scmp.eq.s32.totalorder %s19, 0
    %p156 = por %p154, %p155
    %p157 = scmp.ne.s32.totalorder %s143, %s144
    %p158 = scmp.eq.s32.totalorder %s20, 1
    %p159 = por %p157, %p158
    %p161 = scmp.ne.s32.totalorder %s144, %s160
    %p162 = scmp.eq.s32.totalorder %s20, 0
    %p163 = por %p161, %p162
    %s165 = sadd.s32 %s164, 1
    %p168 = scmp.eq.s32.totalorder %s14, 1
    %p169 = scmp.ne.s32.totalorder %s164, %s166
    %p170 = scmp.eq.s32.totalorder %s14, 0
    %p171 = por %p169, %p170
    %p172 = scmp.ne.s32.totalorder %s164, %s166
    %p173 = scmp.eq.s32.totalorder %s19, 1
    %p174 = por %p172, %p173
    %p175 = scmp.ne.s32.totalorder %s166, %s167
    %p176 = scmp.eq.s32.totalorder %s19, 0
    %p177 = por %p175, %p176
    %p178 = scmp.ne.s32.totalorder %s166, %s167
    %p179 = scmp.eq.s32.totalorder %s20, 1
    %p180 = por %p178, %p179
    %p182 = scmp.ne.s32.totalorder %s167, %s181
    %p183 = scmp.eq.s32.totalorder %s20, 0
    %p184 = por %p182, %p183
    %s185 = ssub.s32 %s21, %s33
    %s186 = ssub.s32 %s22, %s29
    %s187 = sor.u32 %s185, %s186
    %p188 = scmp.eq.s32.totalorder %s187, 0
    %s190 = sadd.s32 %s189, 1
    %s191 = scalar_select %p188, %s189, %s190
    %p194 = pneg %p188
    %p195 = scmp.eq.s32.totalorder %s14, 1
    %p196 = por %p194, %p195
    %p197 = scmp.ne.s32.totalorder %s189, %s192
    %p198 = scmp.eq.s32.totalorder %s14, 0
    %p199 = por %p197, %p198
    %p200 = scmp.ne.s32.totalorder %s189, %s192
    %p201 = scmp.eq.s32.totalorder %s19, 1
    %p202 = por %p200, %p201
    %p203 = scmp.ne.s32.totalorder %s192, %s193
    %p204 = scmp.eq.s32.totalorder %s19, 0
    %p205 = por %p203, %p204
    %p206 = scmp.ne.s32.totalorder %s192, %s193
    %p207 = scmp.eq.s32.totalorder %s20, 1
    %p208 = por %p206, %p207
    %p210 = scmp.ne.s32.totalorder %s193, %s209
    %p211 = scmp.eq.s32.totalorder %s20, 0
    %p212 = por %p210, %p211
    %s213 = ssub.s32 %s21, %s33
    %s214 = ssub.s32 %s22, %s29
    %s215 = sor.u32 %s213, %s214
    %p216 = scmp.eq.s32.totalorder %s215, 0
    %s218 = sadd.s32 %s217, 1
    %s219 = scalar_select %p216, %s217, %s218
    %p222 = pneg %p216
    %p223 = scmp.eq.s32.totalorder %s14, 1
    %p224 = por %p222, %p223
    %p225 = scmp.ne.s32.totalorder %s217, %s220
    %p226 = scmp.eq.s32.totalorder %s14, 0
    %p227 = por %p225, %p226
    %p228 = scmp.ne.s32.totalorder %s217, %s220
    %p229 = scmp.eq.s32.totalorder %s19, 1
    %p230 = por %p228, %p229
    %p231 = scmp.ne.s32.totalorder %s220, %s221
    %p232 = scmp.eq.s32.totalorder %s19, 0
    %p233 = por %p231, %p232
    %p234 = scmp.ne.s32.totalorder %s220, %s221
    %p235 = scmp.eq.s32.totalorder %s20, 1
    %p236 = por %p234, %p235
    %p238 = scmp.ne.s32.totalorder %s221, %s237
    %p239 = scmp.eq.s32.totalorder %s20, 0
    %p240 = por %p238, %p239
    %p241 = scmp.le.s32.totalorder 1, %s14
    %p242 = scmp.lt.s32.totalorder %s14, 3
    %p243 = pnand %p241, %p242
    %p244 = pneg %p243
    // Predicated region
    $region9: #{a_call__.5} parent=5 // pred_check
      _
    $region10: #{a_call__.5} parent=5 // pred_check_branch
      %246 = sbr.rel (%p243) target = $region12
    $region11: #{a_call__.5} parent=5 // pred_region
      %s247 = ssub.s32 %s14, 1
      // Predicated region
      $region13: #{a_call__.5} parent=11 // pred_check
        %p248 = pneg %p156
      $region14: #{a_call__.5} parent=11 // pred_check_branch
        %250 = sbr.rel (%p248) target = $region16
      $region15: #{a_call__.5} parent=11 // pred_region
        %p251 = scmp.lt.s32.totalorder %s24, 0
        %s252 = scalar_select %p251, %s24, 0
        %s253 = smul.addr %s252, 4
        %s254 = scalar_lea.vmem %s4, %s253
      $region16: #{a_call__.5} parent=11 // pred_fallthru
        _
      // Predicated region
      $region17: #{a_call__.5} parent=11 // pred_check
        %p255 = pneg %p177
      $region18: #{a_call__.5} parent=11 // pred_check_branch
        %257 = sbr.rel (%p255) target = $region20
      $region19: #{a_call__.5} parent=11 // pred_region
        _
      $region20: #{a_call__.5} parent=11 // pred_fallthru
        _
    $region12: #{a_call__.5} parent=5 // pred_fallthru
      _
    %p258 = scmp.lt.s32.totalorder %s14, 2
    // Predicated region
    $region21: #{a_call__.5} parent=5 // pred_check
      %p259 = pneg %p258
    $region22: #{a_call__.5} parent=5 // pred_check_branch
      %261 = sbr.rel (%p259) target = $region24
    $region23: #{a_call__.5} parent=5 // pred_region
      // Predicated region
      $region25: #{a_call__.5} parent=23 // pred_check
        %p262 = pneg %p46
      $region26: #{a_call__.5} parent=23 // pred_check_branch
        %264 = sbr.rel (%p262) target = $region28
      $region27: #{a_call__.5} parent=23 // pred_region
        %p265 = scmp.lt.s32.totalorder %s21, 1
        %s266 = scalar_select %p265, %s21, 1
        %s267 = smul.addr %s266, 11
        %s268 = smul.addr %s267, 4
        %s269 = scalar_lea.vmem %s0, %s268
      $region28: #{a_call__.5} parent=23 // pred_fallthru
        _
      // Predicated region
      $region29: #{a_call__.5} parent=23 // pred_check
        %p270 = pneg %p72
      $region30: #{a_call__.5} parent=23 // pred_check_branch
        %272 = sbr.rel (%p270) target = $region32
      $region31: #{a_call__.5} parent=23 // pred_region
        %p273 = scmp.lt.s32.totalorder %s21, 1
        %s274 = scalar_select %p273, %s21, 1
        %s275 = smul.addr %s274, 11
        %s276 = smul.addr %s275, 4
        %s277 = scalar_lea.vmem %s1, %s276
      $region32: #{a_call__.5} parent=23 // pred_fallthru
        _
      // Predicated region
      $region33: #{a_call__.5} parent=23 // pred_check
        %p278 = pneg %p98
      $region34: #{a_call__.5} parent=23 // pred_check_branch
        %280 = sbr.rel (%p278) target = $region36
      $region35: #{a_call__.5} parent=23 // pred_region
        %p281 = scmp.lt.s32.totalorder %s21, 1
        %s282 = scalar_select %p281, %s21, 1
        %s283 = smul.addr %s282, 11
        %s284 = smul.addr %s283, 4
        %s285 = scalar_lea.vmem %s2, %s284
      $region36: #{a_call__.5} parent=23 // pred_fallthru
        _
      // Predicated region
      $region37: #{a_call__.5} parent=23 // pred_check
        %p286 = pneg %p124
      $region38: #{a_call__.5} parent=23 // pred_check_branch
        %288 = sbr.rel (%p286) target = $region40
      $region39: #{a_call__.5} parent=23 // pred_region
        %p289 = scmp.lt.s32.totalorder %s21, 1
        %s290 = scalar_select %p289, %s21, 1
        %s291 = smul.addr %s290, 11
        %s292 = smul.addr %s291, 4
        %s293 = scalar_lea.vmem %s3, %s292
      $region40: #{a_call__.5} parent=23 // pred_fallthru
        _
    $region24: #{a_call__.5} parent=5 // pred_fallthru
      _
    %p294 = scmp.le.s32.totalorder 1, %s14
    %p295 = scmp.lt.s32.totalorder %s14, 3
    %p296 = pnand %p294, %p295
    %p297 = pneg %p296
    // Predicated region
    $region41: #{a_call__.5} parent=5 // pred_check
      _
    $region42: #{a_call__.5} parent=5 // pred_check_branch
      %299 = sbr.rel (%p296) target = $region44
    $region43: #{a_call__.5} parent=5 // pred_region
      %s300 = ssub.s32 %s14, 1
      %p301 = scmp.lt.s32.totalorder %s23, 1
      %s302 = scalar_select %p301, %s23, 1
      %s303 = smul.addr %s302, 11
      %s304 = smul.addr %s303, 4
      %s305 = scalar_lea.vmem %s0, %s304
      %p306 = pneg %p52
      %p307 = pneg %p49
      %p308 = scmp.lt.s32.totalorder %s23, 1
      %s309 = scalar_select %p308, %s23, 1
      %s310 = smul.addr %s309, 11
      %s311 = smul.addr %s310, 4
      %s312 = scalar_lea.vmem %s1, %s311
      %p313 = pneg %p78
      %p314 = pneg %p75
      %p315 = scmp.lt.s32.totalorder %s23, 1
      %s316 = scalar_select %p315, %s23, 1
      %s317 = smul.addr %s316, 11
      %s318 = smul.addr %s317, 4
      %s319 = scalar_lea.vmem %s2, %s318
      %p320 = pneg %p104
      %p321 = pneg %p101
      %p322 = scmp.lt.s32.totalorder %s23, 1
      %s323 = scalar_select %p322, %s23, 1
      %s324 = smul.addr %s323, 11
      %s325 = smul.addr %s324, 4
      %s326 = scalar_lea.vmem %s3, %s325
      %p327 = pneg %p130
      %p328 = pneg %p127
      %p329 = scmp.lt.s32.totalorder %s24, 0
      %s330 = scalar_select %p329, %s24, 0
      %s331 = smul.addr %s330, 4
      %s332 = scalar_lea.vmem %s4, %s331
      %p333 = pneg %p156
      %p334 = pneg %p153
      %p335 = pneg %p177
      %p336 = pneg %p174
      %p337 = pneg %p205
      %p338 = pneg %p202
      %p339 = scmp.lt.s32.totalorder %s23, 1
      %s340 = scalar_select %p339, %s23, 1
      %p341 = scmp.lt.s32.totalorder %s24, 0
      %s342 = scalar_select %p341, %s24, 0
      %s343 = smul.addr %s340, 9
      %s344 = sadd.s32 %s342, %s343
      %s345 = smul.addr %s344, 4
      %s346 = scalar_lea.vmem %s6, %s345
      %p347 = pneg %p233
      %p348 = pneg %p230
      %p349 = scmp.lt.s32.totalorder %s23, 1
      %s350 = scalar_select %p349, %s23, 1
      %p351 = scmp.lt.s32.totalorder %s24, 0
      %s352 = scalar_select %p351, %s24, 0
      %s353 = sadd.s32 %s352, %s350
      %s354 = smul.addr %s353, 2
      %s355 = scalar_lea.vmem %s7, %s354
      %p356 = scmp.lt.s32.totalorder %s23, 1
      %s357 = scalar_select %p356, %s23, 1
      %s358 = smul.addr %s357, 11
      %s359 = smul.addr %s358, 4
      %s360 = scalar_lea.vmem %s0, %s359
      %p361 = scmp.lt.s32.totalorder %s23, 1
      %s362 = scalar_select %p361, %s23, 1
      %s363 = smul.addr %s362, 11
      %s364 = smul.addr %s363, 4
      %s365 = scalar_lea.vmem %s1, %s364
      %p366 = scmp.lt.s32.totalorder %s23, 1
      %s367 = scalar_select %p366, %s23, 1
      %s368 = smul.addr %s367, 11
      %s369 = smul.addr %s368, 4
      %s370 = scalar_lea.vmem %s2, %s369
      %p371 = scmp.lt.s32.totalorder %s23, 1
      %s372 = scalar_select %p371, %s23, 1
      %s373 = smul.addr %s372, 11
      %s374 = smul.addr %s373, 4
      %s375 = scalar_lea.vmem %s3, %s374
      %p376 = scmp.lt.s32.totalorder %s24, 0
      %s377 = scalar_select %p376, %s24, 0
      %s378 = smul.addr %s377, 4
      %s379 = scalar_lea.vmem %s4, %s378
      %p380 = scmp.lt.s32.totalorder %s23, 1
      %s381 = scalar_select %p380, %s23, 1
      %p382 = scmp.lt.s32.totalorder %s24, 0
      %s383 = scalar_select %p382, %s24, 0
      %s384 = smul.addr %s381, 9
      %s385 = sadd.s32 %s383, %s384
      %s386 = smul.addr %s385, 4
      %s387 = scalar_lea.vmem %s6, %s386
      %p388 = scmp.lt.s32.totalorder %s23, 1
      %s389 = scalar_select %p388, %s23, 1
      %p390 = scmp.lt.s32.totalorder %s24, 0
      %s391 = scalar_select %p390, %s24, 0
      %s392 = sadd.s32 %s391, %s389
      %s393 = smul.addr %s392, 2
      %s394 = scalar_lea.vmem %s7, %s393
      %v396 = vld [vmem:[%s360] sm:$0xf]
      %v397 = vld [vmem:[%s360 + $0x4] sm:$0xf]
      %v398 = vld [vmem:[%s360 + $0x8] sm:$0xf]
      %v399 = vld [vmem:[%s360 + $0xc] sm:$0xf]
      %v400 = vld [vmem:[%s360 + $0x10] sm:$0xf]
      %v401 = vld [vmem:[%s360 + $0x14] sm:$0xf]
      %v402 = vld [vmem:[%s360 + $0x18] sm:$0xf]
      %v403 = vld [vmem:[%s360 + $0x1c] sm:$0xf]
      %v404 = vld [vmem:[%s360 + $0x20] sm:$0xf]
      %v405 = vld [vmem:[%s379] sm:$0xf]
      %v406 = vld [vmem:[%s379 + $0x4] sm:$0xf]
      %v407 = vld [vmem:[%s379 + $0x8] sm:$0xf]
      %v408 = vld [vmem:[%s379 + $0xc] sm:$0xf]
      %v409 = vld [vmem:[%s379 + $0x10] sm:$0xf]
      %v410 = vld [vmem:[%s379 + $0x14] sm:$0xf]
      %v411 = vld [vmem:[%s379 + $0x18] sm:$0xf]
      %v412 = vld [vmem:[%s379 + $0x1c] sm:$0xf]
      %v413 = vld [vmem:[%s379 + $0x20] sm:$0xf]
      %v414 = vld [vmem:[%s379 + $0x24] sm:$0xf]
      %v415 = vld [vmem:[%s379 + $0x28] sm:$0xf]
      %v416 = vld [vmem:[%s379 + $0x2c] sm:$0xf]
      %v417 = vld [vmem:[%s379 + $0x30] sm:$0xf]
      %v418 = vld [vmem:[%s379 + $0x34] sm:$0xf]
      %v419 = vld [vmem:[%s379 + $0x38] sm:$0xf]
      %v420 = vld [vmem:[%s379 + $0x3c] sm:$0xf]
      %v421 = vld [vmem:[%s365] sm:$0xf]
      %v422 = vld [vmem:[%s365 + $0x4] sm:$0xf]
      %v423 = vld [vmem:[%s365 + $0x8] sm:$0xf]
      %v424 = vld [vmem:[%s365 + $0xc] sm:$0xf]
      %v425 = vld [vmem:[%s365 + $0x10] sm:$0xf]
      %v426 = vld [vmem:[%s365 + $0x14] sm:$0xf]
      %v427 = vld [vmem:[%s365 + $0x18] sm:$0xf]
      %v428 = vld [vmem:[%s365 + $0x1c] sm:$0xf]
      %v429 = vld [vmem:[%s365 + $0x20] sm:$0xf]
      %s430 = scalar_lea.vmem %s379, 64
      %v431 = vld [vmem:[%s430] sm:$0xf]
      %v432 = vld [vmem:[%s430 + $0x4] sm:$0xf]
      %v433 = vld [vmem:[%s430 + $0x8] sm:$0xf]
      %v434 = vld [vmem:[%s430 + $0xc] sm:$0xf]
      %v435 = vld [vmem:[%s430 + $0x10] sm:$0xf]
      %v436 = vld [vmem:[%s430 + $0x14] sm:$0xf]
      %v437 = vld [vmem:[%s430 + $0x18] sm:$0xf]
      %v438 = vld [vmem:[%s430 + $0x1c] sm:$0xf]
      %v439 = vld [vmem:[%s430 + $0x20] sm:$0xf]
      %v440 = vld [vmem:[%s430 + $0x24] sm:$0xf]
      %v441 = vld [vmem:[%s430 + $0x28] sm:$0xf]
      %v442 = vld [vmem:[%s430 + $0x2c] sm:$0xf]
      %v443 = vld [vmem:[%s430 + $0x30] sm:$0xf]
      %v444 = vld [vmem:[%s430 + $0x34] sm:$0xf]
      %v445 = vld [vmem:[%s430 + $0x38] sm:$0xf]
      %v446 = vld [vmem:[%s430 + $0x3c] sm:$0xf]
      %v456 = vunpack.c.l.b16 %v421
      %v457 = vunpack.c.l.b16 %v422
      %v458 = vunpack.c.l.b16 %v423
      %v459 = vunpack.c.l.b16 %v424
      %v460 = vunpack.c.l.b16 %v425
      %v461 = vunpack.c.l.b16 %v426
      %v462 = vunpack.c.l.b16 %v427
      %v463 = vunpack.c.l.b16 %v428
      %v464 = vunpack.c.l.b16 %v429
      %v465 = vpack.c.b16 %v457, %v456
      %v466 = vpack.c.b16 %v459, %v458
      %v467 = vpack.c.b16 %v461, %v460
      %v468 = vpack.c.b16 %v463, %v462
      %v469 = vpack.c.b16 %v464, %v464
      %v491 = vunpack.c.l.b16 %v431
      %v492 = vunpack.c.l.b16 %v432
      %v493 = vunpack.c.l.b16 %v433
      %v494 = vunpack.c.l.b16 %v434
      %v495 = vunpack.c.l.b16 %v435
      %v496 = vunpack.c.l.b16 %v436
      %v497 = vunpack.c.l.b16 %v437
      %v498 = vunpack.c.l.b16 %v438
      %v499 = vunpack.c.l.b16 %v439
      %v500 = vunpack.c.l.b16 %v440
      %v501 = vunpack.c.l.b16 %v441
      %v502 = vunpack.c.l.b16 %v442
      %v503 = vunpack.c.l.b16 %v443
      %v504 = vunpack.c.l.b16 %v444
      %v505 = vunpack.c.l.b16 %v445
      %v506 = vunpack.c.l.b16 %v446
      %v507 = vpack.c.b16 %v492, %v491
      %v508 = vpack.c.b16 %v494, %v493
      %v509 = vpack.c.b16 %v496, %v495
      %v510 = vpack.c.b16 %v498, %v497
      %v511 = vpack.c.b16 %v500, %v499
      %v512 = vpack.c.b16 %v502, %v501
      %v513 = vpack.c.b16 %v504, %v503
      %v514 = vpack.c.b16 %v506, %v505
      %523 = vmatprep.subr.bf16.mxu0 0
      %524 = vmatpush1.bf16.msra.mxu0 %v507
      %525 = vmatprep.subr.bf16.mxu0 0
      %526 = vmatpush1.bf16.msra.mxu0 %v508
      %527 = vmatprep.subr.bf16.mxu0 0
      %528 = vmatpush1.bf16.msra.mxu0 %v509
      %529 = vmatprep.subr.bf16.mxu0 0
      %530 = vmatpush1.bf16.msra.mxu0 %v510
      %531 = vmatprep.subr.bf16.mxu0 0
      %532 = vmatpush1.bf16.msra.mxu0 %v511
      %533 = vmatprep.subr.bf16.mxu0 0
      %534 = vmatpush1.bf16.msra.mxu0 %v512
      %535 = vmatprep.subr.bf16.mxu0 0
      %536 = vmatpush1.bf16.msra.mxu0 %v513
      %537 = vmatprep.subr.bf16.mxu0 0
      %538 = vmatpush1.bf16.msra.mxu0 %v514
      %539 = vmatprep.subr.bf16.mxu0 0
      %540 = vmatpush1.bf16.msra.mxu0 0
      %541 = vmatprep.subr.bf16.mxu0 0
      %542 = vmatpush1.bf16.msra.mxu0 0
      %543 = vmatprep.subr.bf16.mxu0 0
      %544 = vmatpush1.bf16.msra.mxu0 0
      %545 = vmatprep.subr.bf16.mxu0 0
      %546 = vmatpush1.bf16.msra.mxu0 0
      %547 = vmatprep.subr.bf16.mxu0 0
      %548 = vmatpush1.bf16.msra.mxu0 0
      %549 = vmatprep.subr.bf16.mxu0 0
      %550 = vmatpush1.bf16.msra.mxu0 0
      %551 = vmatprep.subr.bf16.mxu0 0
      %552 = vmatpush1.bf16.msra.mxu0 0
      %553 = vmatprep.subr.bf16.mxu0 0
      %554 = vmatpush1.bf16.msra.mxu0 0
      %555 = vmatprep.mubr.bf16.mxu0 0
      %556 = vmatmul.mubr.bf16.gmra.mrb[0].mxu0 %v465
      %v557 = vpop.f32.mrb[0].mxu0
      %v558 = vadd.f32 0.0, %v557
      %v559 = vpop.f32.mrb[0].mxu0
      %v560 = vpop.f32.mrb[0].mxu0
      %v561 = vadd.f32 0.0, %v560
      %v562 = vpop.f32.mrb[0].mxu0
      %563 = vmatprep.mubr.bf16.mxu0 0
      %564 = vmatmul.mubr.bf16.gmra.mrb[0].mxu0 %v466
      %v565 = vpop.f32.mrb[0].mxu0
      %v566 = vadd.f32 0.0, %v565
      %v567 = vpop.f32.mrb[0].mxu0
      %v568 = vpop.f32.mrb[0].mxu0
      %v569 = vadd.f32 0.0, %v568
      %v570 = vpop.f32.mrb[0].mxu0
      %571 = vmatprep.mubr.bf16.mxu0 0
      %572 = vmatmul.mubr.bf16.gmra.mrb[0].mxu0 %v467
      %v573 = vpop.f32.mrb[0].mxu0
      %v574 = vadd.f32 0.0, %v573
      %v575 = vpop.f32.mrb[0].mxu0
      %v576 = vpop.f32.mrb[0].mxu0
      %v577 = vadd.f32 0.0, %v576
      %v578 = vpop.f32.mrb[0].mxu0
      %579 = vmatprep.mubr.bf16.mxu0 0
      %580 = vmatmul.mubr.bf16.gmra.mrb[0].mxu0 %v468
      %v581 = vpop.f32.mrb[0].mxu0
      %v582 = vadd.f32 0.0, %v581
      %v583 = vpop.f32.mrb[0].mxu0
      %v584 = vpop.f32.mrb[0].mxu0
      %v585 = vadd.f32 0.0, %v584
      %v586 = vpop.f32.mrb[0].mxu0
      %587 = vmatprep.mubr.bf16.mxu0 0
      %588 = vmatmul.mubr.bf16.gmra.mrb[0].mxu0 %v469
      %v589 = vpop.f32.mrb[0].mxu0
      %v590 = vadd.f32 0.0, %v589
      %v591 = vpop.f32.mrb[0].mxu0
      %v592 = vpop.f32.mrb[0].mxu0
      %v593 = vpop.f32.mrb[0].mxu0
      %594 = vdwg.mxu0
      %v604 = vunpack.c.l.b16 %v396
      %v605 = vunpack.c.l.b16 %v397
      %v606 = vunpack.c.l.b16 %v398
      %v607 = vunpack.c.l.b16 %v399
      %v608 = vunpack.c.l.b16 %v400
      %v609 = vunpack.c.l.b16 %v401
      %v610 = vunpack.c.l.b16 %v402
      %v611 = vunpack.c.l.b16 %v403
      %v612 = vunpack.c.l.b16 %v404
      %v613 = vpack.c.b16 %v605, %v604
      %v614 = vpack.c.b16 %v607, %v606
      %v615 = vpack.c.b16 %v609, %v608
      %v616 = vpack.c.b16 %v611, %v610
      %v617 = vpack.c.b16 %v612, %v612
      %v639 = vunpack.c.l.b16 %v405
      %v640 = vunpack.c.l.b16 %v406
      %v641 = vunpack.c.l.b16 %v407
      %v642 = vunpack.c.l.b16 %v408
      %v643 = vunpack.c.l.b16 %v409
      %v644 = vunpack.c.l.b16 %v410
      %v645 = vunpack.c.l.b16 %v411
      %v646 = vunpack.c.l.b16 %v412
      %v647 = vunpack.c.l.b16 %v413
      %v648 = vunpack.c.l.b16 %v414
      %v649 = vunpack.c.l.b16 %v415
      %v650 = vunpack.c.l.b16 %v416
      %v651 = vunpack.c.l.b16 %v417
      %v652 = vunpack.c.l.b16 %v418
      %v653 = vunpack.c.l.b16 %v419
      %v654 = vunpack.c.l.b16 %v420
      %v655 = vpack.c.b16 %v640, %v639
      %v656 = vpack.c.b16 %v642, %v641
      %v657 = vpack.c.b16 %v644, %v643
      %v658 = vpack.c.b16 %v646, %v645
      %v659 = vpack.c.b16 %v648, %v647
      %v660 = vpack.c.b16 %v650, %v649
      %v661 = vpack.c.b16 %v652, %v651
      %v662 = vpack.c.b16 %v654, %v653
      %671 = vmatprep.subr.bf16.mxu0 0
      %672 = vmatpush1.bf16.msra.mxu0 %v655
      %673 = vmatprep.subr.bf16.mxu0 0
      %674 = vmatpush1.bf16.msra.mxu0 %v656
      %675 = vmatprep.subr.bf16.mxu0 0
      %676 = vmatpush1.bf16.msra.mxu0 %v657
      %677 = vmatprep.subr.bf16.mxu0 0
      %678 = vmatpush1.bf16.msra.mxu0 %v658
      %679 = vmatprep.subr.bf16.mxu0 0
      %680 = vmatpush1.bf16.msra.mxu0 %v659
      %681 = vmatprep.subr.bf16.mxu0 0
      %682 = vmatpush1.bf16.msra.mxu0 %v660
      %683 = vmatprep.subr.bf16.mxu0 0
      %684 = vmatpush1.bf16.msra.mxu0 %v661
      %685 = vmatprep.subr.bf16.mxu0 0
      %686 = vmatpush1.bf16.msra.mxu0 %v662
      %687 = vmatprep.subr.bf16.mxu0 0
      %688 = vmatpush1.bf16.msra.mxu0 0
      %689 = vmatprep.subr.bf16.mxu0 0
      %690 = vmatpush1.bf16.msra.mxu0 0
      %691 = vmatprep.subr.bf16.mxu0 0
      %692 = vmatpush1.bf16.msra.mxu0 0
      %693 = vmatprep.subr.bf16.mxu0 0
      %694 = vmatpush1.bf16.msra.mxu0 0
      %695 = vmatprep.subr.bf16.mxu0 0
      %696 = vmatpush1.bf16.msra.mxu0 0
      %697 = vmatprep.subr.bf16.mxu0 0
      %698 = vmatpush1.bf16.msra.mxu0 0
      %699 = vmatprep.subr.bf16.mxu0 0
      %700 = vmatpush1.bf16.msra.mxu0 0
      %701 = vmatprep.subr.bf16.mxu0 0
      %702 = vmatpush1.bf16.msra.mxu0 0
      %703 = vmatprep.mubr.bf16.mxu0 0
      %704 = vmatmul.mubr.bf16.gmra.mrb[0].mxu0 %v613
      %v705 = vpop.f32.mrb[0].mxu0
      %v706 = vadd.f32 %v558, %v705
      %v707 = vpop.f32.mrb[0].mxu0
      %v708 = vpop.f32.mrb[0].mxu0
      %v709 = vadd.f32 %v561, %v708
      %v710 = vpop.f32.mrb[0].mxu0
      %711 = vmatprep.mubr.bf16.mxu0 0
      %712 = vmatmul.mubr.bf16.gmra.mrb[0].mxu0 %v614
      %v713 = vpop.f32.mrb[0].mxu0
      %v714 = vadd.f32 %v566, %v713
      %v715 = vpop.f32.mrb[0].mxu0
      %v716 = vpop.f32.mrb[0].mxu0
      %v717 = vadd.f32 %v569, %v716
      %v718 = vpop.f32.mrb[0].mxu0
      %719 = vmatprep.mubr.bf16.mxu0 0
      %720 = vmatmul.mubr.bf16.gmra.mrb[0].mxu0 %v615
      %v721 = vpop.f32.mrb[0].mxu0
      %v722 = vadd.f32 %v574, %v721
      %v723 = vpop.f32.mrb[0].mxu0
      %v724 = vpop.f32.mrb[0].mxu0
      %v725 = vadd.f32 %v577, %v724
      %v726 = vpop.f32.mrb[0].mxu0
      %727 = vmatprep.mubr.bf16.mxu0 0
      %728 = vmatmul.mubr.bf16.gmra.mrb[0].mxu0 %v616
      %v729 = vpop.f32.mrb[0].mxu0
      %v730 = vadd.f32 %v582, %v729
      %v731 = vpop.f32.mrb[0].mxu0
      %v732 = vpop.f32.mrb[0].mxu0
      %v733 = vadd.f32 %v585, %v732
      %v734 = vpop.f32.mrb[0].mxu0
      %735 = vmatprep.mubr.bf16.mxu0 0
      %736 = vmatmul.mubr.bf16.gmra.mrb[0].mxu0 %v617
      %v737 = vpop.f32.mrb[0].mxu0
      %v738 = vadd.f32 %v590, %v737
      %v739 = vpop.f32.mrb[0].mxu0
      %v740 = vpop.f32.mrb[0].mxu0
      %v741 = vpop.f32.mrb[0].mxu0
      %742 = vdwg.mxu0
      %v743 = vld [vmem:[%s360] sm:$0xf]
      %v744 = vld [vmem:[%s360 + $0x4] sm:$0xf]
      %v745 = vld [vmem:[%s360 + $0x8] sm:$0xf]
      %v746 = vld [vmem:[%s360 + $0xc] sm:$0xf]
      %v747 = vld [vmem:[%s360 + $0x10] sm:$0xf]
      %v748 = vld [vmem:[%s360 + $0x14] sm:$0xf]
      %v749 = vld [vmem:[%s360 + $0x18] sm:$0xf]
      %v750 = vld [vmem:[%s360 + $0x1c] sm:$0xf]
      %v751 = vld [vmem:[%s360 + $0x20] sm:$0xf]
      %v752 = vld [vmem:[%s360 + $0x24] sm:$0x1]
      %s753 = scalar_lea.vmem %s379, 128
      %v754 = vld [vmem:[%s753] sm:$0xf]
      %v755 = vld [vmem:[%s753 + $0x4] sm:$0xf]
      %v756 = vld [vmem:[%s753 + $0x8] sm:$0xf]
      %v757 = vld [vmem:[%s753 + $0xc] sm:$0xf]
      %v758 = vld [vmem:[%s753 + $0x10] sm:$0xf]
      %v759 = vld [vmem:[%s753 + $0x14] sm:$0xf]
      %v760 = vld [vmem:[%s753 + $0x18] sm:$0xf]
      %v761 = vld [vmem:[%s753 + $0x1c] sm:$0xf]
      %v762 = vld [vmem:[%s753 + $0x20] sm:$0xf]
      %v763 = vld [vmem:[%s753 + $0x24] sm:$0xf]
      %v764 = vld [vmem:[%s753 + $0x28] sm:$0xf]
      %v765 = vld [vmem:[%s753 + $0x2c] sm:$0xf]
      %v766 = vld [vmem:[%s753 + $0x30] sm:$0xf]
      %v767 = vld [vmem:[%s753 + $0x34] sm:$0xf]
      %v768 = vld [vmem:[%s753 + $0x38] sm:$0xf]
      %v769 = vld [vmem:[%s753 + $0x3c] sm:$0xf]
      %v780 = vunpack.c.l.b16 %v743
      %v781 = vunpack.c.l.b16 %v744
      %v782 = vunpack.c.l.b16 %v745
      %v783 = vunpack.c.l.b16 %v746
      %v784 = vunpack.c.l.b16 %v747
      %v785 = vunpack.c.l.b16 %v748
      %v786 = vunpack.c.l.b16 %v749
      %v787 = vunpack.c.l.b16 %v750
      %v788 = vunpack.c.l.b16 %v751
      %v789 = vunpack.c.l.b16 %v752
      %v790 = vpack.c.b16 %v781, %v780
      %v791 = vpack.c.b16 %v783, %v782
      %v792 = vpack.c.b16 %v785, %v784
      %v793 = vpack.c.b16 %v787, %v786
      %v794 = vpack.c.b16 %v789, %v788
      %vm795 = vsmask.f32 7424
      %v797 = vshrl.u32 %v790, 16
      %v799 = vshll.u32 %v790, 16
      %v801 = vrot.slane %v799, 1
      %v802 = vor.u32 %v797, %v801
      %v804 = vshll.u32 %v791, 16
      %v806 = vrot.slane %v804, 1
      %v807 = vsel %vm795, %v802, %v806
      %v808 = vshrl.u32 %v791, 16
      %v810 = vor.u32 %v808, %v806
      %v812 = vshll.u32 %v792, 16
      %v814 = vrot.slane %v812, 1
      %v815 = vsel %vm795, %v810, %v814
      %v816 = vshrl.u32 %v792, 16
      %v818 = vor.u32 %v816, %v814
      %v820 = vshll.u32 %v793, 16
      %v822 = vrot.slane %v820, 1
      %v823 = vsel %vm795, %v818, %v822
      %v824 = vshrl.u32 %v793, 16
      %v826 = vor.u32 %v824, %v822
      %v828 = vshll.u32 %v794, 16
      %v830 = vrot.slane %v828, 1
      %v831 = vsel %vm795, %v826, %v830
      %v832 = vshrl.u32 %v794, 16
      %v834 = vor.u32 %v832, %v830
      %v856 = vunpack.c.l.b16 %v754
      %v857 = vunpack.c.l.b16 %v755
      %v858 = vunpack.c.l.b16 %v756
      %v859 = vunpack.c.l.b16 %v757
      %v860 = vunpack.c.l.b16 %v758
      %v861 = vunpack.c.l.b16 %v759
      %v862 = vunpack.c.l.b16 %v760
      %v863 = vunpack.c.l.b16 %v761
      %v864 = vunpack.c.l.b16 %v762
      %v865 = vunpack.c.l.b16 %v763
      %v866 = vunpack.c.l.b16 %v764
      %v867 = vunpack.c.l.b16 %v765
      %v868 = vunpack.c.l.b16 %v766
      %v869 = vunpack.c.l.b16 %v767
      %v870 = vunpack.c.l.b16 %v768
      %v871 = vunpack.c.l.b16 %v769
      %v872 = vpack.c.b16 %v857, %v856
      %v873 = vpack.c.b16 %v859, %v858
      %v874 = vpack.c.b16 %v861, %v860
      %v875 = vpack.c.b16 %v863, %v862
      %v876 = vpack.c.b16 %v865, %v864
      %v877 = vpack.c.b16 %v867, %v866
      %v878 = vpack.c.b16 %v869, %v868
      %v879 = vpack.c.b16 %v871, %v870
      %888 = vmatprep.subr.bf16.mxu0 0
      %889 = vmatpush1.bf16.msra.mxu0 %v872
      %890 = vmatprep.subr.bf16.mxu0 0
      %891 = vmatpush1.bf16.msra.mxu0 %v873
      %892 = vmatprep.subr.bf16.mxu0 0
      %893 = vmatpush1.bf16.msra.mxu0 %v874
      %894 = vmatprep.subr.bf16.mxu0 0
      %895 = vmatpush1.bf16.msra.mxu0 %v875
      %896 = vmatprep.subr.bf16.mxu0 0
      %897 = vmatpush1.bf16.msra.mxu0 %v876
      %898 = vmatprep.subr.bf16.mxu0 0
      %899 = vmatpush1.bf16.msra.mxu0 %v877
      %900 = vmatprep.subr.bf16.mxu0 0
      %901 = vmatpush1.bf16.msra.mxu0 %v878
      %902 = vmatprep.subr.bf16.mxu0 0
      %903 = vmatpush1.bf16.msra.mxu0 %v879
      %904 = vmatprep.subr.bf16.mxu0 0
      %905 = vmatpush1.bf16.msra.mxu0 0
      %906 = vmatprep.subr.bf16.mxu0 0
      %907 = vmatpush1.bf16.msra.mxu0 0
      %908 = vmatprep.subr.bf16.mxu0 0
      %909 = vmatpush1.bf16.msra.mxu0 0
      %910 = vmatprep.subr.bf16.mxu0 0
      %911 = vmatpush1.bf16.msra.mxu0 0
      %912 = vmatprep.subr.bf16.mxu0 0
      %913 = vmatpush1.bf16.msra.mxu0 0
      %914 = vmatprep.subr.bf16.mxu0 0
      %915 = vmatpush1.bf16.msra.mxu0 0
      %916 = vmatprep.subr.bf16.mxu0 0
      %917 = vmatpush1.bf16.msra.mxu0 0
      %918 = vmatprep.subr.bf16.mxu0 0
      %919 = vmatpush1.bf16.msra.mxu0 0
      %920 = vmatprep.mubr.bf16.mxu0 0
      %921 = vmatmul.mubr.bf16.gmra.mrb[0].mxu0 %v807
      %v922 = vpop.f32.mrb[0].mxu0
      %v923 = vadd.f32 0.0, %v922
      %v924 = vpop.f32.mrb[0].mxu0
      %v925 = vpop.f32.mrb[0].mxu0
      %v926 = vadd.f32 0.0, %v925
      %v927 = vpop.f32.mrb[0].mxu0
      %928 = vmatprep.mubr.bf16.mxu0 0
      %929 = vmatmul.mubr.bf16.gmra.mrb[0].mxu0 %v815
      %v930 = vpop.f32.mrb[0].mxu0
      %v931 = vadd.f32 0.0, %v930
      %v932 = vpop.f32.mrb[0].mxu0
      %v933 = vpop.f32.mrb[0].mxu0
      %v934 = vadd.f32 0.0, %v933
      %v935 = vpop.f32.mrb[0].mxu0
      %936 = vmatprep.mubr.bf16.mxu0 0
      %937 = vmatmul.mubr.bf16.gmra.mrb[0].mxu0 %v823
      %v938 = vpop.f32.mrb[0].mxu0
      %v939 = vadd.f32 0.0, %v938
      %v940 = vpop.f32.mrb[0].mxu0
      %v941 = vpop.f32.mrb[0].mxu0
      %v942 = vadd.f32 0.0, %v941
      %v943 = vpop.f32.mrb[0].mxu0
      %944 = vmatprep.mubr.bf16.mxu0 0
      %945 = vmatmul.mubr.bf16.gmra.mrb[0].mxu0 %v831
      %v946 = vpop.f32.mrb[0].mxu0
      %v947 = vadd.f32 0.0, %v946
      %v948 = vpop.f32.mrb[0].mxu0
      %v949 = vpop.f32.mrb[0].mxu0
      %v950 = vadd.f32 0.0, %v949
      %v951 = vpop.f32.mrb[0].mxu0
      %952 = vmatprep.mubr.bf16.mxu0 0
      %953 = vmatmul.mubr.bf16.gmra.mrb[0].mxu0 %v834
      %v954 = vpop.f32.mrb[0].mxu0
      %v955 = vadd.f32 0.0, %v954
      %v956 = vpop.f32.mrb[0].mxu0
      %v957 = vpop.f32.mrb[0].mxu0
      %v958 = vpop.f32.mrb[0].mxu0
      %959 = vdwg.mxu0
      %v960 = vadd.f32 %v706, %v923
      %v961 = vadd.f32 %v709, %v926
      %v962 = vadd.f32 %v714, %v931
      %v963 = vadd.f32 %v717, %v934
      %v964 = vadd.f32 %v722, %v939
      %v965 = vadd.f32 %v725, %v942
      %v966 = vadd.f32 %v730, %v947
      %v967 = vadd.f32 %v733, %v950
      %v968 = vadd.f32 %v738, %v955
      %v969 = vld [vmem:[%s370] sm:$0xf]
      %v970 = vld [vmem:[%s370 + $0x4] sm:$0xf]
      %v971 = vld [vmem:[%s370 + $0x8] sm:$0xf]
      %v972 = vld [vmem:[%s370 + $0xc] sm:$0xf]
      %v973 = vld [vmem:[%s370 + $0x10] sm:$0xf]
      %v974 = vld [vmem:[%s370 + $0x14] sm:$0xf]
      %v975 = vld [vmem:[%s370 + $0x18] sm:$0xf]
      %v976 = vld [vmem:[%s370 + $0x1c] sm:$0xf]
      %v977 = vld [vmem:[%s370 + $0x20] sm:$0xf]
      %s978 = scalar_lea.vmem %s379, 192
      %v979 = vld [vmem:[%s978] sm:$0xf]
      %v980 = vld [vmem:[%s978 + $0x4] sm:$0xf]
      %v981 = vld [vmem:[%s978 + $0x8] sm:$0xf]
      %v982 = vld [vmem:[%s978 + $0xc] sm:$0xf]
      %v983 = vld [vmem:[%s978 + $0x10] sm:$0xf]
      %v984 = vld [vmem:[%s978 + $0x14] sm:$0xf]
      %v985 = vld [vmem:[%s978 + $0x18] sm:$0xf]
      %v986 = vld [vmem:[%s978 + $0x1c] sm:$0xf]
      %v987 = vld [vmem:[%s978 + $0x20] sm:$0xf]
      %v988 = vld [vmem:[%s978 + $0x24] sm:$0xf]
      %v989 = vld [vmem:[%s978 + $0x28] sm:$0xf]
      %v990 = vld [vmem:[%s978 + $0x2c] sm:$0xf]
      %v991 = vld [vmem:[%s978 + $0x30] sm:$0xf]
      %v992 = vld [vmem:[%s978 + $0x34] sm:$0xf]
      %v993 = vld [vmem:[%s978 + $0x38] sm:$0xf]
      %v994 = vld [vmem:[%s978 + $0x3c] sm:$0xf]
      %v1004 = vunpack.c.l.b16 %v969
      %v1005 = vunpack.c.l.b16 %v970
      %v1006 = vunpack.c.l.b16 %v971
      %v1007 = vunpack.c.l.b16 %v972
      %v1008 = vunpack.c.l.b16 %v973
      %v1009 = vunpack.c.l.b16 %v974
      %v1010 = vunpack.c.l.b16 %v975
      %v1011 = vunpack.c.l.b16 %v976
      %v1012 = vunpack.c.l.b16 %v977
      %v1013 = vpack.c.b16 %v1005, %v1004
      %v1014 = vpack.c.b16 %v1007, %v1006
      %v1015 = vpack.c.b16 %v1009, %v1008
      %v1016 = vpack.c.b16 %v1011, %v1010
      %v1017 = vpack.c.b16 %v1012, %v1012
      %v1039 = vunpack.c.l.b16 %v979
      %v1040 = vunpack.c.l.b16 %v980
      %v1041 = vunpack.c.l.b16 %v981
      %v1042 = vunpack.c.l.b16 %v982
      %v1043 = vunpack.c.l.b16 %v983
      %v1044 = vunpack.c.l.b16 %v984
      %v1045 = vunpack.c.l.b16 %v985
      %v1046 = vunpack.c.l.b16 %v986
      %v1047 = vunpack.c.l.b16 %v987
      %v1048 = vunpack.c.l.b16 %v988
      %v1049 = vunpack.c.l.b16 %v989
      %v1050 = vunpack.c.l.b16 %v990
      %v1051 = vunpack.c.l.b16 %v991
      %v1052 = vunpack.c.l.b16 %v992
      %v1053 = vunpack.c.l.b16 %v993
      %v1054 = vunpack.c.l.b16 %v994
      %v1055 = vpack.c.b16 %v1040, %v1039
      %v1056 = vpack.c.b16 %v1042, %v1041
      %v1057 = vpack.c.b16 %v1044, %v1043
      %v1058 = vpack.c.b16 %v1046, %v1045
      %v1059 = vpack.c.b16 %v1048, %v1047
      %v1060 = vpack.c.b16 %v1050, %v1049
      %v1061 = vpack.c.b16 %v1052, %v1051
      %v1062 = vpack.c.b16 %v1054, %v1053
      %1071 = vmatprep.subr.bf16.mxu0 0
      %1072 = vmatpush1.bf16.msra.mxu0 %v1055
      %1073 = vmatprep.subr.bf16.mxu0 0
      %1074 = vmatpush1.bf16.msra.mxu0 %v1056
      %1075 = vmatprep.subr.bf16.mxu0 0
      %1076 = vmatpush1.bf16.msra.mxu0 %v1057
      %1077 = vmatprep.subr.bf16.mxu0 0
      %1078 = vmatpush1.bf16.msra.mxu0 %v1058
      %1079 = vmatprep.subr.bf16.mxu0 0
      %1080 = vmatpush1.bf16.msra.mxu0 %v1059
      %1081 = vmatprep.subr.bf16.mxu0 0
      %1082 = vmatpush1.bf16.msra.mxu0 %v1060
      %1083 = vmatprep.subr.bf16.mxu0 0
      %1084 = vmatpush1.bf16.msra.mxu0 %v1061
      %1085 = vmatprep.subr.bf16.mxu0 0
      %1086 = vmatpush1.bf16.msra.mxu0 %v1062
      %1087 = vmatprep.subr.bf16.mxu0 0
      %1088 = vmatpush1.bf16.msra.mxu0 0
      %1089 = vmatprep.subr.bf16.mxu0 0
      %1090 = vmatpush1.bf16.msra.mxu0 0
      %1091 = vmatprep.subr.bf16.mxu0 0
      %1092 = vmatpush1.bf16.msra.mxu0 0
      %1093 = vmatprep.subr.bf16.mxu0 0
      %1094 = vmatpush1.bf16.msra.mxu0 0
      %1095 = vmatprep.subr.bf16.mxu0 0
      %1096 = vmatpush1.bf16.msra.mxu0 0
      %1097 = vmatprep.subr.bf16.mxu0 0
      %1098 = vmatpush1.bf16.msra.mxu0 0
      %1099 = vmatprep.subr.bf16.mxu0 0
      %1100 = vmatpush1.bf16.msra.mxu0 0
      %1101 = vmatprep.subr.bf16.mxu0 0
      %1102 = vmatpush1.bf16.msra.mxu0 0
      %1103 = vmatprep.mubr.bf16.mxu0 0
      %1104 = vmatmul.mubr.bf16.gmra.mrb[0].mxu0 %v1013
      %v1105 = vpop.f32.mrb[0].mxu0
      %v1106 = vadd.f32 0.0, %v1105
      %v1107 = vpop.f32.mrb[0].mxu0
      %v1108 = vpop.f32.mrb[0].mxu0
      %v1109 = vadd.f32 0.0, %v1108
      %v1110 = vpop.f32.mrb[0].mxu0
      %1111 = vmatprep.mubr.bf16.mxu0 0
      %1112 = vmatmul.mubr.bf16.gmra.mrb[0].mxu0 %v1014
      %v1113 = vpop.f32.mrb[0].mxu0
      %v1114 = vadd.f32 0.0, %v1113
      %v1115 = vpop.f32.mrb[0].mxu0
      %v1116 = vpop.f32.mrb[0].mxu0
      %v1117 = vadd.f32 0.0, %v1116
      %v1118 = vpop.f32.mrb[0].mxu0
      %1119 = vmatprep.mubr.bf16.mxu0 0
      %1120 = vmatmul.mubr.bf16.gmra.mrb[0].mxu0 %v1015
      %v1121 = vpop.f32.mrb[0].mxu0
      %v1122 = vadd.f32 0.0, %v1121
      %v1123 = vpop.f32.mrb[0].mxu0
      %v1124 = vpop.f32.mrb[0].mxu0
      %v1125 = vadd.f32 0.0, %v1124
      %v1126 = vpop.f32.mrb[0].mxu0
      %1127 = vmatprep.mubr.bf16.mxu0 0
      %1128 = vmatmul.mubr.bf16.gmra.mrb[0].mxu0 %v1016
      %v1129 = vpop.f32.mrb[0].mxu0
      %v1130 = vadd.f32 0.0, %v1129
      %v1131 = vpop.f32.mrb[0].mxu0
      %v1132 = vpop.f32.mrb[0].mxu0
      %v1133 = vadd.f32 0.0, %v1132
      %v1134 = vpop.f32.mrb[0].mxu0
      %1135 = vmatprep.mubr.bf16.mxu0 0
      %1136 = vmatmul.mubr.bf16.gmra.mrb[0].mxu0 %v1017
      %v1137 = vpop.f32.mrb[0].mxu0
      %v1138 = vadd.f32 0.0, %v1137
      %v1139 = vpop.f32.mrb[0].mxu0
      %v1140 = vpop.f32.mrb[0].mxu0
      %v1141 = vpop.f32.mrb[0].mxu0
      %1142 = vdwg.mxu0
      %v1143 = vadd.f32 %v960, %v1106
      %v1144 = vadd.f32 %v961, %v1109
      %v1145 = vadd.f32 %v962, %v1114
      %v1146 = vadd.f32 %v963, %v1117
      %v1147 = vadd.f32 %v964, %v1122
      %v1148 = vadd.f32 %v965, %v1125
      %v1149 = vadd.f32 %v966, %v1130
      %v1150 = vadd.f32 %v967, %v1133
      %v1151 = vadd.f32 %v968, %v1138
      %v1152 = vld [vmem:[%s375] sm:$0xf]
      %v1153 = vld [vmem:[%s375 + $0x4] sm:$0xf]
      %v1154 = vld [vmem:[%s375 + $0x8] sm:$0xf]
      %v1155 = vld [vmem:[%s375 + $0xc] sm:$0xf]
      %v1156 = vld [vmem:[%s375 + $0x10] sm:$0xf]
      %v1157 = vld [vmem:[%s375 + $0x14] sm:$0xf]
      %v1158 = vld [vmem:[%s375 + $0x18] sm:$0xf]
      %v1159 = vld [vmem:[%s375 + $0x1c] sm:$0xf]
      %v1160 = vld [vmem:[%s375 + $0x20] sm:$0xf]
      %s1161 = scalar_lea.vmem %s379, 256
      %v1162 = vld [vmem:[%s1161] sm:$0xf]
      %v1163 = vld [vmem:[%s1161 + $0x4] sm:$0xf]
      %v1164 = vld [vmem:[%s1161 + $0x8] sm:$0xf]
      %v1165 = vld [vmem:[%s1161 + $0xc] sm:$0xf]
      %v1166 = vld [vmem:[%s1161 + $0x10] sm:$0xf]
      %v1167 = vld [vmem:[%s1161 + $0x14] sm:$0xf]
      %v1168 = vld [vmem:[%s1161 + $0x18] sm:$0xf]
      %v1169 = vld [vmem:[%s1161 + $0x1c] sm:$0xf]
      %v1170 = vld [vmem:[%s1161 + $0x20] sm:$0xf]
      %v1171 = vld [vmem:[%s1161 + $0x24] sm:$0xf]
      %v1172 = vld [vmem:[%s1161 + $0x28] sm:$0xf]
      %v1173 = vld [vmem:[%s1161 + $0x2c] sm:$0xf]
      %v1174 = vld [vmem:[%s1161 + $0x30] sm:$0xf]
      %v1175 = vld [vmem:[%s1161 + $0x34] sm:$0xf]
      %v1176 = vld [vmem:[%s1161 + $0x38] sm:$0xf]
      %v1177 = vld [vmem:[%s1161 + $0x3c] sm:$0xf]
      %v1187 = vunpack.c.l.b16 %v1152
      %v1188 = vunpack.c.l.b16 %v1153
      %v1189 = vunpack.c.l.b16 %v1154
      %v1190 = vunpack.c.l.b16 %v1155
      %v1191 = vunpack.c.l.b16 %v1156
      %v1192 = vunpack.c.l.b16 %v1157
      %v1193 = vunpack.c.l.b16 %v1158
      %v1194 = vunpack.c.l.b16 %v1159
      %v1195 = vunpack.c.l.b16 %v1160
      %v1196 = vpack.c.b16 %v1188, %v1187
      %v1197 = vpack.c.b16 %v1190, %v1189
      %v1198 = vpack.c.b16 %v1192, %v1191
      %v1199 = vpack.c.b16 %v1194, %v1193
      %v1200 = vpack.c.b16 %v1195, %v1195
      %v1222 = vunpack.c.l.b16 %v1162
      %v1223 = vunpack.c.l.b16 %v1163
      %v1224 = vunpack.c.l.b16 %v1164
      %v1225 = vunpack.c.l.b16 %v1165
      %v1226 = vunpack.c.l.b16 %v1166
      %v1227 = vunpack.c.l.b16 %v1167
      %v1228 = vunpack.c.l.b16 %v1168
      %v1229 = vunpack.c.l.b16 %v1169
      %v1230 = vunpack.c.l.b16 %v1170
      %v1231 = vunpack.c.l.b16 %v1171
      %v1232 = vunpack.c.l.b16 %v1172
      %v1233 = vunpack.c.l.b16 %v1173
      %v1234 = vunpack.c.l.b16 %v1174
      %v1235 = vunpack.c.l.b16 %v1175
      %v1236 = vunpack.c.l.b16 %v1176
      %v1237 = vunpack.c.l.b16 %v1177
      %v1238 = vpack.c.b16 %v1223, %v1222
      %v1239 = vpack.c.b16 %v1225, %v1224
      %v1240 = vpack.c.b16 %v1227, %v1226
      %v1241 = vpack.c.b16 %v1229, %v1228
      %v1242 = vpack.c.b16 %v1231, %v1230
      %v1243 = vpack.c.b16 %v1233, %v1232
      %v1244 = vpack.c.b16 %v1235, %v1234
      %v1245 = vpack.c.b16 %v1237, %v1236
      %1254 = vmatprep.subr.bf16.mxu0 0
      %1255 = vmatpush1.bf16.msra.mxu0 %v1238
      %1256 = vmatprep.subr.bf16.mxu0 0
      %1257 = vmatpush1.bf16.msra.mxu0 %v1239
      %1258 = vmatprep.subr.bf16.mxu0 0
      %1259 = vmatpush1.bf16.msra.mxu0 %v1240
      %1260 = vmatprep.subr.bf16.mxu0 0
      %1261 = vmatpush1.bf16.msra.mxu0 %v1241
      %1262 = vmatprep.subr.bf16.mxu0 0
      %1263 = vmatpush1.bf16.msra.mxu0 %v1242
      %1264 = vmatprep.subr.bf16.mxu0 0
      %1265 = vmatpush1.bf16.msra.mxu0 %v1243
      %1266 = vmatprep.subr.bf16.mxu0 0
      %1267 = vmatpush1.bf16.msra.mxu0 %v1244
      %1268 = vmatprep.subr.bf16.mxu0 0
      %1269 = vmatpush1.bf16.msra.mxu0 %v1245
      %1270 = vmatprep.subr.bf16.mxu0 0
      %1271 = vmatpush1.bf16.msra.mxu0 0
      %1272 = vmatprep.subr.bf16.mxu0 0
      %1273 = vmatpush1.bf16.msra.mxu0 0
      %1274 = vmatprep.subr.bf16.mxu0 0
      %1275 = vmatpush1.bf16.msra.mxu0 0
      %1276 = vmatprep.subr.bf16.mxu0 0
      %1277 = vmatpush1.bf16.msra.mxu0 0
      %1278 = vmatprep.subr.bf16.mxu0 0
      %1279 = vmatpush1.bf16.msra.mxu0 0
      %1280 = vmatprep.subr.bf16.mxu0 0
      %1281 = vmatpush1.bf16.msra.mxu0 0
      %1282 = vmatprep.subr.bf16.mxu0 0
      %1283 = vmatpush1.bf16.msra.mxu0 0
      %1284 = vmatprep.subr.bf16.mxu0 0
      %1285 = vmatpush1.bf16.msra.mxu0 0
      %1286 = vmatprep.mubr.bf16.mxu0 0
      %1287 = vmatmul.mubr.bf16.gmra.mrb[0].mxu0 %v1196
      %v1288 = vpop.f32.mrb[0].mxu0
      %v1289 = vadd.f32 0.0, %v1288
      %v1290 = vpop.f32.mrb[0].mxu0
      %v1291 = vpop.f32.mrb[0].mxu0
      %v1292 = vadd.f32 0.0, %v1291
      %v1293 = vpop.f32.mrb[0].mxu0
      %1294 = vmatprep.mubr.bf16.mxu0 0
      %1295 = vmatmul.mubr.bf16.gmra.mrb[0].mxu0 %v1197
      %v1296 = vpop.f32.mrb[0].mxu0
      %v1297 = vadd.f32 0.0, %v1296
      %v1298 = vpop.f32.mrb[0].mxu0
      %v1299 = vpop.f32.mrb[0].mxu0
      %v1300 = vadd.f32 0.0, %v1299
      %v1301 = vpop.f32.mrb[0].mxu0
      %1302 = vmatprep.mubr.bf16.mxu0 0
      %1303 = vmatmul.mubr.bf16.gmra.mrb[0].mxu0 %v1198
      %v1304 = vpop.f32.mrb[0].mxu0
      %v1305 = vadd.f32 0.0, %v1304
      %v1306 = vpop.f32.mrb[0].mxu0
      %v1307 = vpop.f32.mrb[0].mxu0
      %v1308 = vadd.f32 0.0, %v1307
      %v1309 = vpop.f32.mrb[0].mxu0
      %1310 = vmatprep.mubr.bf16.mxu0 0
      %1311 = vmatmul.mubr.bf16.gmra.mrb[0].mxu0 %v1199
      %v1312 = vpop.f32.mrb[0].mxu0
      %v1313 = vadd.f32 0.0, %v1312
      %v1314 = vpop.f32.mrb[0].mxu0
      %v1315 = vpop.f32.mrb[0].mxu0
      %v1316 = vadd.f32 0.0, %v1315
      %v1317 = vpop.f32.mrb[0].mxu0
      %1318 = vmatprep.mubr.bf16.mxu0 0
      %1319 = vmatmul.mubr.bf16.gmra.mrb[0].mxu0 %v1200
      %v1320 = vpop.f32.mrb[0].mxu0
      %v1321 = vadd.f32 0.0, %v1320
      %v1322 = vpop.f32.mrb[0].mxu0
      %v1323 = vpop.f32.mrb[0].mxu0
      %v1324 = vpop.f32.mrb[0].mxu0
      %1325 = vdwg.mxu0
      %v1326 = vadd.f32 %v1143, %v1289
      %v1327 = vadd.f32 %v1144, %v1292
      %v1328 = vadd.f32 %v1145, %v1297
      %v1329 = vadd.f32 %v1146, %v1300
      %v1330 = vadd.f32 %v1147, %v1305
      %v1331 = vadd.f32 %v1148, %v1308
      %v1332 = vadd.f32 %v1149, %v1313
      %v1333 = vadd.f32 %v1150, %v1316
      %v1334 = vadd.f32 %v1151, %v1321
      %v1335 = vld [vmem:[%s370] sm:$0xf]
      %v1336 = vld [vmem:[%s370 + $0x4] sm:$0xf]
      %v1337 = vld [vmem:[%s370 + $0x8] sm:$0xf]
      %v1338 = vld [vmem:[%s370 + $0xc] sm:$0xf]
      %v1339 = vld [vmem:[%s370 + $0x10] sm:$0xf]
      %v1340 = vld [vmem:[%s370 + $0x14] sm:$0xf]
      %v1341 = vld [vmem:[%s370 + $0x18] sm:$0xf]
      %v1342 = vld [vmem:[%s370 + $0x1c] sm:$0xf]
      %v1343 = vld [vmem:[%s370 + $0x20] sm:$0xf]
      %v1344 = vld [vmem:[%s370 + $0x24] sm:$0x1]
      %s1345 = scalar_lea.vmem %s379, 320
      %v1346 = vld [vmem:[%s1345] sm:$0xf]
      %v1347 = vld [vmem:[%s1345 + $0x4] sm:$0xf]
      %v1348 = vld [vmem:[%s1345 + $0x8] sm:$0xf]
      %v1349 = vld [vmem:[%s1345 + $0xc] sm:$0xf]
      %v1350 = vld [vmem:[%s1345 + $0x10] sm:$0xf]
      %v1351 = vld [vmem:[%s1345 + $0x14] sm:$0xf]
      %v1352 = vld [vmem:[%s1345 + $0x18] sm:$0xf]
      %v1353 = vld [vmem:[%s1345 + $0x1c] sm:$0xf]
      %v1354 = vld [vmem:[%s1345 + $0x20] sm:$0xf]
      %v1355 = vld [vmem:[%s1345 + $0x24] sm:$0xf]
      %v1356 = vld [vmem:[%s1345 + $0x28] sm:$0xf]
      %v1357 = vld [vmem:[%s1345 + $0x2c] sm:$0xf]
      %v1358 = vld [vmem:[%s1345 + $0x30] sm:$0xf]
      %v1359 = vld [vmem:[%s1345 + $0x34] sm:$0xf]
      %v1360 = vld [vmem:[%s1345 + $0x38] sm:$0xf]
      %v1361 = vld [vmem:[%s1345 + $0x3c] sm:$0xf]
      %v1372 = vunpack.c.l.b16 %v1335
      %v1373 = vunpack.c.l.b16 %v1336
      %v1374 = vunpack.c.l.b16 %v1337
      %v1375 = vunpack.c.l.b16 %v1338
      %v1376 = vunpack.c.l.b16 %v1339
      %v1377 = vunpack.c.l.b16 %v1340
      %v1378 = vunpack.c.l.b16 %v1341
      %v1379 = vunpack.c.l.b16 %v1342
      %v1380 = vunpack.c.l.b16 %v1343
      %v1381 = vunpack.c.l.b16 %v1344
      %v1382 = vpack.c.b16 %v1373, %v1372
      %v1383 = vpack.c.b16 %v1375, %v1374
      %v1384 = vpack.c.b16 %v1377, %v1376
      %v1385 = vpack.c.b16 %v1379, %v1378
      %v1386 = vpack.c.b16 %v1381, %v1380
      %v1388 = vshrl.u32 %v1382, 16
      %v1390 = vshll.u32 %v1382, 16
      %v1392 = vrot.slane %v1390, 1
      %v1393 = vor.u32 %v1388, %v1392
      %v1395 = vshll.u32 %v1383, 16
      %v1397 = vrot.slane %v1395, 1
      %v1398 = vsel %vm795, %v1393, %v1397
      %v1399 = vshrl.u32 %v1383, 16
      %v1401 = vor.u32 %v1399, %v1397
      %v1403 = vshll.u32 %v1384, 16
      %v1405 = vrot.slane %v1403, 1
      %v1406 = vsel %vm795, %v1401, %v1405
      %v1407 = vshrl.u32 %v1384, 16
      %v1409 = vor.u32 %v1407, %v1405
      %v1411 = vshll.u32 %v1385, 16
      %v1413 = vrot.slane %v1411, 1
      %v1414 = vsel %vm795, %v1409, %v1413
      %v1415 = vshrl.u32 %v1385, 16
      %v1417 = vor.u32 %v1415, %v1413
      %v1419 = vshll.u32 %v1386, 16
      %v1421 = vrot.slane %v1419, 1
      %v1422 = vsel %vm795, %v1417, %v1421
      %v1423 = vshrl.u32 %v1386, 16
      %v1425 = vor.u32 %v1423, %v1421
      %v1447 = vunpack.c.l.b16 %v1346
      %v1448 = vunpack.c.l.b16 %v1347
      %v1449 = vunpack.c.l.b16 %v1348
      %v1450 = vunpack.c.l.b16 %v1349
      %v1451 = vunpack.c.l.b16 %v1350
      %v1452 = vunpack.c.l.b16 %v1351
      %v1453 = vunpack.c.l.b16 %v1352
      %v1454 = vunpack.c.l.b16 %v1353
      %v1455 = vunpack.c.l.b16 %v1354
      %v1456 = vunpack.c.l.b16 %v1355
      %v1457 = vunpack.c.l.b16 %v1356
      %v1458 = vunpack.c.l.b16 %v1357
      %v1459 = vunpack.c.l.b16 %v1358
      %v1460 = vunpack.c.l.b16 %v1359
      %v1461 = vunpack.c.l.b16 %v1360
      %v1462 = vunpack.c.l.b16 %v1361
      %v1463 = vpack.c.b16 %v1448, %v1447
      %v1464 = vpack.c.b16 %v1450, %v1449
      %v1465 = vpack.c.b16 %v1452, %v1451
      %v1466 = vpack.c.b16 %v1454, %v1453
      %v1467 = vpack.c.b16 %v1456, %v1455
      %v1468 = vpack.c.b16 %v1458, %v1457
      %v1469 = vpack.c.b16 %v1460, %v1459
      %v1470 = vpack.c.b16 %v1462, %v1461
      %1479 = vmatprep.subr.bf16.mxu0 0
      %1480 = vmatpush1.bf16.msra.mxu0 %v1463
      %1481 = vmatprep.subr.bf16.mxu0 0
      %1482 = vmatpush1.bf16.msra.mxu0 %v1464
      %1483 = vmatprep.subr.bf16.mxu0 0
      %1484 = vmatpush1.bf16.msra.mxu0 %v1465
      %1485 = vmatprep.subr.bf16.mxu0 0
      %1486 = vmatpush1.bf16.msra.mxu0 %v1466
      %1487 = vmatprep.subr.bf16.mxu0 0
      %1488 = vmatpush1.bf16.msra.mxu0 %v1467
      %1489 = vmatprep.subr.bf16.mxu0 0
      %1490 = vmatpush1.bf16.msra.mxu0 %v1468
      %1491 = vmatprep.subr.bf16.mxu0 0
      %1492 = vmatpush1.bf16.msra.mxu0 %v1469
      %1493 = vmatprep.subr.bf16.mxu0 0
      %1494 = vmatpush1.bf16.msra.mxu0 %v1470
      %1495 = vmatprep.subr.bf16.mxu0 0
      %1496 = vmatpush1.bf16.msra.mxu0 0
      %1497 = vmatprep.subr.bf16.mxu0 0
      %1498 = vmatpush1.bf16.msra.mxu0 0
      %1499 = vmatprep.subr.bf16.mxu0 0
      %1500 = vmatpush1.bf16.msra.mxu0 0
      %1501 = vmatprep.subr.bf16.mxu0 0
      %1502 = vmatpush1.bf16.msra.mxu0 0
      %1503 = vmatprep.subr.bf16.mxu0 0
      %1504 = vmatpush1.bf16.msra.mxu0 0
      %1505 = vmatprep.subr.bf16.mxu0 0
      %1506 = vmatpush1.bf16.msra.mxu0 0
      %1507 = vmatprep.subr.bf16.mxu0 0
      %1508 = vmatpush1.bf16.msra.mxu0 0
      %1509 = vmatprep.subr.bf16.mxu0 0
      %1510 = vmatpush1.bf16.msra.mxu0 0
      %1511 = vmatprep.mubr.bf16.mxu0 0
      %1512 = vmatmul.mubr.bf16.gmra.mrb[0].mxu0 %v1398
      %v1513 = vpop.f32.mrb[0].mxu0
      %v1514 = vadd.f32 0.0, %v1513
      %v1515 = vpop.f32.mrb[0].mxu0
      %v1516 = vpop.f32.mrb[0].mxu0
      %v1517 = vadd.f32 0.0, %v1516
      %v1518 = vpop.f32.mrb[0].mxu0
      %1519 = vmatprep.mubr.bf16.mxu0 0
      %1520 = vmatmul.mubr.bf16.gmra.mrb[0].mxu0 %v1406
      %v1521 = vpop.f32.mrb[0].mxu0
      %v1522 = vadd.f32 0.0, %v1521
      %v1523 = vpop.f32.mrb[0].mxu0
      %v1524 = vpop.f32.mrb[0].mxu0
      %v1525 = vadd.f32 0.0, %v1524
      %v1526 = vpop.f32.mrb[0].mxu0
      %1527 = vmatprep.mubr.bf16.mxu0 0
      %1528 = vmatmul.mubr.bf16.gmra.mrb[0].mxu0 %v1414
      %v1529 = vpop.f32.mrb[0].mxu0
      %v1530 = vadd.f32 0.0, %v1529
      %v1531 = vpop.f32.mrb[0].mxu0
      %v1532 = vpop.f32.mrb[0].mxu0
      %v1533 = vadd.f32 0.0, %v1532
      %v1534 = vpop.f32.mrb[0].mxu0
      %1535 = vmatprep.mubr.bf16.mxu0 0
      %1536 = vmatmul.mubr.bf16.gmra.mrb[0].mxu0 %v1422
      %v1537 = vpop.f32.mrb[0].mxu0
      %v1538 = vadd.f32 0.0, %v1537
      %v1539 = vpop.f32.mrb[0].mxu0
      %v1540 = vpop.f32.mrb[0].mxu0
      %v1541 = vadd.f32 0.0, %v1540
      %v1542 = vpop.f32.mrb[0].mxu0
      %1543 = vmatprep.mubr.bf16.mxu0 0
      %1544 = vmatmul.mubr.bf16.gmra.mrb[0].mxu0 %v1425
      %v1545 = vpop.f32.mrb[0].mxu0
      %v1546 = vadd.f32 0.0, %v1545
      %v1547 = vpop.f32.mrb[0].mxu0
      %v1548 = vpop.f32.mrb[0].mxu0
      %v1549 = vpop.f32.mrb[0].mxu0
      %1550 = vdwg.mxu0
      %v1551 = vadd.f32 %v1326, %v1514
      %v1552 = vadd.f32 %v1327, %v1517
      %v1553 = vadd.f32 %v1328, %v1522
      %v1554 = vadd.f32 %v1329, %v1525
      %v1555 = vadd.f32 %v1330, %v1530
      %v1556 = vadd.f32 %v1331, %v1533
      %v1557 = vadd.f32 %v1332, %v1538
      %v1558 = vadd.f32 %v1333, %v1541
      %v1559 = vadd.f32 %v1334, %v1546
      %v1560 = vld [vmem:[%s360 + $0x4] sm:$0xf]
      %v1561 = vld [vmem:[%s360 + $0x8] sm:$0xf]
      %v1562 = vld [vmem:[%s360 + $0xc] sm:$0xf]
      %v1563 = vld [vmem:[%s360 + $0x10] sm:$0xf]
      %v1564 = vld [vmem:[%s360 + $0x14] sm:$0xf]
      %v1565 = vld [vmem:[%s360 + $0x18] sm:$0xf]
      %v1566 = vld [vmem:[%s360 + $0x1c] sm:$0xf]
      %v1567 = vld [vmem:[%s360 + $0x20] sm:$0xf]
      %v1568 = vld [vmem:[%s360 + $0x24] sm:$0xf]
      %v1569 = vld [vmem:[%s360 + $0x28] sm:$0x1]
      %s1570 = scalar_lea.vmem %s379, 384
      %v1571 = vld [vmem:[%s1570] sm:$0xf]
      %v1572 = vld [vmem:[%s1570 + $0x4] sm:$0xf]
      %v1573 = vld [vmem:[%s1570 + $0x8] sm:$0xf]
      %v1574 = vld [vmem:[%s1570 + $0xc] sm:$0xf]
      %v1575 = vld [vmem:[%s1570 + $0x10] sm:$0xf]
      %v1576 = vld [vmem:[%s1570 + $0x14] sm:$0xf]
      %v1577 = vld [vmem:[%s1570 + $0x18] sm:$0xf]
      %v1578 = vld [vmem:[%s1570 + $0x1c] sm:$0xf]
      %v1579 = vld [vmem:[%s1570 + $0x20] sm:$0xf]
      %v1580 = vld [vmem:[%s1570 + $0x24] sm:$0xf]
      %v1581 = vld [vmem:[%s1570 + $0x28] sm:$0xf]
      %v1582 = vld [vmem:[%s1570 + $0x2c] sm:$0xf]
      %v1583 = vld [vmem:[%s1570 + $0x30] sm:$0xf]
      %v1584 = vld [vmem:[%s1570 + $0x34] sm:$0xf]
      %v1585 = vld [vmem:[%s1570 + $0x38] sm:$0xf]
      %v1586 = vld [vmem:[%s1570 + $0x3c] sm:$0xf]
      %v1597 = vunpack.c.l.b16 %v1560
      %v1598 = vunpack.c.l.b16 %v1561
      %v1599 = vunpack.c.l.b16 %v1562
      %v1600 = vunpack.c.l.b16 %v1563
      %v1601 = vunpack.c.l.b16 %v1564
      %v1602 = vunpack.c.l.b16 %v1565
      %v1603 = vunpack.c.l.b16 %v1566
      %v1604 = vunpack.c.l.b16 %v1567
      %v1605 = vunpack.c.l.b16 %v1568
      %v1606 = vunpack.c.l.b16 %v1569
      %v1607 = vpack.c.b16 %v1598, %v1597
      %v1608 = vpack.c.b16 %v1600, %v1599
      %v1609 = vpack.c.b16 %v1602, %v1601
      %v1610 = vpack.c.b16 %v1604, %v1603
      %v1611 = vpack.c.b16 %v1606, %v1605
      %v1613 = vshrl.u32 %v1607, 16
      %v1615 = vshll.u32 %v1607, 16
      %v1617 = vrot.slane %v1615, 1
      %v1618 = vor.u32 %v1613, %v1617
      %v1620 = vshll.u32 %v1608, 16
      %v1622 = vrot.slane %v1620, 1
      %v1623 = vsel %vm795, %v1618, %v1622
      %v1624 = vshrl.u32 %v1608, 16
      %v1626 = vor.u32 %v1624, %v1622
      %v1628 = vshll.u32 %v1609, 16
      %v1630 = vrot.slane %v1628, 1
      %v1631 = vsel %vm795, %v1626, %v1630
      %v1632 = vshrl.u32 %v1609, 16
      %v1634 = vor.u32 %v1632, %v1630
      %v1636 = vshll.u32 %v1610, 16
      %v1638 = vrot.slane %v1636, 1
      %v1639 = vsel %vm795, %v1634, %v1638
      %v1640 = vshrl.u32 %v1610, 16
      %v1642 = vor.u32 %v1640, %v1638
      %v1644 = vshll.u32 %v1611, 16
      %v1646 = vrot.slane %v1644, 1
      %v1647 = vsel %vm795, %v1642, %v1646
      %v1648 = vshrl.u32 %v1611, 16
      %v1650 = vor.u32 %v1648, %v1646
      %v1672 = vunpack.c.l.b16 %v1571
      %v1673 = vunpack.c.l.b16 %v1572
      %v1674 = vunpack.c.l.b16 %v1573
      %v1675 = vunpack.c.l.b16 %v1574
      %v1676 = vunpack.c.l.b16 %v1575
      %v1677 = vunpack.c.l.b16 %v1576
      %v1678 = vunpack.c.l.b16 %v1577
      %v1679 = vunpack.c.l.b16 %v1578
      %v1680 = vunpack.c.l.b16 %v1579
      %v1681 = vunpack.c.l.b16 %v1580
      %v1682 = vunpack.c.l.b16 %v1581
      %v1683 = vunpack.c.l.b16 %v1582
      %v1684 = vunpack.c.l.b16 %v1583
      %v1685 = vunpack.c.l.b16 %v1584
      %v1686 = vunpack.c.l.b16 %v1585
      %v1687 = vunpack.c.l.b16 %v1586
      %v1688 = vpack.c.b16 %v1673, %v1672
      %v1689 = vpack.c.b16 %v1675, %v1674
      %v1690 = vpack.c.b16 %v1677, %v1676
      %v1691 = vpack.c.b16 %v1679, %v1678
      %v1692 = vpack.c.b16 %v1681, %v1680
      %v1693 = vpack.c.b16 %v1683, %v1682
      %v1694 = vpack.c.b16 %v1685, %v1684
      %v1695 = vpack.c.b16 %v1687, %v1686
      %1704 = vmatprep.subr.bf16.mxu0 0
      %1705 = vmatpush1.bf16.msra.mxu0 %v1688
      %1706 = vmatprep.subr.bf16.mxu0 0
      %1707 = vmatpush1.bf16.msra.mxu0 %v1689
      %1708 = vmatprep.subr.bf16.mxu0 0
      %1709 = vmatpush1.bf16.msra.mxu0 %v1690
      %1710 = vmatprep.subr.bf16.mxu0 0
      %1711 = vmatpush1.bf16.msra.mxu0 %v1691
      %1712 = vmatprep.subr.bf16.mxu0 0
      %1713 = vmatpush1.bf16.msra.mxu0 %v1692
      %1714 = vmatprep.subr.bf16.mxu0 0
      %1715 = vmatpush1.bf16.msra.mxu0 %v1693
      %1716 = vmatprep.subr.bf16.mxu0 0
      %1717 = vmatpush1.bf16.msra.mxu0 %v1694
      %1718 = vmatprep.subr.bf16.mxu0 0
      %1719 = vmatpush1.bf16.msra.mxu0 %v1695
      %1720 = vmatprep.subr.bf16.mxu0 0
      %1721 = vmatpush1.bf16.msra.mxu0 0
      %1722 = vmatprep.subr.bf16.mxu0 0
      %1723 = vmatpush1.bf16.msra.mxu0 0
      %1724 = vmatprep.subr.bf16.mxu0 0
      %1725 = vmatpush1.bf16.msra.mxu0 0
      %1726 = vmatprep.subr.bf16.mxu0 0
      %1727 = vmatpush1.bf16.msra.mxu0 0
      %1728 = vmatprep.subr.bf16.mxu0 0
      %1729 = vmatpush1.bf16.msra.mxu0 0
      %1730 = vmatprep.subr.bf16.mxu0 0
      %1731 = vmatpush1.bf16.msra.mxu0 0
      %1732 = vmatprep.subr.bf16.mxu0 0
      %1733 = vmatpush1.bf16.msra.mxu0 0
      %1734 = vmatprep.subr.bf16.mxu0 0
      %1735 = vmatpush1.bf16.msra.mxu0 0
      %1736 = vmatprep.mubr.bf16.mxu0 0
      %1737 = vmatmul.mubr.bf16.gmra.mrb[0].mxu0 %v1623
      %v1738 = vpop.f32.mrb[0].mxu0
      %v1739 = vadd.f32 0.0, %v1738
      %v1740 = vpop.f32.mrb[0].mxu0
      %v1741 = vpop.f32.mrb[0].mxu0
      %v1742 = vadd.f32 0.0, %v1741
      %v1743 = vpop.f32.mrb[0].mxu0
      %1744 = vmatprep.mubr.bf16.mxu0 0
      %1745 = vmatmul.mubr.bf16.gmra.mrb[0].mxu0 %v1631
      %v1746 = vpop.f32.mrb[0].mxu0
      %v1747 = vadd.f32 0.0, %v1746
      %v1748 = vpop.f32.mrb[0].mxu0
      %v1749 = vpop.f32.mrb[0].mxu0
      %v1750 = vadd.f32 0.0, %v1749
      %v1751 = vpop.f32.mrb[0].mxu0
      %1752 = vmatprep.mubr.bf16.mxu0 0
      %1753 = vmatmul.mubr.bf16.gmra.mrb[0].mxu0 %v1639
      %v1754 = vpop.f32.mrb[0].mxu0
      %v1755 = vadd.f32 0.0, %v1754
      %v1756 = vpop.f32.mrb[0].mxu0
      %v1757 = vpop.f32.mrb[0].mxu0
      %v1758 = vadd.f32 0.0, %v1757
      %v1759 = vpop.f32.mrb[0].mxu0
      %1760 = vmatprep.mubr.bf16.mxu0 0
      %1761 = vmatmul.mubr.bf16.gmra.mrb[0].mxu0 %v1647
      %v1762 = vpop.f32.mrb[0].mxu0
      %v1763 = vadd.f32 0.0, %v1762
      %v1764 = vpop.f32.mrb[0].mxu0
      %v1765 = vpop.f32.mrb[0].mxu0
      %v1766 = vadd.f32 0.0, %v1765
      %v1767 = vpop.f32.mrb[0].mxu0
      %1768 = vmatprep.mubr.bf16.mxu0 0
      %1769 = vmatmul.mubr.bf16.gmra.mrb[0].mxu0 %v1650
      %v1770 = vpop.f32.mrb[0].mxu0
      %v1771 = vadd.f32 0.0, %v1770
      %v1772 = vpop.f32.mrb[0].mxu0
      %v1773 = vpop.f32.mrb[0].mxu0
      %v1774 = vpop.f32.mrb[0].mxu0
      %1775 = vdwg.mxu0
      %v1776 = vadd.f32 %v1551, %v1739
      %v1777 = vadd.f32 %v1552, %v1742
      %v1778 = vadd.f32 %v1553, %v1747
      %v1779 = vadd.f32 %v1554, %v1750
      %v1780 = vadd.f32 %v1555, %v1755
      %v1781 = vadd.f32 %v1556, %v1758
      %v1782 = vadd.f32 %v1557, %v1763
      %v1783 = vadd.f32 %v1558, %v1766
      %v1784 = vadd.f32 %v1559, %v1771
      %v1785 = vld [vmem:[%s365 + $0x4] sm:$0xf]
      %v1786 = vld [vmem:[%s365 + $0x8] sm:$0xf]
      %v1787 = vld [vmem:[%s365 + $0xc] sm:$0xf]
      %v1788 = vld [vmem:[%s365 + $0x10] sm:$0xf]
      %v1789 = vld [vmem:[%s365 + $0x14] sm:$0xf]
      %v1790 = vld [vmem:[%s365 + $0x18] sm:$0xf]
      %v1791 = vld [vmem:[%s365 + $0x1c] sm:$0xf]
      %v1792 = vld [vmem:[%s365 + $0x20] sm:$0xf]
      %v1793 = vld [vmem:[%s365 + $0x24] sm:$0xf]
      %v1794 = vld [vmem:[%s365 + $0x28] sm:$0x1]
      %s1795 = scalar_lea.vmem %s379, 448
      %v1796 = vld [vmem:[%s1795] sm:$0xf]
      %v1797 = vld [vmem:[%s1795 + $0x4] sm:$0xf]
      %v1798 = vld [vmem:[%s1795 + $0x8] sm:$0xf]
      %v1799 = vld [vmem:[%s1795 + $0xc] sm:$0xf]
      %v1800 = vld [vmem:[%s1795 + $0x10] sm:$0xf]
      %v1801 = vld [vmem:[%s1795 + $0x14] sm:$0xf]
      %v1802 = vld [vmem:[%s1795 + $0x18] sm:$0xf]
      %v1803 = vld [vmem:[%s1795 + $0x1c] sm:$0xf]
      %v1804 = vld [vmem:[%s1795 + $0x20] sm:$0xf]
      %v1805 = vld [vmem:[%s1795 + $0x24] sm:$0xf]
      %v1806 = vld [vmem:[%s1795 + $0x28] sm:$0xf]
      %v1807 = vld [vmem:[%s1795 + $0x2c] sm:$0xf]
      %v1808 = vld [vmem:[%s1795 + $0x30] sm:$0xf]
      %v1809 = vld [vmem:[%s1795 + $0x34] sm:$0xf]
      %v1810 = vld [vmem:[%s1795 + $0x38] sm:$0xf]
      %v1811 = vld [vmem:[%s1795 + $0x3c] sm:$0xf]
      %v1822 = vunpack.c.l.b16 %v1785
      %v1823 = vunpack.c.l.b16 %v1786
      %v1824 = vunpack.c.l.b16 %v1787
      %v1825 = vunpack.c.l.b16 %v1788
      %v1826 = vunpack.c.l.b16 %v1789
      %v1827 = vunpack.c.l.b16 %v1790
      %v1828 = vunpack.c.l.b16 %v1791
      %v1829 = vunpack.c.l.b16 %v1792
      %v1830 = vunpack.c.l.b16 %v1793
      %v1831 = vunpack.c.l.b16 %v1794
      %v1832 = vpack.c.b16 %v1823, %v1822
      %v1833 = vpack.c.b16 %v1825, %v1824
      %v1834 = vpack.c.b16 %v1827, %v1826
      %v1835 = vpack.c.b16 %v1829, %v1828
      %v1836 = vpack.c.b16 %v1831, %v1830
      %v1838 = vshrl.u32 %v1832, 16
      %v1840 = vshll.u32 %v1832, 16
      %v1842 = vrot.slane %v1840, 1
      %v1843 = vor.u32 %v1838, %v1842
      %v1845 = vshll.u32 %v1833, 16
      %v1847 = vrot.slane %v1845, 1
      %v1848 = vsel %vm795, %v1843, %v1847
      %v1849 = vshrl.u32 %v1833, 16
      %v1851 = vor.u32 %v1849, %v1847
      %v1853 = vshll.u32 %v1834, 16
      %v1855 = vrot.slane %v1853, 1
      %v1856 = vsel %vm795, %v1851, %v1855
      %v1857 = vshrl.u32 %v1834, 16
      %v1859 = vor.u32 %v1857, %v1855
      %v1861 = vshll.u32 %v1835, 16
      %v1863 = vrot.slane %v1861, 1
      %v1864 = vsel %vm795, %v1859, %v1863
      %v1865 = vshrl.u32 %v1835, 16
      %v1867 = vor.u32 %v1865, %v1863
      %v1869 = vshll.u32 %v1836, 16
      %v1871 = vrot.slane %v1869, 1
      %v1872 = vsel %vm795, %v1867, %v1871
      %v1873 = vshrl.u32 %v1836, 16
      %v1875 = vor.u32 %v1873, %v1871
      %v1897 = vunpack.c.l.b16 %v1796
      %v1898 = vunpack.c.l.b16 %v1797
      %v1899 = vunpack.c.l.b16 %v1798
      %v1900 = vunpack.c.l.b16 %v1799
      %v1901 = vunpack.c.l.b16 %v1800
      %v1902 = vunpack.c.l.b16 %v1801
      %v1903 = vunpack.c.l.b16 %v1802
      %v1904 = vunpack.c.l.b16 %v1803
      %v1905 = vunpack.c.l.b16 %v1804
      %v1906 = vunpack.c.l.b16 %v1805
      %v1907 = vunpack.c.l.b16 %v1806
      %v1908 = vunpack.c.l.b16 %v1807
      %v1909 = vunpack.c.l.b16 %v1808
      %v1910 = vunpack.c.l.b16 %v1809
      %v1911 = vunpack.c.l.b16 %v1810
      %v1912 = vunpack.c.l.b16 %v1811
      %v1913 = vpack.c.b16 %v1898, %v1897
      %v1914 = vpack.c.b16 %v1900, %v1899
      %v1915 = vpack.c.b16 %v1902, %v1901
      %v1916 = vpack.c.b16 %v1904, %v1903
      %v1917 = vpack.c.b16 %v1906, %v1905
      %v1918 = vpack.c.b16 %v1908, %v1907
      %v1919 = vpack.c.b16 %v1910, %v1909
      %v1920 = vpack.c.b16 %v1912, %v1911
      %1929 = vmatprep.subr.bf16.mxu0 0
      %1930 = vmatpush1.bf16.msra.mxu0 %v1913
      %1931 = vmatprep.subr.bf16.mxu0 0
      %1932 = vmatpush1.bf16.msra.mxu0 %v1914
      %1933 = vmatprep.subr.bf16.mxu0 0
      %1934 = vmatpush1.bf16.msra.mxu0 %v1915
      %1935 = vmatprep.subr.bf16.mxu0 0
      %1936 = vmatpush1.bf16.msra.mxu0 %v1916
      %1937 = vmatprep.subr.bf16.mxu0 0
      %1938 = vmatpush1.bf16.msra.mxu0 %v1917
      %1939 = vmatprep.subr.bf16.mxu0 0
      %1940 = vmatpush1.bf16.msra.mxu0 %v1918
      %1941 = vmatprep.subr.bf16.mxu0 0
      %1942 = vmatpush1.bf16.msra.mxu0 %v1919
      %1943 = vmatprep.subr.bf16.mxu0 0
      %1944 = vmatpush1.bf16.msra.mxu0 %v1920
      %1945 = vmatprep.subr.bf16.mxu0 0
      %1946 = vmatpush1.bf16.msra.mxu0 0
      %1947 = vmatprep.subr.bf16.mxu0 0
      %1948 = vmatpush1.bf16.msra.mxu0 0
      %1949 = vmatprep.subr.bf16.mxu0 0
      %1950 = vmatpush1.bf16.msra.mxu0 0
      %1951 = vmatprep.subr.bf16.mxu0 0
      %1952 = vmatpush1.bf16.msra.mxu0 0
      %1953 = vmatprep.subr.bf16.mxu0 0
      %1954 = vmatpush1.bf16.msra.mxu0 0
      %1955 = vmatprep.subr.bf16.mxu0 0
      %1956 = vmatpush1.bf16.msra.mxu0 0
      %1957 = vmatprep.subr.bf16.mxu0 0
      %1958 = vmatpush1.bf16.msra.mxu0 0
      %1959 = vmatprep.subr.bf16.mxu0 0
      %1960 = vmatpush1.bf16.msra.mxu0 0
      %1961 = vmatprep.mubr.bf16.mxu0 0
      %1962 = vmatmul.mubr.bf16.gmra.mrb[0].mxu0 %v1848
      %v1963 = vpop.f32.mrb[0].mxu0
      %v1964 = vadd.f32 0.0, %v1963
      %v1965 = vpop.f32.mrb[0].mxu0
      %v1966 = vpop.f32.mrb[0].mxu0
      %v1967 = vadd.f32 0.0, %v1966
      %v1968 = vpop.f32.mrb[0].mxu0
      %1969 = vmatprep.mubr.bf16.mxu0 0
      %1970 = vmatmul.mubr.bf16.gmra.mrb[0].mxu0 %v1856
      %v1971 = vpop.f32.mrb[0].mxu0
      %v1972 = vadd.f32 0.0, %v1971
      %v1973 = vpop.f32.mrb[0].mxu0
      %v1974 = vpop.f32.mrb[0].mxu0
      %v1975 = vadd.f32 0.0, %v1974
      %v1976 = vpop.f32.mrb[0].mxu0
      %1977 = vmatprep.mubr.bf16.mxu0 0
      %1978 = vmatmul.mubr.bf16.gmra.mrb[0].mxu0 %v1864
      %v1979 = vpop.f32.mrb[0].mxu0
      %v1980 = vadd.f32 0.0, %v1979
      %v1981 = vpop.f32.mrb[0].mxu0
      %v1982 = vpop.f32.mrb[0].mxu0
      %v1983 = vadd.f32 0.0, %v1982
      %v1984 = vpop.f32.mrb[0].mxu0
      %1985 = vmatprep.mubr.bf16.mxu0 0
      %1986 = vmatmul.mubr.bf16.gmra.mrb[0].mxu0 %v1872
      %v1987 = vpop.f32.mrb[0].mxu0
      %v1988 = vadd.f32 0.0, %v1987
      %v1989 = vpop.f32.mrb[0].mxu0
      %v1990 = vpop.f32.mrb[0].mxu0
      %v1991 = vadd.f32 0.0, %v1990
      %v1992 = vpop.f32.mrb[0].mxu0
      %1993 = vmatprep.mubr.bf16.mxu0 0
      %1994 = vmatmul.mubr.bf16.gmra.mrb[0].mxu0 %v1875
      %v1995 = vpop.f32.mrb[0].mxu0
      %v1996 = vadd.f32 0.0, %v1995
      %v1997 = vpop.f32.mrb[0].mxu0
      %v1998 = vpop.f32.mrb[0].mxu0
      %v1999 = vpop.f32.mrb[0].mxu0
      %2000 = vdwg.mxu0
      %v2001 = vadd.f32 %v1776, %v1964
      %v2002 = vadd.f32 %v1777, %v1967
      %v2003 = vadd.f32 %v1778, %v1972
      %v2004 = vadd.f32 %v1779, %v1975
      %v2005 = vadd.f32 %v1780, %v1980
      %v2006 = vadd.f32 %v1781, %v1983
      %v2007 = vadd.f32 %v1782, %v1988
      %v2008 = vadd.f32 %v1783, %v1991
      %v2009 = vadd.f32 %v1784, %v1996
      %v2010 = vld [vmem:[%s360 + $0x4] sm:$0xe]
      %s2011 = scalar_lea.vmem %s379, 512
      %v2012 = vld [vmem:[%s2011] sm:$0xf]
      %v2013 = vld [vmem:[%s2011 + $0x4] sm:$0xf]
      %v2014 = vld [vmem:[%s2011 + $0x8] sm:$0xf]
      %v2015 = vld [vmem:[%s2011 + $0xc] sm:$0xf]
      %v2016 = vld [vmem:[%s2011 + $0x10] sm:$0xf]
      %v2017 = vld [vmem:[%s2011 + $0x14] sm:$0xf]
      %v2018 = vld [vmem:[%s2011 + $0x18] sm:$0xf]
      %v2019 = vld [vmem:[%s2011 + $0x1c] sm:$0xf]
      %v2020 = vld [vmem:[%s2011 + $0x20] sm:$0xf]
      %v2021 = vld [vmem:[%s2011 + $0x24] sm:$0xf]
      %v2022 = vld [vmem:[%s2011 + $0x28] sm:$0xf]
      %v2023 = vld [vmem:[%s2011 + $0x2c] sm:$0xf]
      %v2024 = vld [vmem:[%s2011 + $0x30] sm:$0xf]
      %v2025 = vld [vmem:[%s2011 + $0x34] sm:$0xf]
      %v2026 = vld [vmem:[%s2011 + $0x38] sm:$0xf]
      %v2027 = vld [vmem:[%s2011 + $0x3c] sm:$0xf]
      %v2029 = vunpack.c.l.b16 %v2010
      %v2030 = vpack.c.b16 %v1598, %v2029
      %vm2031 = vcmask 1046528
      %v2032 = vrot.slane %v2030, 1
      %v2033 = vrot.slane %v1608, 1
      %v2034 = vsel %vm2031, %v2032, %v2033
      %v2035 = vrot.slane %v1609, 1
      %v2036 = vsel %vm2031, %v2033, %v2035
      %v2037 = vrot.slane %v1610, 1
      %v2038 = vsel %vm2031, %v2035, %v2037
      %v2039 = vrot.slane %v1611, 1
      %v2040 = vsel %vm2031, %v2037, %v2039
      %v2062 = vunpack.c.l.b16 %v2012
      %v2063 = vunpack.c.l.b16 %v2013
      %v2064 = vunpack.c.l.b16 %v2014
      %v2065 = vunpack.c.l.b16 %v2015
      %v2066 = vunpack.c.l.b16 %v2016
      %v2067 = vunpack.c.l.b16 %v2017
      %v2068 = vunpack.c.l.b16 %v2018
      %v2069 = vunpack.c.l.b16 %v2019
      %v2070 = vunpack.c.l.b16 %v2020
      %v2071 = vunpack.c.l.b16 %v2021
      %v2072 = vunpack.c.l.b16 %v2022
      %v2073 = vunpack.c.l.b16 %v2023
      %v2074 = vunpack.c.l.b16 %v2024
      %v2075 = vunpack.c.l.b16 %v2025
      %v2076 = vunpack.c.l.b16 %v2026
      %v2077 = vunpack.c.l.b16 %v2027
      %v2078 = vpack.c.b16 %v2063, %v2062
      %v2079 = vpack.c.b16 %v2065, %v2064
      %v2080 = vpack.c.b16 %v2067, %v2066
      %v2081 = vpack.c.b16 %v2069, %v2068
      %v2082 = vpack.c.b16 %v2071, %v2070
      %v2083 = vpack.c.b16 %v2073, %v2072
      %v2084 = vpack.c.b16 %v2075, %v2074
      %v2085 = vpack.c.b16 %v2077, %v2076
      %2094 = vmatprep.subr.bf16.mxu0 0
      %2095 = vmatpush1.bf16.msra.mxu0 %v2078
      %2096 = vmatprep.subr.bf16.mxu0 0
      %2097 = vmatpush1.bf16.msra.mxu0 %v2079
      %2098 = vmatprep.subr.bf16.mxu0 0
      %2099 = vmatpush1.bf16.msra.mxu0 %v2080
      %2100 = vmatprep.subr.bf16.mxu0 0
      %2101 = vmatpush1.bf16.msra.mxu0 %v2081
      %2102 = vmatprep.subr.bf16.mxu0 0
      %2103 = vmatpush1.bf16.msra.mxu0 %v2082
      %2104 = vmatprep.subr.bf16.mxu0 0
      %2105 = vmatpush1.bf16.msra.mxu0 %v2083
      %2106 = vmatprep.subr.bf16.mxu0 0
      %2107 = vmatpush1.bf16.msra.mxu0 %v2084
      %2108 = vmatprep.subr.bf16.mxu0 0
      %2109 = vmatpush1.bf16.msra.mxu0 %v2085
      %2110 = vmatprep.subr.bf16.mxu0 0
      %2111 = vmatpush1.bf16.msra.mxu0 0
      %2112 = vmatprep.subr.bf16.mxu0 0
      %2113 = vmatpush1.bf16.msra.mxu0 0
      %2114 = vmatprep.subr.bf16.mxu0 0
      %2115 = vmatpush1.bf16.msra.mxu0 0
      %2116 = vmatprep.subr.bf16.mxu0 0
      %2117 = vmatpush1.bf16.msra.mxu0 0
      %2118 = vmatprep.subr.bf16.mxu0 0
      %2119 = vmatpush1.bf16.msra.mxu0 0
      %2120 = vmatprep.subr.bf16.mxu0 0
      %2121 = vmatpush1.bf16.msra.mxu0 0
      %2122 = vmatprep.subr.bf16.mxu0 0
      %2123 = vmatpush1.bf16.msra.mxu0 0
      %2124 = vmatprep.subr.bf16.mxu0 0
      %2125 = vmatpush1.bf16.msra.mxu0 0
      %2126 = vmatprep.mubr.bf16.mxu0 0
      %2127 = vmatmul.mubr.bf16.gmra.mrb[0].mxu0 %v2034
      %v2128 = vpop.f32.mrb[0].mxu0
      %v2129 = vadd.f32 0.0, %v2128
      %v2130 = vpop.f32.mrb[0].mxu0
      %v2131 = vpop.f32.mrb[0].mxu0
      %v2132 = vadd.f32 0.0, %v2131
      %v2133 = vpop.f32.mrb[0].mxu0
      %2134 = vmatprep.mubr.bf16.mxu0 0
      %2135 = vmatmul.mubr.bf16.gmra.mrb[0].mxu0 %v2036
      %v2136 = vpop.f32.mrb[0].mxu0
      %v2137 = vadd.f32 0.0, %v2136
      %v2138 = vpop.f32.mrb[0].mxu0
      %v2139 = vpop.f32.mrb[0].mxu0
      %v2140 = vadd.f32 0.0, %v2139
      %v2141 = vpop.f32.mrb[0].mxu0
      %2142 = vmatprep.mubr.bf16.mxu0 0
      %2143 = vmatmul.mubr.bf16.gmra.mrb[0].mxu0 %v2038
      %v2144 = vpop.f32.mrb[0].mxu0
      %v2145 = vadd.f32 0.0, %v2144
      %v2146 = vpop.f32.mrb[0].mxu0
      %v2147 = vpop.f32.mrb[0].mxu0
      %v2148 = vadd.f32 0.0, %v2147
      %v2149 = vpop.f32.mrb[0].mxu0
      %2150 = vmatprep.mubr.bf16.mxu0 0
      %2151 = vmatmul.mubr.bf16.gmra.mrb[0].mxu0 %v2040
      %v2152 = vpop.f32.mrb[0].mxu0
      %v2153 = vadd.f32 0.0, %v2152
      %v2154 = vpop.f32.mrb[0].mxu0
      %v2155 = vpop.f32.mrb[0].mxu0
      %v2156 = vadd.f32 0.0, %v2155
      %v2157 = vpop.f32.mrb[0].mxu0
      %2158 = vmatprep.mubr.bf16.mxu0 0
      %2159 = vmatmul.mubr.bf16.gmra.mrb[0].mxu0 %v2039
      %v2160 = vpop.f32.mrb[0].mxu0
      %v2161 = vadd.f32 0.0, %v2160
      %v2162 = vpop.f32.mrb[0].mxu0
      %v2163 = vpop.f32.mrb[0].mxu0
      %v2164 = vpop.f32.mrb[0].mxu0
      %2165 = vdwg.mxu0
      %v2166 = vadd.f32 %v2001, %v2129
      %v2167 = vadd.f32 %v2002, %v2132
      %v2168 = vadd.f32 %v2003, %v2137
      %v2169 = vadd.f32 %v2004, %v2140
      %v2170 = vadd.f32 %v2005, %v2145
      %v2171 = vadd.f32 %v2006, %v2148
      %v2172 = vadd.f32 %v2007, %v2153
      %v2173 = vadd.f32 %v2008, %v2156
      %v2174 = vadd.f32 %v2009, %v2161
      %v2175 = vpack.c.bf16 %v2167, %v2166
      %v2176 = vpack.c.bf16 %v2169, %v2168
      %v2177 = vpack.c.bf16 %v2171, %v2170
      %v2178 = vpack.c.bf16 %v2173, %v2172
      %v2179 = vpack.c.bf16 %v2174, %v2174
      %v2185 = vunpack.c.l.b16 %v2175
      %v2186 = vunpack.c.h.b16 %v2175
      %v2187 = vunpack.c.l.b16 %v2176
      %v2188 = vunpack.c.h.b16 %v2176
      %v2189 = vunpack.c.l.b16 %v2177
      %v2190 = vunpack.c.h.b16 %v2177
      %v2191 = vunpack.c.l.b16 %v2178
      %v2192 = vunpack.c.h.b16 %v2178
      %v2193 = vunpack.c.l.b16 %v2179
      %v2194 = vpack.c.b16 %v2185, %v2185
      %v2195 = vpack.c.b16 %v2186, %v2186
      %v2196 = vpack.c.b16 %v2187, %v2187
      %v2197 = vpack.c.b16 %v2188, %v2188
      %v2198 = vpack.c.b16 %v2189, %v2189
      %v2199 = vpack.c.b16 %v2190, %v2190
      %v2200 = vpack.c.b16 %v2191, %v2191
      %v2201 = vpack.c.b16 %v2192, %v2192
      %v2202 = vpack.c.b16 %v2193, %v2193
      %2212 = vst [vmem:[%s387] sm:$0xf] %v2194
      %2213 = vst [vmem:[%s387 + $0x4] sm:$0xf] %v2195
      %2214 = vst [vmem:[%s387 + $0x8] sm:$0xf] %v2196
      %2215 = vst [vmem:[%s387 + $0xc] sm:$0xf] %v2197
      %2216 = vst [vmem:[%s387 + $0x10] sm:$0xf] %v2198
      %2217 = vst [vmem:[%s387 + $0x14] sm:$0xf] %v2199
      %2218 = vst [vmem:[%s387 + $0x18] sm:$0xf] %v2200
      %2219 = vst [vmem:[%s387 + $0x1c] sm:$0xf] %v2201
      %2220 = vst [vmem:[%s387 + $0x20] sm:$0xf] %v2202
      %v2221 = vunpack.c.l.bf16 %v2175
      %v2222 = vunpack.c.h.bf16 %v2175
      %v2223 = vunpack.c.l.bf16 %v2176
      %v2224 = vunpack.c.h.bf16 %v2176
      %v2225 = vunpack.c.l.bf16 %v2177
      %v2226 = vunpack.c.h.bf16 %v2177
      %v2227 = vunpack.c.l.bf16 %v2178
      %v2228 = vunpack.c.h.bf16 %v2178
      %v2229 = vunpack.c.l.bf16 %v2179
      %v2230 = vld [vmem:[%s5] sm:$0xff]
      %v2231 = vld [vmem:[%s5 + $0x8] sm:$0xff]
      %v2232 = vld [vmem:[%s5 + $0x10] sm:$0xff]
      %v2233 = vld [vmem:[%s5 + $0x18] sm:$0xff]
      %v2234 = vld [vmem:[%s5 + $0x20] sm:$0xff]
      %v2235 = vld [vmem:[%s5 + $0x28] sm:$0xff]
      %v2236 = vld [vmem:[%s5 + $0x30] sm:$0xff]
      %v2237 = vld [vmem:[%s5 + $0x38] sm:$0xff]
      %v2238 = vld [vmem:[%s5 + $0x40] sm:$0xff]
      %2240 = vset.pattern.permute.xlu0 0
      %2241 = vperm.xlu0 %2240, %v2230
      %v2242 = vpop.permute.xlu0 %2241
      %2245 = vset.pattern.permute.xlu0 0
      %2246 = vperm.xlu0 %2245, %v2231
      %v2247 = vpop.permute.xlu0 %2246
      %2250 = vset.pattern.permute.xlu0 0
      %2251 = vperm.xlu0 %2250, %v2232
      %v2252 = vpop.permute.xlu0 %2251
      %2255 = vset.pattern.permute.xlu0 0
      %2256 = vperm.xlu0 %2255, %v2233
      %v2257 = vpop.permute.xlu0 %2256
      %2260 = vset.pattern.permute.xlu0 0
      %2261 = vperm.xlu0 %2260, %v2234
      %v2262 = vpop.permute.xlu0 %2261
      %2265 = vset.pattern.permute.xlu0 0
      %2266 = vperm.xlu0 %2265, %v2235
      %v2267 = vpop.permute.xlu0 %2266
      %2270 = vset.pattern.permute.xlu0 0
      %2271 = vperm.xlu0 %2270, %v2236
      %v2272 = vpop.permute.xlu0 %2271
      %2275 = vset.pattern.permute.xlu0 0
      %2276 = vperm.xlu0 %2275, %v2237
      %v2277 = vpop.permute.xlu0 %2276
      %2280 = vset.pattern.permute.xlu0 0
      %2281 = vperm.xlu0 %2280, %v2238
      %v2282 = vpop.permute.xlu0 %2281
      %v2284 = vmul.f32 %v2221, %v2242
      %v2285 = vmul.f32 %v2222, %v2247
      %v2286 = vmul.f32 %v2223, %v2252
      %v2287 = vmul.f32 %v2224, %v2257
      %v2288 = vmul.f32 %v2225, %v2262
      %v2289 = vmul.f32 %v2226, %v2267
      %v2290 = vmul.f32 %v2227, %v2272
      %v2291 = vmul.f32 %v2228, %v2277
      %v2292 = vmul.f32 %v2229, %v2282
      %v2293 = vadd.f32 %v2284, %v2285
      %v2294 = vadd.f32 %v2293, %v2286
      %v2295 = vadd.f32 %v2294, %v2287
      %v2296 = vadd.f32 %v2295, %v2288
      %v2297 = vadd.f32 %v2296, %v2289
      %v2298 = vadd.f32 %v2297, %v2290
      %v2299 = vadd.f32 %v2298, %v2291
      %v2300 = vadd.f32 %v2299, %v2292
      %v2301 = vrot.slane %v2300, 4
      %v2302 = vadd.f32 %v2300, %v2301
      %v2303 = vrot.slane %v2302, 2
      %v2304 = vadd.f32 %v2302, %v2303
      %v2305 = vrot.slane %v2304, 1
      %v2306 = vadd.f32 %v2304, %v2305
      %v2307 = vadd.f32 %v2306, 0.0
      %v2308 = vmul.f32 %v2284, %v2221
      %v2309 = vmul.f32 %v2285, %v2222
      %v2310 = vmul.f32 %v2286, %v2223
      %v2311 = vmul.f32 %v2287, %v2224
      %v2312 = vmul.f32 %v2288, %v2225
      %v2313 = vmul.f32 %v2289, %v2226
      %v2314 = vmul.f32 %v2290, %v2227
      %v2315 = vmul.f32 %v2291, %v2228
      %v2316 = vmul.f32 %v2292, %v2229
      %v2317 = vadd.f32 %v2308, %v2309
      %v2318 = vadd.f32 %v2317, %v2310
      %v2319 = vadd.f32 %v2318, %v2311
      %v2320 = vadd.f32 %v2319, %v2312
      %v2321 = vadd.f32 %v2320, %v2313
      %v2322 = vadd.f32 %v2321, %v2314
      %v2323 = vadd.f32 %v2322, %v2315
      %v2324 = vadd.f32 %v2323, %v2316
      %v2325 = vrot.slane %v2324, 4
      %v2326 = vadd.f32 %v2324, %v2325
      %v2327 = vrot.slane %v2326, 2
      %v2328 = vadd.f32 %v2326, %v2327
      %v2329 = vrot.slane %v2328, 1
      %v2330 = vadd.f32 %v2328, %v2329
      %v2331 = vadd.f32 %v2330, 0.0
      %2332 = vst [vmem:[%s394] sm:$0x1] %v2307
      %2333 = vst [vmem:[%s394 + $0x1] sm:$0x1] %v2331
      %p2334 = scmp.lt.s32.totalorder %s23, 1
      %s2335 = scalar_select %p2334, %s23, 1
      %p2336 = scmp.lt.s32.totalorder %s24, 0
      %s2337 = scalar_select %p2336, %s24, 0
      %s2338 = smul.addr %s2335, 9
      %s2339 = sadd.s32 %s2337, %s2338
      %s2340 = smul.addr %s2339, 4
      %s2341 = scalar_lea.vmem %s6, %s2340
      %p2342 = scmp.lt.s32.totalorder %s23, 1
      %s2343 = scalar_select %p2342, %s23, 1
      %p2344 = scmp.lt.s32.totalorder %s24, 0
      %s2345 = scalar_select %p2344, %s24, 0
      %s2346 = sadd.s32 %s2345, %s2343
      %s2347 = smul.addr %s2346, 2
      %s2348 = scalar_lea.vmem %s7, %s2347
      // Predicated region
      $region45: #{a_call__.5} parent=43 // pred_check
        %p2349 = pneg %p202
      $region46: #{a_call__.5} parent=43 // pred_check_branch
        %2351 = sbr.rel (%p2349) target = $region48
      $region47: #{a_call__.5} parent=43 // pred_region
        _
      $region48: #{a_call__.5} parent=43 // pred_fallthru
        _
      // Predicated region
      $region49: #{a_call__.5} parent=43 // pred_check
        %p2352 = pneg %p230
      $region50: #{a_call__.5} parent=43 // pred_check_branch
        %2354 = sbr.rel (%p2352) target = $region52
      $region51: #{a_call__.5} parent=43 // pred_region
        _
      $region52: #{a_call__.5} parent=43 // pred_fallthru
        _
    $region44: #{a_call__.5} parent=5 // pred_fallthru
      _
    %p2355 = scmp.le.s32.totalorder 2, %s14
    // Predicated region
    $region53: #{a_call__.5} parent=5 // pred_check
      %p2356 = pneg %p2355
    $region54: #{a_call__.5} parent=5 // pred_check_branch
      %2358 = sbr.rel (%p2356) target = $region56
    $region55: #{a_call__.5} parent=5 // pred_region
      %s2359 = ssub.s32 %s14, 2
      // Predicated region
      $region57: #{a_call__.5} parent=55 // pred_check
        %p2360 = pneg %p208
      $region58: #{a_call__.5} parent=55 // pred_check_branch
        %2362 = sbr.rel (%p2360) target = $region60
      $region59: #{a_call__.5} parent=55 // pred_region
        %p2363 = scmp.lt.s32.totalorder %s25, 1
        %s2364 = scalar_select %p2363, %s25, 1
        %p2365 = scmp.lt.s32.totalorder %s26, 0
        %s2366 = scalar_select %p2365, %s26, 0
        %s2367 = smul.addr %s2364, 9
        %s2368 = sadd.s32 %s2366, %s2367
        %s2369 = smul.addr %s2368, 4
        %s2370 = scalar_lea.vmem %s6, %s2369
      $region60: #{a_call__.5} parent=55 // pred_fallthru
        _
      // Predicated region
      $region61: #{a_call__.5} parent=55 // pred_check
        %p2371 = pneg %p236
      $region62: #{a_call__.5} parent=55 // pred_check_branch
        %2373 = sbr.rel (%p2371) target = $region64
      $region63: #{a_call__.5} parent=55 // pred_region
        %p2374 = scmp.lt.s32.totalorder %s25, 1
        %s2375 = scalar_select %p2374, %s25, 1
        %p2376 = scmp.lt.s32.totalorder %s26, 0
        %s2377 = scalar_select %p2376, %s26, 0
        %s2378 = sadd.s32 %s2377, %s2375
        %s2379 = smul.addr %s2378, 2
        %s2380 = scalar_lea.vmem %s7, %s2379
      $region64: #{a_call__.5} parent=55 // pred_fallthru
        _
    $region56: #{a_call__.5} parent=5 // pred_fallthru
      _
  $region6: #{a_call__.5} parent=0 // loop_footer
    %s18 = sadd.s32 1, %s14
  $region7: #{a_call__.5} parent=0 // loop_footer_branch
    %13 = sbr.rel target = $region3
  $region8: #{a_call__.5} parent=0 // loop_exit
    _

// kernel: a_call__.6
$region0: #{a_call__.6}
  #allocation0 [shape = 'u32[]', space=smem, size = 0x4, offset = 0x4, fixed_abs, tag = 'smem constant byte address 0x4 - core index']
  #allocation1 [shape = 'u32[144,128]{1,0:T(1,128)}', space=vmem, size = 0x12000, scoped, tag = 'internal scratch']
  %s0 = inlined_call_operand.vmem [shape: bf16[2,8,9,128], index: 0, kind: input, shape index: {}]
  %s1 = inlined_call_operand.vmem [shape: f32[1,128], index: 1, kind: input, shape index: {}]
  %s2 = inlined_call_operand.vmem [shape: f32[1,128], index: 2, kind: input, shape index: {}]
  %s3 = inlined_call_operand.vmem [shape: bf16[2,8,8,128], index: 3, kind: output, shape index: {}]
  %s4 = sld [smem:[#allocation0]]
  $region45: #{a_call__.6} parent=0
    _
  %s6 = ssub.s32 1, %s4
  %s7 = scalar_select 0, %s6, %s4
  loop: start=0, step=1, limit=4
  $region2: #{a_call__.6} parent=0 // loop_pre_header
    _
  $region3: #{a_call__.6} parent=0 // loop_header
    %s9 = sphi 0, %s13
    %p10 = scmp.ge.s32.totalorder %s9, 4
    %s16 = sphi 0, %s28
    %s17 = sphi 0, %s24
    %s18 = sphi 0, %s16
    %s19 = sphi 0, %s17
    %s20 = sphi 0, %s18
    %s21 = sphi 0, %s19
    %s33 = sphi 0, %s35
    %s36 = sphi 0, %s33
    %s37 = sphi 0, %s36
    %s53 = sphi 0, %s37
    %s57 = sphi 0, %s57
    %s59 = sphi 0, %s57
    %s60 = sphi 0, %s59
    %s74 = sphi 0, %s60
    %s78 = sphi 0, %s78
    %s80 = sphi 0, %s78
    %s81 = sphi 0, %s80
    %s95 = sphi 0, %s81
    %s103 = sphi 0, %s105
    %s106 = sphi 0, %s103
    %s107 = sphi 0, %s106
    %s123 = sphi 0, %s107
  $region4: #{a_call__.6} parent=0 // loop_header_branch
    %12 = sbr.rel (%p10) target = $region8
  $region5: #{a_call__.6} parent=0 // loop_body
    %s14 = ssub.s32 %s9, 1
    %s15 = ssub.s32 %s9, 2
    %s22 = sadd.s32 1, %s17
    %p23 = scmp.ge.s32.totalorder %s22, 1
    %s24 = scalar_select %p23, 0, %s22
    %s25 = sadd.s32 1, %s16
    %s26 = scalar_select %p23, %s25, %s16
    %p27 = scmp.ge.s32.totalorder %s26, 2
    %s28 = scalar_select %p27, 0, %s26
    %s29 = ssub.s32 %s16, %s28
    %s30 = ssub.s32 %s17, %s24
    %s31 = sor.u32 %s29, %s30
    %p32 = scmp.eq.s32.totalorder %s31, 0
    %s34 = sadd.s32 %s33, 1
    %s35 = scalar_select %p32, %s33, %s34
    %p38 = pneg %p32
    %p39 = scmp.eq.s32.totalorder %s9, 1
    %p40 = por %p38, %p39
    %p41 = scmp.ne.s32.totalorder %s33, %s36
    %p42 = scmp.eq.s32.totalorder %s9, 0
    %p43 = por %p41, %p42
    %p44 = scmp.ne.s32.totalorder %s33, %s36
    %p45 = scmp.eq.s32.totalorder %s14, 1
    %p46 = por %p44, %p45
    %p47 = scmp.ne.s32.totalorder %s36, %s37
    %p48 = scmp.eq.s32.totalorder %s14, 0
    %p49 = por %p47, %p48
    %p50 = scmp.ne.s32.totalorder %s36, %s37
    %p51 = scmp.eq.s32.totalorder %s15, 1
    %p52 = por %p50, %p51
    %p54 = scmp.ne.s32.totalorder %s37, %s53
    %p55 = scmp.eq.s32.totalorder %s15, 0
    %p56 = por %p54, %p55
    %s58 = sadd.s32 %s57, 1
    %p61 = scmp.eq.s32.totalorder %s9, 1
    %p62 = scmp.ne.s32.totalorder %s57, %s59
    %p63 = scmp.eq.s32.totalorder %s9, 0
    %p64 = por %p62, %p63
    %p65 = scmp.ne.s32.totalorder %s57, %s59
    %p66 = scmp.eq.s32.totalorder %s14, 1
    %p67 = por %p65, %p66
    %p68 = scmp.ne.s32.totalorder %s59, %s60
    %p69 = scmp.eq.s32.totalorder %s14, 0
    %p70 = por %p68, %p69
    %p71 = scmp.ne.s32.totalorder %s59, %s60
    %p72 = scmp.eq.s32.totalorder %s15, 1
    %p73 = por %p71, %p72
    %p75 = scmp.ne.s32.totalorder %s60, %s74
    %p76 = scmp.eq.s32.totalorder %s15, 0
    %p77 = por %p75, %p76
    %s79 = sadd.s32 %s78, 1
    %p82 = scmp.eq.s32.totalorder %s9, 1
    %p83 = scmp.ne.s32.totalorder %s78, %s80
    %p84 = scmp.eq.s32.totalorder %s9, 0
    %p85 = por %p83, %p84
    %p86 = scmp.ne.s32.totalorder %s78, %s80
    %p87 = scmp.eq.s32.totalorder %s14, 1
    %p88 = por %p86, %p87
    %p89 = scmp.ne.s32.totalorder %s80, %s81
    %p90 = scmp.eq.s32.totalorder %s14, 0
    %p91 = por %p89, %p90
    %p92 = scmp.ne.s32.totalorder %s80, %s81
    %p93 = scmp.eq.s32.totalorder %s15, 1
    %p94 = por %p92, %p93
    %p96 = scmp.ne.s32.totalorder %s81, %s95
    %p97 = scmp.eq.s32.totalorder %s15, 0
    %p98 = por %p96, %p97
    %s99 = ssub.s32 %s16, %s28
    %s100 = ssub.s32 %s17, %s24
    %s101 = sor.u32 %s99, %s100
    %p102 = scmp.eq.s32.totalorder %s101, 0
    %s104 = sadd.s32 %s103, 1
    %s105 = scalar_select %p102, %s103, %s104
    %p108 = pneg %p102
    %p109 = scmp.eq.s32.totalorder %s9, 1
    %p110 = por %p108, %p109
    %p111 = scmp.ne.s32.totalorder %s103, %s106
    %p112 = scmp.eq.s32.totalorder %s9, 0
    %p113 = por %p111, %p112
    %p114 = scmp.ne.s32.totalorder %s103, %s106
    %p115 = scmp.eq.s32.totalorder %s14, 1
    %p116 = por %p114, %p115
    %p117 = scmp.ne.s32.totalorder %s106, %s107
    %p118 = scmp.eq.s32.totalorder %s14, 0
    %p119 = por %p117, %p118
    %p120 = scmp.ne.s32.totalorder %s106, %s107
    %p121 = scmp.eq.s32.totalorder %s15, 1
    %p122 = por %p120, %p121
    %p124 = scmp.ne.s32.totalorder %s107, %s123
    %p125 = scmp.eq.s32.totalorder %s15, 0
    %p126 = por %p124, %p125
    %p127 = scmp.le.s32.totalorder 1, %s9
    %p128 = scmp.lt.s32.totalorder %s9, 3
    %p129 = pnand %p127, %p128
    %p130 = pneg %p129
    // Predicated region
    $region9: #{a_call__.6} parent=5 // pred_check
      _
    $region10: #{a_call__.6} parent=5 // pred_check_branch
      %132 = sbr.rel (%p129) target = $region12
    $region11: #{a_call__.6} parent=5 // pred_region
      %s133 = ssub.s32 %s9, 1
      // Predicated region
      $region13: #{a_call__.6} parent=11 // pred_check
        %p134 = pneg %p70
      $region14: #{a_call__.6} parent=11 // pred_check_branch
        %136 = sbr.rel (%p134) target = $region16
      $region15: #{a_call__.6} parent=11 // pred_region
        _
      $region16: #{a_call__.6} parent=11 // pred_fallthru
        _
      // Predicated region
      $region17: #{a_call__.6} parent=11 // pred_check
        %p137 = pneg %p91
      $region18: #{a_call__.6} parent=11 // pred_check_branch
        %139 = sbr.rel (%p137) target = $region20
      $region19: #{a_call__.6} parent=11 // pred_region
        _
      $region20: #{a_call__.6} parent=11 // pred_fallthru
        _
    $region12: #{a_call__.6} parent=5 // pred_fallthru
      _
    %p140 = scmp.lt.s32.totalorder %s9, 2
    // Predicated region
    $region21: #{a_call__.6} parent=5 // pred_check
      %p141 = pneg %p140
    $region22: #{a_call__.6} parent=5 // pred_check_branch
      %143 = sbr.rel (%p141) target = $region24
    $region23: #{a_call__.6} parent=5 // pred_region
      // Predicated region
      $region25: #{a_call__.6} parent=23 // pred_check
        %p144 = pneg %p43
      $region26: #{a_call__.6} parent=23 // pred_check_branch
        %146 = sbr.rel (%p144) target = $region28
      $region27: #{a_call__.6} parent=23 // pred_region
        %s147 = smul.u32 8, %s17
        %p148 = scmp.lt.s32.totalorder %s16, 1
        %s149 = scalar_select %p148, %s16, 1
        %p150 = scmp.lt.s32.totalorder %s147, 7
        %s151 = scalar_select %p150, %s147, 7
        %s152 = smul.addr %s151, 2
        %s153 = smul.addr %s149, 16
        %s154 = sadd.s32 %s152, %s153
        %s155 = smul.addr %s154, 4
        %s156 = scalar_lea.vmem %s0, %s155
        %s157 = smul.u32 8, %s17
      $region28: #{a_call__.6} parent=23 // pred_fallthru
        _
    $region24: #{a_call__.6} parent=5 // pred_fallthru
      _
    %p158 = scmp.le.s32.totalorder 1, %s9
    %p159 = scmp.lt.s32.totalorder %s9, 3
    %p160 = pnand %p158, %p159
    %p161 = pneg %p160
    // Predicated region
    $region29: #{a_call__.6} parent=5 // pred_check
      _
    $region30: #{a_call__.6} parent=5 // pred_check_branch
      %163 = sbr.rel (%p160) target = $region32
    $region31: #{a_call__.6} parent=5 // pred_region
      %s164 = ssub.s32 %s9, 1
      %s165 = smul.u32 8, %s19
      %p166 = scmp.lt.s32.totalorder %s18, 1
      %s167 = scalar_select %p166, %s18, 1
      %p168 = scmp.lt.s32.totalorder %s165, 7
      %s169 = scalar_select %p168, %s165, 7
      %s170 = smul.addr %s169, 2
      %s171 = smul.addr %s167, 16
      %s172 = sadd.s32 %s170, %s171
      %s173 = smul.addr %s172, 4
      %s174 = scalar_lea.vmem %s0, %s173
      %p175 = pneg %p49
      %p176 = pneg %p46
      %p177 = pneg %p70
      %p178 = pneg %p67
      %p179 = pneg %p91
      %p180 = pneg %p88
      %p181 = pneg %p119
      %p182 = pneg %p116
      %s183 = smul.u32 8, %s19
      %p184 = scmp.lt.s32.totalorder %s18, 1
      %s185 = scalar_select %p184, %s18, 1
      %p186 = scmp.lt.s32.totalorder %s183, 7
      %s187 = scalar_select %p186, %s183, 7
      %s188 = smul.addr %s185, 8
      %s189 = sadd.s32 %s187, %s188
      %s190 = smul.addr %s189, 4
      %s191 = scalar_lea.vmem %s3, %s190
      %s192 = smul.u32 8, %s19
      %p193 = scmp.lt.s32.totalorder %s18, 1
      %s194 = scalar_select %p193, %s18, 1
      %p195 = scmp.lt.s32.totalorder %s192, 7
      %s196 = scalar_select %p195, %s192, 7
      %s197 = smul.addr %s196, 2
      %s198 = smul.addr %s194, 16
      %s199 = sadd.s32 %s197, %s198
      %s200 = smul.addr %s199, 4
      %s201 = scalar_lea.vmem %s0, %s200
      %s202 = smul.u32 8, %s19
      %s203 = smul.u32 8, %s19
      %p204 = scmp.lt.s32.totalorder %s18, 1
      %s205 = scalar_select %p204, %s18, 1
      %p206 = scmp.lt.s32.totalorder %s203, 7
      %s207 = scalar_select %p206, %s203, 7
      %s208 = smul.addr %s205, 8
      %s209 = sadd.s32 %s207, %s208
      %s210 = smul.addr %s209, 4
      %s211 = scalar_lea.vmem %s3, %s210
      %s212 = smul.u32 8, %s19
      %v213 = vld [vmem:[%s1] sm:$0x1]
      %v214 = vld [vmem:[%s2] sm:$0x1]
      %v215 = vld [vmem:[%s201] sm:$0xf]
      %v216 = vld [vmem:[%s201 + $0x8] sm:$0xf]
      %v217 = vld [vmem:[%s201 + $0x10] sm:$0xf]
      %v218 = vld [vmem:[%s201 + $0x18] sm:$0xf]
      %v219 = vld [vmem:[%s201 + $0x20] sm:$0xf]
      %v220 = vld [vmem:[%s201 + $0x28] sm:$0xf]
      %v221 = vld [vmem:[%s201 + $0x30] sm:$0xf]
      %v222 = vld [vmem:[%s201 + $0x38] sm:$0xf]
      %v223 = vunpack.c.l.bf16 %v215
      %v224 = vunpack.c.l.bf16 %v216
      %v225 = vunpack.c.l.bf16 %v217
      %v226 = vunpack.c.l.bf16 %v218
      %v227 = vunpack.c.l.bf16 %v219
      %v228 = vunpack.c.l.bf16 %v220
      %v229 = vunpack.c.l.bf16 %v221
      %v230 = vunpack.c.l.bf16 %v222
      %v232 = vlaneseq
      %v233 = vshrl.u32 %v232, 7
      %v234 = vsub.s32 0, %v233
      %v235 = vrot.slane %v213, %v234
      %v237 = vmul.f32 %v223, %v235
      %v238 = vmul.f32 %v224, %v235
      %v239 = vmul.f32 %v225, %v235
      %v240 = vmul.f32 %v226, %v235
      %v241 = vmul.f32 %v227, %v235
      %v242 = vmul.f32 %v228, %v235
      %v243 = vmul.f32 %v229, %v235
      %v244 = vmul.f32 %v230, %v235
      %v246 = vlaneseq
      %v247 = vshrl.u32 %v246, 7
      %v248 = vsub.s32 0, %v247
      %v249 = vrot.slane %v214, %v248
      %v251 = vadd.f32 %v237, %v249
      %v252 = vadd.f32 %v238, %v249
      %v253 = vadd.f32 %v239, %v249
      %v254 = vadd.f32 %v240, %v249
      %v255 = vadd.f32 %v241, %v249
      %v256 = vadd.f32 %v242, %v249
      %v257 = vadd.f32 %v243, %v249
      %v258 = vadd.f32 %v244, %v249
      %v259 = vmax.f32 %v251, 0.0
      %v260 = vmax.f32 %v252, 0.0
      %v261 = vmax.f32 %v253, 0.0
      %v262 = vmax.f32 %v254, 0.0
      %v263 = vmax.f32 %v255, 0.0
      %v264 = vmax.f32 %v256, 0.0
      %v265 = vmax.f32 %v257, 0.0
      %v266 = vmax.f32 %v258, 0.0
      %v267 = vpack.c.bf16 %v259, %v259
      %v268 = vpack.c.bf16 %v260, %v260
      %v269 = vpack.c.bf16 %v261, %v261
      %v270 = vpack.c.bf16 %v262, %v262
      %v271 = vpack.c.bf16 %v263, %v263
      %v272 = vpack.c.bf16 %v264, %v264
      %v273 = vpack.c.bf16 %v265, %v265
      %v274 = vpack.c.bf16 %v266, %v266
      %275 = vst [vmem:[%s211] sm:$0xf] %v267
      %276 = vst [vmem:[%s211 + $0x4] sm:$0xf] %v268
      %277 = vst [vmem:[%s211 + $0x8] sm:$0xf] %v269
      %278 = vst [vmem:[%s211 + $0xc] sm:$0xf] %v270
      %279 = vst [vmem:[%s211 + $0x10] sm:$0xf] %v271
      %280 = vst [vmem:[%s211 + $0x14] sm:$0xf] %v272
      %281 = vst [vmem:[%s211 + $0x18] sm:$0xf] %v273
      %282 = vst [vmem:[%s211 + $0x1c] sm:$0xf] %v274
      %s283 = smul.u32 8, %s19
      %p284 = scmp.lt.s32.totalorder %s18, 1
      %s285 = scalar_select %p284, %s18, 1
      %p286 = scmp.lt.s32.totalorder %s283, 7
      %s287 = scalar_select %p286, %s283, 7
      %s288 = smul.addr %s285, 8
      %s289 = sadd.s32 %s287, %s288
      %s290 = smul.addr %s289, 4
      %s291 = scalar_lea.vmem %s3, %s290
      // Predicated region
      $region33: #{a_call__.6} parent=31 // pred_check
        %p292 = pneg %p116
      $region34: #{a_call__.6} parent=31 // pred_check_branch
        %294 = sbr.rel (%p292) target = $region36
      $region35: #{a_call__.6} parent=31 // pred_region
        %s295 = smul.u32 8, %s19
      $region36: #{a_call__.6} parent=31 // pred_fallthru
        _
    $region32: #{a_call__.6} parent=5 // pred_fallthru
      _
    %p296 = scmp.le.s32.totalorder 2, %s9
    // Predicated region
    $region37: #{a_call__.6} parent=5 // pred_check
      %p297 = pneg %p296
    $region38: #{a_call__.6} parent=5 // pred_check_branch
      %299 = sbr.rel (%p297) target = $region40
    $region39: #{a_call__.6} parent=5 // pred_region
      %s300 = ssub.s32 %s9, 2
      // Predicated region
      $region41: #{a_call__.6} parent=39 // pred_check
        %p301 = pneg %p122
      $region42: #{a_call__.6} parent=39 // pred_check_branch
        %303 = sbr.rel (%p301) target = $region44
      $region43: #{a_call__.6} parent=39 // pred_region
        %s304 = smul.u32 8, %s21
        %p305 = scmp.lt.s32.totalorder %s20, 1
        %s306 = scalar_select %p305, %s20, 1
        %p307 = scmp.lt.s32.totalorder %s304, 7
        %s308 = scalar_select %p307, %s304, 7
        %s309 = smul.addr %s306, 8
        %s310 = sadd.s32 %s308, %s309
        %s311 = smul.addr %s310, 4
        %s312 = scalar_lea.vmem %s3, %s311
      $region44: #{a_call__.6} parent=39 // pred_fallthru
        _
    $region40: #{a_call__.6} parent=5 // pred_fallthru
      _
  $region6: #{a_call__.6} parent=0 // loop_footer
    %s13 = sadd.s32 1, %s9
  $region7: #{a_call__.6} parent=0 // loop_footer_branch
    %8 = sbr.rel target = $region3
  $region8: #{a_call__.6} parent=0 // loop_exit
    _

// kernel: a_call__.9
$region0: #{a_call__.9}
  #allocation0 [shape = 'u32[]', space=smem, size = 0x4, offset = 0x4, fixed_abs, tag = 'smem constant byte address 0x4 - core index']
  #allocation1 [shape = 'u32[144,128]{1,0:T(1,128)}', space=vmem, size = 0x12000, scoped, tag = 'internal scratch']
  %s0 = inlined_call_operand.vmem [shape: bf16[2,8,10,128], index: 0, kind: input, shape index: {}]
  %s1 = inlined_call_operand.vmem [shape: f32[1,128], index: 1, kind: input, shape index: {}]
  %s2 = inlined_call_operand.vmem [shape: f32[1,128], index: 2, kind: input, shape index: {}]
  %s3 = inlined_call_operand.vmem [shape: bf16[2,8,8,128], index: 3, kind: input, shape index: {}]
  %s4 = inlined_call_operand.vmem [shape: f32[1,128], index: 4, kind: input, shape index: {}]
  %s5 = inlined_call_operand.vmem [shape: f32[1,128], index: 5, kind: input, shape index: {}]
  %s6 = inlined_call_operand.vmem [shape: bf16[2,8,8,128], index: 6, kind: output, shape index: {}]
  %s7 = sld [smem:[#allocation0]]
  $region57: #{a_call__.9} parent=0
    _
  %s9 = ssub.s32 1, %s7
  %s10 = scalar_select 0, %s9, %s7
  loop: start=0, step=1, limit=4
  $region2: #{a_call__.9} parent=0 // loop_pre_header
    _
  $region3: #{a_call__.9} parent=0 // loop_header
    %s12 = sphi 0, %s16
    %p13 = scmp.ge.s32.totalorder %s12, 4
    %s19 = sphi 0, %s31
    %s20 = sphi 0, %s27
    %s21 = sphi 0, %s19
    %s22 = sphi 0, %s20
    %s23 = sphi 0, %s21
    %s24 = sphi 0, %s22
    %s36 = sphi 0, %s38
    %s39 = sphi 0, %s36
    %s40 = sphi 0, %s39
    %s56 = sphi 0, %s40
    %s60 = sphi 0, %s60
    %s62 = sphi 0, %s60
    %s63 = sphi 0, %s62
    %s77 = sphi 0, %s63
    %s81 = sphi 0, %s81
    %s83 = sphi 0, %s81
    %s84 = sphi 0, %s83
    %s98 = sphi 0, %s84
    %s106 = sphi 0, %s108
    %s109 = sphi 0, %s106
    %s110 = sphi 0, %s109
    %s126 = sphi 0, %s110
    %s130 = sphi 0, %s130
    %s132 = sphi 0, %s130
    %s133 = sphi 0, %s132
    %s147 = sphi 0, %s133
    %s151 = sphi 0, %s151
    %s153 = sphi 0, %s151
    %s154 = sphi 0, %s153
    %s168 = sphi 0, %s154
    %s176 = sphi 0, %s178
    %s179 = sphi 0, %s176
    %s180 = sphi 0, %s179
    %s196 = sphi 0, %s180
  $region4: #{a_call__.9} parent=0 // loop_header_branch
    %15 = sbr.rel (%p13) target = $region8
  $region5: #{a_call__.9} parent=0 // loop_body
    %s17 = ssub.s32 %s12, 1
    %s18 = ssub.s32 %s12, 2
    %s25 = sadd.s32 1, %s20
    %p26 = scmp.ge.s32.totalorder %s25, 1
    %s27 = scalar_select %p26, 0, %s25
    %s28 = sadd.s32 1, %s19
    %s29 = scalar_select %p26, %s28, %s19
    %p30 = scmp.ge.s32.totalorder %s29, 2
    %s31 = scalar_select %p30, 0, %s29
    %s32 = ssub.s32 %s19, %s31
    %s33 = ssub.s32 %s20, %s27
    %s34 = sor.u32 %s32, %s33
    %p35 = scmp.eq.s32.totalorder %s34, 0
    %s37 = sadd.s32 %s36, 1
    %s38 = scalar_select %p35, %s36, %s37
    %p41 = pneg %p35
    %p42 = scmp.eq.s32.totalorder %s12, 1
    %p43 = por %p41, %p42
    %p44 = scmp.ne.s32.totalorder %s36, %s39
    %p45 = scmp.eq.s32.totalorder %s12, 0
    %p46 = por %p44, %p45
    %p47 = scmp.ne.s32.totalorder %s36, %s39
    %p48 = scmp.eq.s32.totalorder %s17, 1
    %p49 = por %p47, %p48
    %p50 = scmp.ne.s32.totalorder %s39, %s40
    %p51 = scmp.eq.s32.totalorder %s17, 0
    %p52 = por %p50, %p51
    %p53 = scmp.ne.s32.totalorder %s39, %s40
    %p54 = scmp.eq.s32.totalorder %s18, 1
    %p55 = por %p53, %p54
    %p57 = scmp.ne.s32.totalorder %s40, %s56
    %p58 = scmp.eq.s32.totalorder %s18, 0
    %p59 = por %p57, %p58
    %s61 = sadd.s32 %s60, 1
    %p64 = scmp.eq.s32.totalorder %s12, 1
    %p65 = scmp.ne.s32.totalorder %s60, %s62
    %p66 = scmp.eq.s32.totalorder %s12, 0
    %p67 = por %p65, %p66
    %p68 = scmp.ne.s32.totalorder %s60, %s62
    %p69 = scmp.eq.s32.totalorder %s17, 1
    %p70 = por %p68, %p69
    %p71 = scmp.ne.s32.totalorder %s62, %s63
    %p72 = scmp.eq.s32.totalorder %s17, 0
    %p73 = por %p71, %p72
    %p74 = scmp.ne.s32.totalorder %s62, %s63
    %p75 = scmp.eq.s32.totalorder %s18, 1
    %p76 = por %p74, %p75
    %p78 = scmp.ne.s32.totalorder %s63, %s77
    %p79 = scmp.eq.s32.totalorder %s18, 0
    %p80 = por %p78, %p79
    %s82 = sadd.s32 %s81, 1
    %p85 = scmp.eq.s32.totalorder %s12, 1
    %p86 = scmp.ne.s32.totalorder %s81, %s83
    %p87 = scmp.eq.s32.totalorder %s12, 0
    %p88 = por %p86, %p87
    %p89 = scmp.ne.s32.totalorder %s81, %s83
    %p90 = scmp.eq.s32.totalorder %s17, 1
    %p91 = por %p89, %p90
    %p92 = scmp.ne.s32.totalorder %s83, %s84
    %p93 = scmp.eq.s32.totalorder %s17, 0
    %p94 = por %p92, %p93
    %p95 = scmp.ne.s32.totalorder %s83, %s84
    %p96 = scmp.eq.s32.totalorder %s18, 1
    %p97 = por %p95, %p96
    %p99 = scmp.ne.s32.totalorder %s84, %s98
    %p100 = scmp.eq.s32.totalorder %s18, 0
    %p101 = por %p99, %p100
    %s102 = ssub.s32 %s19, %s31
    %s103 = ssub.s32 %s20, %s27
    %s104 = sor.u32 %s102, %s103
    %p105 = scmp.eq.s32.totalorder %s104, 0
    %s107 = sadd.s32 %s106, 1
    %s108 = scalar_select %p105, %s106, %s107
    %p111 = pneg %p105
    %p112 = scmp.eq.s32.totalorder %s12, 1
    %p113 = por %p111, %p112
    %p114 = scmp.ne.s32.totalorder %s106, %s109
    %p115 = scmp.eq.s32.totalorder %s12, 0
    %p116 = por %p114, %p115
    %p117 = scmp.ne.s32.totalorder %s106, %s109
    %p118 = scmp.eq.s32.totalorder %s17, 1
    %p119 = por %p117, %p118
    %p120 = scmp.ne.s32.totalorder %s109, %s110
    %p121 = scmp.eq.s32.totalorder %s17, 0
    %p122 = por %p120, %p121
    %p123 = scmp.ne.s32.totalorder %s109, %s110
    %p124 = scmp.eq.s32.totalorder %s18, 1
    %p125 = por %p123, %p124
    %p127 = scmp.ne.s32.totalorder %s110, %s126
    %p128 = scmp.eq.s32.totalorder %s18, 0
    %p129 = por %p127, %p128
    %s131 = sadd.s32 %s130, 1
    %p134 = scmp.eq.s32.totalorder %s12, 1
    %p135 = scmp.ne.s32.totalorder %s130, %s132
    %p136 = scmp.eq.s32.totalorder %s12, 0
    %p137 = por %p135, %p136
    %p138 = scmp.ne.s32.totalorder %s130, %s132
    %p139 = scmp.eq.s32.totalorder %s17, 1
    %p140 = por %p138, %p139
    %p141 = scmp.ne.s32.totalorder %s132, %s133
    %p142 = scmp.eq.s32.totalorder %s17, 0
    %p143 = por %p141, %p142
    %p144 = scmp.ne.s32.totalorder %s132, %s133
    %p145 = scmp.eq.s32.totalorder %s18, 1
    %p146 = por %p144, %p145
    %p148 = scmp.ne.s32.totalorder %s133, %s147
    %p149 = scmp.eq.s32.totalorder %s18, 0
    %p150 = por %p148, %p149
    %s152 = sadd.s32 %s151, 1
    %p155 = scmp.eq.s32.totalorder %s12, 1
    %p156 = scmp.ne.s32.totalorder %s151, %s153
    %p157 = scmp.eq.s32.totalorder %s12, 0
    %p158 = por %p156, %p157
    %p159 = scmp.ne.s32.totalorder %s151, %s153
    %p160 = scmp.eq.s32.totalorder %s17, 1
    %p161 = por %p159, %p160
    %p162 = scmp.ne.s32.totalorder %s153, %s154
    %p163 = scmp.eq.s32.totalorder %s17, 0
    %p164 = por %p162, %p163
    %p165 = scmp.ne.s32.totalorder %s153, %s154
    %p166 = scmp.eq.s32.totalorder %s18, 1
    %p167 = por %p165, %p166
    %p169 = scmp.ne.s32.totalorder %s154, %s168
    %p170 = scmp.eq.s32.totalorder %s18, 0
    %p171 = por %p169, %p170
    %s172 = ssub.s32 %s19, %s31
    %s173 = ssub.s32 %s20, %s27
    %s174 = sor.u32 %s172, %s173
    %p175 = scmp.eq.s32.totalorder %s174, 0
    %s177 = sadd.s32 %s176, 1
    %s178 = scalar_select %p175, %s176, %s177
    %p181 = pneg %p175
    %p182 = scmp.eq.s32.totalorder %s12, 1
    %p183 = por %p181, %p182
    %p184 = scmp.ne.s32.totalorder %s176, %s179
    %p185 = scmp.eq.s32.totalorder %s12, 0
    %p186 = por %p184, %p185
    %p187 = scmp.ne.s32.totalorder %s176, %s179
    %p188 = scmp.eq.s32.totalorder %s17, 1
    %p189 = por %p187, %p188
    %p190 = scmp.ne.s32.totalorder %s179, %s180
    %p191 = scmp.eq.s32.totalorder %s17, 0
    %p192 = por %p190, %p191
    %p193 = scmp.ne.s32.totalorder %s179, %s180
    %p194 = scmp.eq.s32.totalorder %s18, 1
    %p195 = por %p193, %p194
    %p197 = scmp.ne.s32.totalorder %s180, %s196
    %p198 = scmp.eq.s32.totalorder %s18, 0
    %p199 = por %p197, %p198
    %p200 = scmp.le.s32.totalorder 1, %s12
    %p201 = scmp.lt.s32.totalorder %s12, 3
    %p202 = pnand %p200, %p201
    %p203 = pneg %p202
    // Predicated region
    $region9: #{a_call__.9} parent=5 // pred_check
      _
    $region10: #{a_call__.9} parent=5 // pred_check_branch
      %205 = sbr.rel (%p202) target = $region12
    $region11: #{a_call__.9} parent=5 // pred_region
      %s206 = ssub.s32 %s12, 1
      // Predicated region
      $region13: #{a_call__.9} parent=11 // pred_check
        %p207 = pneg %p73
      $region14: #{a_call__.9} parent=11 // pred_check_branch
        %209 = sbr.rel (%p207) target = $region16
      $region15: #{a_call__.9} parent=11 // pred_region
        _
      $region16: #{a_call__.9} parent=11 // pred_fallthru
        _
      // Predicated region
      $region17: #{a_call__.9} parent=11 // pred_check
        %p210 = pneg %p94
      $region18: #{a_call__.9} parent=11 // pred_check_branch
        %212 = sbr.rel (%p210) target = $region20
      $region19: #{a_call__.9} parent=11 // pred_region
        _
      $region20: #{a_call__.9} parent=11 // pred_fallthru
        _
      // Predicated region
      $region21: #{a_call__.9} parent=11 // pred_check
        %p213 = pneg %p143
      $region22: #{a_call__.9} parent=11 // pred_check_branch
        %215 = sbr.rel (%p213) target = $region24
      $region23: #{a_call__.9} parent=11 // pred_region
        _
      $region24: #{a_call__.9} parent=11 // pred_fallthru
        _
      // Predicated region
      $region25: #{a_call__.9} parent=11 // pred_check
        %p216 = pneg %p164
      $region26: #{a_call__.9} parent=11 // pred_check_branch
        %218 = sbr.rel (%p216) target = $region28
      $region27: #{a_call__.9} parent=11 // pred_region
        _
      $region28: #{a_call__.9} parent=11 // pred_fallthru
        _
    $region12: #{a_call__.9} parent=5 // pred_fallthru
      _
    %p219 = scmp.lt.s32.totalorder %s12, 2
    // Predicated region
    $region29: #{a_call__.9} parent=5 // pred_check
      %p220 = pneg %p219
    $region30: #{a_call__.9} parent=5 // pred_check_branch
      %222 = sbr.rel (%p220) target = $region32
    $region31: #{a_call__.9} parent=5 // pred_region
      // Predicated region
      $region33: #{a_call__.9} parent=31 // pred_check
        %p223 = pneg %p46
      $region34: #{a_call__.9} parent=31 // pred_check_branch
        %225 = sbr.rel (%p223) target = $region36
      $region35: #{a_call__.9} parent=31 // pred_region
        %s226 = smul.u32 8, %s20
        %p227 = scmp.lt.s32.totalorder %s19, 1
        %s228 = scalar_select %p227, %s19, 1
        %p229 = scmp.lt.s32.totalorder %s226, 7
        %s230 = scalar_select %p229, %s226, 7
        %s231 = smul.addr %s230, 2
        %s232 = smul.addr %s228, 16
        %s233 = sadd.s32 %s231, %s232
        %s234 = smul.addr %s233, 4
        %s235 = scalar_lea.vmem %s0, %s234
        %s236 = smul.u32 8, %s20
      $region36: #{a_call__.9} parent=31 // pred_fallthru
        _
      // Predicated region
      $region37: #{a_call__.9} parent=31 // pred_check
        %p237 = pneg %p116
      $region38: #{a_call__.9} parent=31 // pred_check_branch
        %239 = sbr.rel (%p237) target = $region40
      $region39: #{a_call__.9} parent=31 // pred_region
        %s240 = smul.u32 8, %s20
        %p241 = scmp.lt.s32.totalorder %s19, 1
        %s242 = scalar_select %p241, %s19, 1
        %p243 = scmp.lt.s32.totalorder %s240, 7
        %s244 = scalar_select %p243, %s240, 7
        %s245 = smul.addr %s242, 8
        %s246 = sadd.s32 %s244, %s245
        %s247 = smul.addr %s246, 4
        %s248 = scalar_lea.vmem %s3, %s247
        %s249 = smul.u32 8, %s20
      $region40: #{a_call__.9} parent=31 // pred_fallthru
        _
    $region32: #{a_call__.9} parent=5 // pred_fallthru
      _
    %p250 = scmp.le.s32.totalorder 1, %s12
    %p251 = scmp.lt.s32.totalorder %s12, 3
    %p252 = pnand %p250, %p251
    %p253 = pneg %p252
    // Predicated region
    $region41: #{a_call__.9} parent=5 // pred_check
      _
    $region42: #{a_call__.9} parent=5 // pred_check_branch
      %255 = sbr.rel (%p252) target = $region44
    $region43: #{a_call__.9} parent=5 // pred_region
      %s256 = ssub.s32 %s12, 1
      %s257 = smul.u32 8, %s22
      %p258 = scmp.lt.s32.totalorder %s21, 1
      %s259 = scalar_select %p258, %s21, 1
      %p260 = scmp.lt.s32.totalorder %s257, 7
      %s261 = scalar_select %p260, %s257, 7
      %s262 = smul.addr %s261, 2
      %s263 = smul.addr %s259, 16
      %s264 = sadd.s32 %s262, %s263
      %s265 = smul.addr %s264, 4
      %s266 = scalar_lea.vmem %s0, %s265
      %p267 = pneg %p52
      %p268 = pneg %p49
      %p269 = pneg %p73
      %p270 = pneg %p70
      %p271 = pneg %p94
      %p272 = pneg %p91
      %s273 = smul.u32 8, %s22
      %p274 = scmp.lt.s32.totalorder %s21, 1
      %s275 = scalar_select %p274, %s21, 1
      %p276 = scmp.lt.s32.totalorder %s273, 7
      %s277 = scalar_select %p276, %s273, 7
      %s278 = smul.addr %s275, 8
      %s279 = sadd.s32 %s277, %s278
      %s280 = smul.addr %s279, 4
      %s281 = scalar_lea.vmem %s3, %s280
      %p282 = pneg %p122
      %p283 = pneg %p119
      %p284 = pneg %p143
      %p285 = pneg %p140
      %p286 = pneg %p164
      %p287 = pneg %p161
      %p288 = pneg %p192
      %p289 = pneg %p189
      %s290 = smul.u32 8, %s22
      %p291 = scmp.lt.s32.totalorder %s21, 1
      %s292 = scalar_select %p291, %s21, 1
      %p293 = scmp.lt.s32.totalorder %s290, 7
      %s294 = scalar_select %p293, %s290, 7
      %s295 = smul.addr %s292, 8
      %s296 = sadd.s32 %s294, %s295
      %s297 = smul.addr %s296, 4
      %s298 = scalar_lea.vmem %s6, %s297
      %s299 = smul.u32 8, %s22
      %p300 = scmp.lt.s32.totalorder %s21, 1
      %s301 = scalar_select %p300, %s21, 1
      %p302 = scmp.lt.s32.totalorder %s299, 7
      %s303 = scalar_select %p302, %s299, 7
      %s304 = smul.addr %s303, 2
      %s305 = smul.addr %s301, 16
      %s306 = sadd.s32 %s304, %s305
      %s307 = smul.addr %s306, 4
      %s308 = scalar_lea.vmem %s0, %s307
      %s309 = smul.u32 8, %s22
      %s310 = smul.u32 8, %s22
      %p311 = scmp.lt.s32.totalorder %s21, 1
      %s312 = scalar_select %p311, %s21, 1
      %p313 = scmp.lt.s32.totalorder %s310, 7
      %s314 = scalar_select %p313, %s310, 7
      %s315 = smul.addr %s312, 8
      %s316 = sadd.s32 %s314, %s315
      %s317 = smul.addr %s316, 4
      %s318 = scalar_lea.vmem %s3, %s317
      %s319 = smul.u32 8, %s22
      %s320 = smul.u32 8, %s22
      %p321 = scmp.lt.s32.totalorder %s21, 1
      %s322 = scalar_select %p321, %s21, 1
      %p323 = scmp.lt.s32.totalorder %s320, 7
      %s324 = scalar_select %p323, %s320, 7
      %s325 = smul.addr %s322, 8
      %s326 = sadd.s32 %s324, %s325
      %s327 = smul.addr %s326, 4
      %s328 = scalar_lea.vmem %s6, %s327
      %s329 = smul.u32 8, %s22
      %v330 = vld [vmem:[%s1] sm:$0x1]
      %v331 = vld [vmem:[%s2] sm:$0x1]
      %v332 = vld [vmem:[%s4] sm:$0x1]
      %v333 = vld [vmem:[%s5] sm:$0x1]
      %v334 = vld [vmem:[%s308] sm:$0xf]
      %v335 = vld [vmem:[%s308 + $0x8] sm:$0xf]
      %v336 = vld [vmem:[%s308 + $0x10] sm:$0xf]
      %v337 = vld [vmem:[%s308 + $0x18] sm:$0xf]
      %v338 = vld [vmem:[%s308 + $0x20] sm:$0xf]
      %v339 = vld [vmem:[%s308 + $0x28] sm:$0xf]
      %v340 = vld [vmem:[%s308 + $0x30] sm:$0xf]
      %v341 = vld [vmem:[%s308 + $0x38] sm:$0xf]
      %v342 = vunpack.c.l.bf16 %v334
      %v343 = vunpack.c.l.bf16 %v335
      %v344 = vunpack.c.l.bf16 %v336
      %v345 = vunpack.c.l.bf16 %v337
      %v346 = vunpack.c.l.bf16 %v338
      %v347 = vunpack.c.l.bf16 %v339
      %v348 = vunpack.c.l.bf16 %v340
      %v349 = vunpack.c.l.bf16 %v341
      %v350 = vld [vmem:[%s318] sm:$0xf]
      %v351 = vld [vmem:[%s318 + $0x4] sm:$0xf]
      %v352 = vld [vmem:[%s318 + $0x8] sm:$0xf]
      %v353 = vld [vmem:[%s318 + $0xc] sm:$0xf]
      %v354 = vld [vmem:[%s318 + $0x10] sm:$0xf]
      %v355 = vld [vmem:[%s318 + $0x14] sm:$0xf]
      %v356 = vld [vmem:[%s318 + $0x18] sm:$0xf]
      %v357 = vld [vmem:[%s318 + $0x1c] sm:$0xf]
      %v358 = vunpack.c.l.bf16 %v350
      %v359 = vunpack.c.l.bf16 %v351
      %v360 = vunpack.c.l.bf16 %v352
      %v361 = vunpack.c.l.bf16 %v353
      %v362 = vunpack.c.l.bf16 %v354
      %v363 = vunpack.c.l.bf16 %v355
      %v364 = vunpack.c.l.bf16 %v356
      %v365 = vunpack.c.l.bf16 %v357
      %v367 = vlaneseq
      %v368 = vshrl.u32 %v367, 7
      %v369 = vsub.s32 0, %v368
      %v370 = vrot.slane %v330, %v369
      %v372 = vmul.f32 %v342, %v370
      %v373 = vmul.f32 %v343, %v370
      %v374 = vmul.f32 %v344, %v370
      %v375 = vmul.f32 %v345, %v370
      %v376 = vmul.f32 %v346, %v370
      %v377 = vmul.f32 %v347, %v370
      %v378 = vmul.f32 %v348, %v370
      %v379 = vmul.f32 %v349, %v370
      %v381 = vlaneseq
      %v382 = vshrl.u32 %v381, 7
      %v383 = vsub.s32 0, %v382
      %v384 = vrot.slane %v331, %v383
      %v386 = vadd.f32 %v372, %v384
      %v387 = vadd.f32 %v373, %v384
      %v388 = vadd.f32 %v374, %v384
      %v389 = vadd.f32 %v375, %v384
      %v390 = vadd.f32 %v376, %v384
      %v391 = vadd.f32 %v377, %v384
      %v392 = vadd.f32 %v378, %v384
      %v393 = vadd.f32 %v379, %v384
      %v395 = vlaneseq
      %v396 = vshrl.u32 %v395, 7
      %v397 = vsub.s32 0, %v396
      %v398 = vrot.slane %v332, %v397
      %v400 = vmul.f32 %v358, %v398
      %v401 = vmul.f32 %v359, %v398
      %v402 = vmul.f32 %v360, %v398
      %v403 = vmul.f32 %v361, %v398
      %v404 = vmul.f32 %v362, %v398
      %v405 = vmul.f32 %v363, %v398
      %v406 = vmul.f32 %v364, %v398
      %v407 = vmul.f32 %v365, %v398
      %v408 = vadd.f32 %v386, %v400
      %v409 = vadd.f32 %v387, %v401
      %v410 = vadd.f32 %v388, %v402
      %v411 = vadd.f32 %v389, %v403
      %v412 = vadd.f32 %v390, %v404
      %v413 = vadd.f32 %v391, %v405
      %v414 = vadd.f32 %v392, %v406
      %v415 = vadd.f32 %v393, %v407
      %v417 = vlaneseq
      %v418 = vshrl.u32 %v417, 7
      %v419 = vsub.s32 0, %v418
      %v420 = vrot.slane %v333, %v419
      %v422 = vadd.f32 %v408, %v420
      %v423 = vadd.f32 %v409, %v420
      %v424 = vadd.f32 %v410, %v420
      %v425 = vadd.f32 %v411, %v420
      %v426 = vadd.f32 %v412, %v420
      %v427 = vadd.f32 %v413, %v420
      %v428 = vadd.f32 %v414, %v420
      %v429 = vadd.f32 %v415, %v420
      %v430 = vmax.f32 %v422, 0.0
      %v431 = vmax.f32 %v423, 0.0
      %v432 = vmax.f32 %v424, 0.0
      %v433 = vmax.f32 %v425, 0.0
      %v434 = vmax.f32 %v426, 0.0
      %v435 = vmax.f32 %v427, 0.0
      %v436 = vmax.f32 %v428, 0.0
      %v437 = vmax.f32 %v429, 0.0
      %v438 = vpack.c.bf16 %v430, %v430
      %v439 = vpack.c.bf16 %v431, %v431
      %v440 = vpack.c.bf16 %v432, %v432
      %v441 = vpack.c.bf16 %v433, %v433
      %v442 = vpack.c.bf16 %v434, %v434
      %v443 = vpack.c.bf16 %v435, %v435
      %v444 = vpack.c.bf16 %v436, %v436
      %v445 = vpack.c.bf16 %v437, %v437
      %446 = vst [vmem:[%s328] sm:$0xf] %v438
      %447 = vst [vmem:[%s328 + $0x4] sm:$0xf] %v439
      %448 = vst [vmem:[%s328 + $0x8] sm:$0xf] %v440
      %449 = vst [vmem:[%s328 + $0xc] sm:$0xf] %v441
      %450 = vst [vmem:[%s328 + $0x10] sm:$0xf] %v442
      %451 = vst [vmem:[%s328 + $0x14] sm:$0xf] %v443
      %452 = vst [vmem:[%s328 + $0x18] sm:$0xf] %v444
      %453 = vst [vmem:[%s328 + $0x1c] sm:$0xf] %v445
      %s454 = smul.u32 8, %s22
      %p455 = scmp.lt.s32.totalorder %s21, 1
      %s456 = scalar_select %p455, %s21, 1
      %p457 = scmp.lt.s32.totalorder %s454, 7
      %s458 = scalar_select %p457, %s454, 7
      %s459 = smul.addr %s456, 8
      %s460 = sadd.s32 %s458, %s459
      %s461 = smul.addr %s460, 4
      %s462 = scalar_lea.vmem %s6, %s461
      // Predicated region
      $region45: #{a_call__.9} parent=43 // pred_check
        %p463 = pneg %p189
      $region46: #{a_call__.9} parent=43 // pred_check_branch
        %465 = sbr.rel (%p463) target = $region48
      $region47: #{a_call__.9} parent=43 // pred_region
        %s466 = smul.u32 8, %s22
      $region48: #{a_call__.9} parent=43 // pred_fallthru
        _
    $region44: #{a_call__.9} parent=5 // pred_fallthru
      _
    %p467 = scmp.le.s32.totalorder 2, %s12
    // Predicated region
    $region49: #{a_call__.9} parent=5 // pred_check
      %p468 = pneg %p467
    $region50: #{a_call__.9} parent=5 // pred_check_branch
      %470 = sbr.rel (%p468) target = $region52
    $region51: #{a_call__.9} parent=5 // pred_region
      %s471 = ssub.s32 %s12, 2
      // Predicated region
      $region53: #{a_call__.9} parent=51 // pred_check
        %p472 = pneg %p195
      $region54: #{a_call__.9} parent=51 // pred_check_branch
        %474 = sbr.rel (%p472) target = $region56
      $region55: #{a_call__.9} parent=51 // pred_region
        %s475 = smul.u32 8, %s24
        %p476 = scmp.lt.s32.totalorder %s23, 1
        %s477 = scalar_select %p476, %s23, 1
        %p478 = scmp.lt.s32.totalorder %s475, 7
        %s479 = scalar_select %p478, %s475, 7
        %s480 = smul.addr %s477, 8
        %s481 = sadd.s32 %s479, %s480
        %s482 = smul.addr %s481, 4
        %s483 = scalar_lea.vmem %s6, %s482
      $region56: #{a_call__.9} parent=51 // pred_fallthru
        _
    $region52: #{a_call__.9} parent=5 // pred_fallthru
      _
  $region6: #{a_call__.9} parent=0 // loop_footer
    %s16 = sadd.s32 1, %s12
  $region7: #{a_call__.9} parent=0 // loop_footer_branch
    %11 = sbr.rel target = $region3
  $region8: #{a_call__.9} parent=0 // loop_exit
    _

// kernel: a_call__.7
$region0: #{a_call__.7}
  #allocation0 [shape = 'u32[]', space=smem, size = 0x4, offset = 0x4, fixed_abs, tag = 'smem constant byte address 0x4 - core index']
  #allocation1 [shape = 'u32[144,128]{1,0:T(1,128)}', space=vmem, size = 0x12000, scoped, tag = 'internal scratch']
  %s0 = inlined_call_operand.vmem [shape: bf16[2,102,128], index: 0, kind: input, shape index: {}]
  %s1 = inlined_call_operand.vmem [shape: bf16[9,128,128], index: 1, kind: input, shape index: {}]
  %s2 = inlined_call_operand.vmem [shape: f32[80,1], index: 2, kind: input, shape index: {}]
  %s3 = inlined_call_operand.vmem [shape: bf16[2,80,128], index: 3, kind: output, shape index: {0}]
  %s4 = inlined_call_operand.vmem [shape: f32[2,2,128], index: 4, kind: output, shape index: {1}]
  %5 = xla_tuple %s3, %s4
  %s6 = sld [smem:[#allocation0]]
  $region53: #{a_call__.7} parent=0
    _
  %s8 = ssub.s32 1, %s6
  %s9 = scalar_select 0, %s8, %s6
  loop: start=0, step=1, limit=4
  $region2: #{a_call__.7} parent=0 // loop_pre_header
    _
  $region3: #{a_call__.7} parent=0 // loop_header
    %s11 = sphi 0, %s15
    %p12 = scmp.ge.s32.totalorder %s11, 4
    %s18 = sphi 0, %s30
    %s19 = sphi 0, %s26
    %s20 = sphi 0, %s18
    %s21 = sphi 0, %s19
    %s22 = sphi 0, %s20
    %s23 = sphi 0, %s21
    %s33 = sphi 0, %s35
    %s36 = sphi 0, %s33
    %s37 = sphi 0, %s36
    %s53 = sphi 0, %s37
    %s59 = sphi 0, %s61
    %s62 = sphi 0, %s59
    %s63 = sphi 0, %s62
    %s79 = sphi 0, %s63
    %s83 = sphi 0, %s83
    %s85 = sphi 0, %s83
    %s86 = sphi 0, %s85
    %s100 = sphi 0, %s86
    %s108 = sphi 0, %s110
    %s111 = sphi 0, %s108
    %s112 = sphi 0, %s111
    %s128 = sphi 0, %s112
    %s136 = sphi 0, %s138
    %s139 = sphi 0, %s136
    %s140 = sphi 0, %s139
    %s156 = sphi 0, %s140
  $region4: #{a_call__.7} parent=0 // loop_header_branch
    %14 = sbr.rel (%p12) target = $region8
  $region5: #{a_call__.7} parent=0 // loop_body
    %s16 = ssub.s32 %s11, 1
    %s17 = ssub.s32 %s11, 2
    %s24 = sadd.s32 1, %s19
    %p25 = scmp.ge.s32.totalorder %s24, 1
    %s26 = scalar_select %p25, 0, %s24
    %s27 = sadd.s32 1, %s18
    %s28 = scalar_select %p25, %s27, %s18
    %p29 = scmp.ge.s32.totalorder %s28, 2
    %s30 = scalar_select %p29, 0, %s28
    %s31 = ssub.s32 %s18, %s30
    %p32 = scmp.eq.s32.totalorder %s31, 0
    %s34 = sadd.s32 %s33, 1
    %s35 = scalar_select %p32, %s33, %s34
    %p38 = pneg %p32
    %p39 = scmp.eq.s32.totalorder %s11, 1
    %p40 = por %p38, %p39
    %p41 = scmp.ne.s32.totalorder %s33, %s36
    %p42 = scmp.eq.s32.totalorder %s11, 0
    %p43 = por %p41, %p42
    %p44 = scmp.ne.s32.totalorder %s33, %s36
    %p45 = scmp.eq.s32.totalorder %s16, 1
    %p46 = por %p44, %p45
    %p47 = scmp.ne.s32.totalorder %s36, %s37
    %p48 = scmp.eq.s32.totalorder %s16, 0
    %p49 = por %p47, %p48
    %p50 = scmp.ne.s32.totalorder %s36, %s37
    %p51 = scmp.eq.s32.totalorder %s17, 1
    %p52 = por %p50, %p51
    %p54 = scmp.ne.s32.totalorder %s37, %s53
    %p55 = scmp.eq.s32.totalorder %s17, 0
    %p56 = por %p54, %p55
    %s57 = ssub.s32 %s19, %s26
    %p58 = scmp.eq.s32.totalorder %s57, 0
    %s60 = sadd.s32 %s59, 1
    %s61 = scalar_select %p58, %s59, %s60
    %p64 = pneg %p58
    %p65 = scmp.eq.s32.totalorder %s11, 1
    %p66 = por %p64, %p65
    %p67 = scmp.ne.s32.totalorder %s59, %s62
    %p68 = scmp.eq.s32.totalorder %s11, 0
    %p69 = por %p67, %p68
    %p70 = scmp.ne.s32.totalorder %s59, %s62
    %p71 = scmp.eq.s32.totalorder %s16, 1
    %p72 = por %p70, %p71
    %p73 = scmp.ne.s32.totalorder %s62, %s63
    %p74 = scmp.eq.s32.totalorder %s16, 0
    %p75 = por %p73, %p74
    %p76 = scmp.ne.s32.totalorder %s62, %s63
    %p77 = scmp.eq.s32.totalorder %s17, 1
    %p78 = por %p76, %p77
    %p80 = scmp.ne.s32.totalorder %s63, %s79
    %p81 = scmp.eq.s32.totalorder %s17, 0
    %p82 = por %p80, %p81
    %s84 = sadd.s32 %s83, 1
    %p87 = scmp.eq.s32.totalorder %s11, 1
    %p88 = scmp.ne.s32.totalorder %s83, %s85
    %p89 = scmp.eq.s32.totalorder %s11, 0
    %p90 = por %p88, %p89
    %p91 = scmp.ne.s32.totalorder %s83, %s85
    %p92 = scmp.eq.s32.totalorder %s16, 1
    %p93 = por %p91, %p92
    %p94 = scmp.ne.s32.totalorder %s85, %s86
    %p95 = scmp.eq.s32.totalorder %s16, 0
    %p96 = por %p94, %p95
    %p97 = scmp.ne.s32.totalorder %s85, %s86
    %p98 = scmp.eq.s32.totalorder %s17, 1
    %p99 = por %p97, %p98
    %p101 = scmp.ne.s32.totalorder %s86, %s100
    %p102 = scmp.eq.s32.totalorder %s17, 0
    %p103 = por %p101, %p102
    %s104 = ssub.s32 %s18, %s30
    %s105 = ssub.s32 %s19, %s26
    %s106 = sor.u32 %s104, %s105
    %p107 = scmp.eq.s32.totalorder %s106, 0
    %s109 = sadd.s32 %s108, 1
    %s110 = scalar_select %p107, %s108, %s109
    %p113 = pneg %p107
    %p114 = scmp.eq.s32.totalorder %s11, 1
    %p115 = por %p113, %p114
    %p116 = scmp.ne.s32.totalorder %s108, %s111
    %p117 = scmp.eq.s32.totalorder %s11, 0
    %p118 = por %p116, %p117
    %p119 = scmp.ne.s32.totalorder %s108, %s111
    %p120 = scmp.eq.s32.totalorder %s16, 1
    %p121 = por %p119, %p120
    %p122 = scmp.ne.s32.totalorder %s111, %s112
    %p123 = scmp.eq.s32.totalorder %s16, 0
    %p124 = por %p122, %p123
    %p125 = scmp.ne.s32.totalorder %s111, %s112
    %p126 = scmp.eq.s32.totalorder %s17, 1
    %p127 = por %p125, %p126
    %p129 = scmp.ne.s32.totalorder %s112, %s128
    %p130 = scmp.eq.s32.totalorder %s17, 0
    %p131 = por %p129, %p130
    %s132 = ssub.s32 %s18, %s30
    %s133 = ssub.s32 %s19, %s26
    %s134 = sor.u32 %s132, %s133
    %p135 = scmp.eq.s32.totalorder %s134, 0
    %s137 = sadd.s32 %s136, 1
    %s138 = scalar_select %p135, %s136, %s137
    %p141 = pneg %p135
    %p142 = scmp.eq.s32.totalorder %s11, 1
    %p143 = por %p141, %p142
    %p144 = scmp.ne.s32.totalorder %s136, %s139
    %p145 = scmp.eq.s32.totalorder %s11, 0
    %p146 = por %p144, %p145
    %p147 = scmp.ne.s32.totalorder %s136, %s139
    %p148 = scmp.eq.s32.totalorder %s16, 1
    %p149 = por %p147, %p148
    %p150 = scmp.ne.s32.totalorder %s139, %s140
    %p151 = scmp.eq.s32.totalorder %s16, 0
    %p152 = por %p150, %p151
    %p153 = scmp.ne.s32.totalorder %s139, %s140
    %p154 = scmp.eq.s32.totalorder %s17, 1
    %p155 = por %p153, %p154
    %p157 = scmp.ne.s32.totalorder %s140, %s156
    %p158 = scmp.eq.s32.totalorder %s17, 0
    %p159 = por %p157, %p158
    %p160 = scmp.le.s32.totalorder 1, %s11
    %p161 = scmp.lt.s32.totalorder %s11, 3
    %p162 = pnand %p160, %p161
    %p163 = pneg %p162
    // Predicated region
    $region9: #{a_call__.7} parent=5 // pred_check
      _
    $region10: #{a_call__.7} parent=5 // pred_check_branch
      %165 = sbr.rel (%p162) target = $region12
    $region11: #{a_call__.7} parent=5 // pred_region
      %s166 = ssub.s32 %s11, 1
      // Predicated region
      $region13: #{a_call__.7} parent=11 // pred_check
        %p167 = pneg %p75
      $region14: #{a_call__.7} parent=11 // pred_check_branch
        %169 = sbr.rel (%p167) target = $region16
      $region15: #{a_call__.7} parent=11 // pred_region
        %p170 = scmp.lt.s32.totalorder %s21, 0
        %s171 = scalar_select %p170, %s21, 0
        %s172 = smul.addr %s171, 4
        %s173 = scalar_lea.vmem %s1, %s172
      $region16: #{a_call__.7} parent=11 // pred_fallthru
        _
      // Predicated region
      $region17: #{a_call__.7} parent=11 // pred_check
        %p174 = pneg %p96
      $region18: #{a_call__.7} parent=11 // pred_check_branch
        %176 = sbr.rel (%p174) target = $region20
      $region19: #{a_call__.7} parent=11 // pred_region
        _
      $region20: #{a_call__.7} parent=11 // pred_fallthru
        _
    $region12: #{a_call__.7} parent=5 // pred_fallthru
      _
    %p177 = scmp.lt.s32.totalorder %s11, 2
    // Predicated region
    $region21: #{a_call__.7} parent=5 // pred_check
      %p178 = pneg %p177
    $region22: #{a_call__.7} parent=5 // pred_check_branch
      %180 = sbr.rel (%p178) target = $region24
    $region23: #{a_call__.7} parent=5 // pred_region
      // Predicated region
      $region25: #{a_call__.7} parent=23 // pred_check
        %p181 = pneg %p43
      $region26: #{a_call__.7} parent=23 // pred_check_branch
        %183 = sbr.rel (%p181) target = $region28
      $region27: #{a_call__.7} parent=23 // pred_region
        %p184 = scmp.lt.s32.totalorder %s18, 1
        %s185 = scalar_select %p184, %s18, 1
        %s186 = smul.addr %s185, 13
        %s187 = smul.addr %s186, 4
        %s188 = scalar_lea.vmem %s0, %s187
      $region28: #{a_call__.7} parent=23 // pred_fallthru
        _
    $region24: #{a_call__.7} parent=5 // pred_fallthru
      _
    %p189 = scmp.le.s32.totalorder 1, %s11
    %p190 = scmp.lt.s32.totalorder %s11, 3
    %p191 = pnand %p189, %p190
    %p192 = pneg %p191
    // Predicated region
    $region29: #{a_call__.7} parent=5 // pred_check
      _
    $region30: #{a_call__.7} parent=5 // pred_check_branch
      %194 = sbr.rel (%p191) target = $region32
    $region31: #{a_call__.7} parent=5 // pred_region
      %s195 = ssub.s32 %s11, 1
      %p196 = scmp.lt.s32.totalorder %s20, 1
      %s197 = scalar_select %p196, %s20, 1
      %s198 = smul.addr %s197, 13
      %s199 = smul.addr %s198, 4
      %s200 = scalar_lea.vmem %s0, %s199
      %p201 = pneg %p49
      %p202 = pneg %p46
      %p203 = scmp.lt.s32.totalorder %s21, 0
      %s204 = scalar_select %p203, %s21, 0
      %s205 = smul.addr %s204, 4
      %s206 = scalar_lea.vmem %s1, %s205
      %p207 = pneg %p75
      %p208 = pneg %p72
      %p209 = pneg %p96
      %p210 = pneg %p93
      %p211 = pneg %p124
      %p212 = pneg %p121
      %p213 = scmp.lt.s32.totalorder %s20, 1
      %s214 = scalar_select %p213, %s20, 1
      %p215 = scmp.lt.s32.totalorder %s21, 0
      %s216 = scalar_select %p215, %s21, 0
      %s217 = smul.addr %s214, 10
      %s218 = sadd.s32 %s216, %s217
      %s219 = smul.addr %s218, 4
      %s220 = scalar_lea.vmem %s3, %s219
      %p221 = pneg %p152
      %p222 = pneg %p149
      %p223 = scmp.lt.s32.totalorder %s20, 1
      %s224 = scalar_select %p223, %s20, 1
      %p225 = scmp.lt.s32.totalorder %s21, 0
      %s226 = scalar_select %p225, %s21, 0
      %s227 = sadd.s32 %s226, %s224
      %s228 = smul.addr %s227, 2
      %s229 = scalar_lea.vmem %s4, %s228
      %p230 = scmp.lt.s32.totalorder %s20, 1
      %s231 = scalar_select %p230, %s20, 1
      %s232 = smul.addr %s231, 13
      %s233 = smul.addr %s232, 4
      %s234 = scalar_lea.vmem %s0, %s233
      %p235 = scmp.lt.s32.totalorder %s21, 0
      %s236 = scalar_select %p235, %s21, 0
      %s237 = smul.addr %s236, 4
      %s238 = scalar_lea.vmem %s1, %s237
      %p239 = scmp.lt.s32.totalorder %s20, 1
      %s240 = scalar_select %p239, %s20, 1
      %p241 = scmp.lt.s32.totalorder %s21, 0
      %s242 = scalar_select %p241, %s21, 0
      %s243 = smul.addr %s240, 10
      %s244 = sadd.s32 %s242, %s243
      %s245 = smul.addr %s244, 4
      %s246 = scalar_lea.vmem %s3, %s245
      %p247 = scmp.lt.s32.totalorder %s20, 1
      %s248 = scalar_select %p247, %s20, 1
      %p249 = scmp.lt.s32.totalorder %s21, 0
      %s250 = scalar_select %p249, %s21, 0
      %s251 = sadd.s32 %s250, %s248
      %s252 = smul.addr %s251, 2
      %s253 = scalar_lea.vmem %s4, %s252
      %v255 = vld [vmem:[%s234] sm:$0xf]
      %v256 = vld [vmem:[%s234 + $0x4] sm:$0xf]
      %v257 = vld [vmem:[%s234 + $0x8] sm:$0xf]
      %v258 = vld [vmem:[%s234 + $0xc] sm:$0xf]
      %v259 = vld [vmem:[%s234 + $0x10] sm:$0xf]
      %v260 = vld [vmem:[%s234 + $0x14] sm:$0xf]
      %v261 = vld [vmem:[%s234 + $0x18] sm:$0xf]
      %v262 = vld [vmem:[%s234 + $0x1c] sm:$0xf]
      %v263 = vld [vmem:[%s234 + $0x20] sm:$0xf]
      %v264 = vld [vmem:[%s234 + $0x24] sm:$0xf]
      %v265 = vld [vmem:[%s238] sm:$0xf]
      %v266 = vld [vmem:[%s238 + $0x4] sm:$0xf]
      %v267 = vld [vmem:[%s238 + $0x8] sm:$0xf]
      %v268 = vld [vmem:[%s238 + $0xc] sm:$0xf]
      %v269 = vld [vmem:[%s238 + $0x10] sm:$0xf]
      %v270 = vld [vmem:[%s238 + $0x14] sm:$0xf]
      %v271 = vld [vmem:[%s238 + $0x18] sm:$0xf]
      %v272 = vld [vmem:[%s238 + $0x1c] sm:$0xf]
      %v273 = vld [vmem:[%s238 + $0x20] sm:$0xf]
      %v274 = vld [vmem:[%s238 + $0x24] sm:$0xf]
      %v275 = vld [vmem:[%s238 + $0x28] sm:$0xf]
      %v276 = vld [vmem:[%s238 + $0x2c] sm:$0xf]
      %v277 = vld [vmem:[%s238 + $0x30] sm:$0xf]
      %v278 = vld [vmem:[%s238 + $0x34] sm:$0xf]
      %v279 = vld [vmem:[%s238 + $0x38] sm:$0xf]
      %v280 = vld [vmem:[%s238 + $0x3c] sm:$0xf]
      %v281 = vld [vmem:[%s234 + $0x28] sm:$0x1]
      %s282 = scalar_lea.vmem %s238, 64
      %v283 = vld [vmem:[%s282] sm:$0xf]
      %v284 = vld [vmem:[%s282 + $0x4] sm:$0xf]
      %v285 = vld [vmem:[%s282 + $0x8] sm:$0xf]
      %v286 = vld [vmem:[%s282 + $0xc] sm:$0xf]
      %v287 = vld [vmem:[%s282 + $0x10] sm:$0xf]
      %v288 = vld [vmem:[%s282 + $0x14] sm:$0xf]
      %v289 = vld [vmem:[%s282 + $0x18] sm:$0xf]
      %v290 = vld [vmem:[%s282 + $0x1c] sm:$0xf]
      %v291 = vld [vmem:[%s282 + $0x20] sm:$0xf]
      %v292 = vld [vmem:[%s282 + $0x24] sm:$0xf]
      %v293 = vld [vmem:[%s282 + $0x28] sm:$0xf]
      %v294 = vld [vmem:[%s282 + $0x2c] sm:$0xf]
      %v295 = vld [vmem:[%s282 + $0x30] sm:$0xf]
      %v296 = vld [vmem:[%s282 + $0x34] sm:$0xf]
      %v297 = vld [vmem:[%s282 + $0x38] sm:$0xf]
      %v298 = vld [vmem:[%s282 + $0x3c] sm:$0xf]
      %v310 = vunpack.c.l.b16 %v255
      %v311 = vunpack.c.l.b16 %v256
      %v312 = vunpack.c.l.b16 %v257
      %v313 = vunpack.c.l.b16 %v258
      %v314 = vunpack.c.l.b16 %v259
      %v315 = vunpack.c.l.b16 %v260
      %v316 = vunpack.c.l.b16 %v261
      %v317 = vunpack.c.l.b16 %v262
      %v318 = vunpack.c.l.b16 %v263
      %v319 = vunpack.c.l.b16 %v264
      %v320 = vunpack.c.l.b16 %v281
      %v321 = vpack.c.b16 %v311, %v310
      %v322 = vpack.c.b16 %v313, %v312
      %v323 = vpack.c.b16 %v315, %v314
      %v324 = vpack.c.b16 %v317, %v316
      %v325 = vpack.c.b16 %v319, %v318
      %v326 = vpack.c.b16 %v320, %v320
      %vm327 = vsmask.f32 7424
      %v329 = vshrl.u32 %v321, 16
      %v331 = vshll.u32 %v321, 16
      %v333 = vrot.slane %v331, 1
      %v334 = vor.u32 %v329, %v333
      %v336 = vshll.u32 %v322, 16
      %v338 = vrot.slane %v336, 1
      %v339 = vsel %vm327, %v334, %v338
      %v340 = vshrl.u32 %v322, 16
      %v342 = vor.u32 %v340, %v338
      %v344 = vshll.u32 %v323, 16
      %v346 = vrot.slane %v344, 1
      %v347 = vsel %vm327, %v342, %v346
      %v348 = vshrl.u32 %v323, 16
      %v350 = vor.u32 %v348, %v346
      %v352 = vshll.u32 %v324, 16
      %v354 = vrot.slane %v352, 1
      %v355 = vsel %vm327, %v350, %v354
      %v356 = vshrl.u32 %v324, 16
      %v358 = vor.u32 %v356, %v354
      %v360 = vshll.u32 %v325, 16
      %v362 = vrot.slane %v360, 1
      %v363 = vsel %vm327, %v358, %v362
      %v364 = vshrl.u32 %v325, 16
      %v366 = vor.u32 %v364, %v362
      %v368 = vshll.u32 %v326, 16
      %v370 = vrot.slane %v368, 1
      %v371 = vsel %vm327, %v366, %v370
      %v393 = vunpack.c.l.b16 %v283
      %v394 = vunpack.c.l.b16 %v284
      %v395 = vunpack.c.l.b16 %v285
      %v396 = vunpack.c.l.b16 %v286
      %v397 = vunpack.c.l.b16 %v287
      %v398 = vunpack.c.l.b16 %v288
      %v399 = vunpack.c.l.b16 %v289
      %v400 = vunpack.c.l.b16 %v290
      %v401 = vunpack.c.l.b16 %v291
      %v402 = vunpack.c.l.b16 %v292
      %v403 = vunpack.c.l.b16 %v293
      %v404 = vunpack.c.l.b16 %v294
      %v405 = vunpack.c.l.b16 %v295
      %v406 = vunpack.c.l.b16 %v296
      %v407 = vunpack.c.l.b16 %v297
      %v408 = vunpack.c.l.b16 %v298
      %v409 = vpack.c.b16 %v394, %v393
      %v410 = vpack.c.b16 %v396, %v395
      %v411 = vpack.c.b16 %v398, %v397
      %v412 = vpack.c.b16 %v400, %v399
      %v413 = vpack.c.b16 %v402, %v401
      %v414 = vpack.c.b16 %v404, %v403
      %v415 = vpack.c.b16 %v406, %v405
      %v416 = vpack.c.b16 %v408, %v407
      %425 = vmatprep.subr.bf16.mxu0 0
      %426 = vmatpush1.bf16.msra.mxu0 %v409
      %427 = vmatprep.subr.bf16.mxu0 0
      %428 = vmatpush1.bf16.msra.mxu0 %v410
      %429 = vmatprep.subr.bf16.mxu0 0
      %430 = vmatpush1.bf16.msra.mxu0 %v411
      %431 = vmatprep.subr.bf16.mxu0 0
      %432 = vmatpush1.bf16.msra.mxu0 %v412
      %433 = vmatprep.subr.bf16.mxu0 0
      %434 = vmatpush1.bf16.msra.mxu0 %v413
      %435 = vmatprep.subr.bf16.mxu0 0
      %436 = vmatpush1.bf16.msra.mxu0 %v414
      %437 = vmatprep.subr.bf16.mxu0 0
      %438 = vmatpush1.bf16.msra.mxu0 %v415
      %439 = vmatprep.subr.bf16.mxu0 0
      %440 = vmatpush1.bf16.msra.mxu0 %v416
      %441 = vmatprep.subr.bf16.mxu0 0
      %442 = vmatpush1.bf16.msra.mxu0 0
      %443 = vmatprep.subr.bf16.mxu0 0
      %444 = vmatpush1.bf16.msra.mxu0 0
      %445 = vmatprep.subr.bf16.mxu0 0
      %446 = vmatpush1.bf16.msra.mxu0 0
      %447 = vmatprep.subr.bf16.mxu0 0
      %448 = vmatpush1.bf16.msra.mxu0 0
      %449 = vmatprep.subr.bf16.mxu0 0
      %450 = vmatpush1.bf16.msra.mxu0 0
      %451 = vmatprep.subr.bf16.mxu0 0
      %452 = vmatpush1.bf16.msra.mxu0 0
      %453 = vmatprep.subr.bf16.mxu0 0
      %454 = vmatpush1.bf16.msra.mxu0 0
      %455 = vmatprep.subr.bf16.mxu0 0
      %456 = vmatpush1.bf16.msra.mxu0 0
      %457 = vmatprep.mubr.bf16.mxu0 0
      %458 = vmatmul.mubr.bf16.gmra.mrb[0].mxu0 %v339
      %v459 = vpop.f32.mrb[0].mxu0
      %v460 = vadd.f32 0.0, %v459
      %v461 = vpop.f32.mrb[0].mxu0
      %v462 = vpop.f32.mrb[0].mxu0
      %v463 = vadd.f32 0.0, %v462
      %v464 = vpop.f32.mrb[0].mxu0
      %465 = vmatprep.mubr.bf16.mxu0 0
      %466 = vmatmul.mubr.bf16.gmra.mrb[0].mxu0 %v347
      %v467 = vpop.f32.mrb[0].mxu0
      %v468 = vadd.f32 0.0, %v467
      %v469 = vpop.f32.mrb[0].mxu0
      %v470 = vpop.f32.mrb[0].mxu0
      %v471 = vadd.f32 0.0, %v470
      %v472 = vpop.f32.mrb[0].mxu0
      %473 = vmatprep.mubr.bf16.mxu0 0
      %474 = vmatmul.mubr.bf16.gmra.mrb[0].mxu0 %v355
      %v475 = vpop.f32.mrb[0].mxu0
      %v476 = vadd.f32 0.0, %v475
      %v477 = vpop.f32.mrb[0].mxu0
      %v478 = vpop.f32.mrb[0].mxu0
      %v479 = vadd.f32 0.0, %v478
      %v480 = vpop.f32.mrb[0].mxu0
      %481 = vmatprep.mubr.bf16.mxu0 0
      %482 = vmatmul.mubr.bf16.gmra.mrb[0].mxu0 %v363
      %v483 = vpop.f32.mrb[0].mxu0
      %v484 = vadd.f32 0.0, %v483
      %v485 = vpop.f32.mrb[0].mxu0
      %v486 = vpop.f32.mrb[0].mxu0
      %v487 = vadd.f32 0.0, %v486
      %v488 = vpop.f32.mrb[0].mxu0
      %489 = vmatprep.mubr.bf16.mxu0 0
      %490 = vmatmul.mubr.bf16.gmra.mrb[0].mxu0 %v371
      %v491 = vpop.f32.mrb[0].mxu0
      %v492 = vadd.f32 0.0, %v491
      %v493 = vpop.f32.mrb[0].mxu0
      %v494 = vpop.f32.mrb[0].mxu0
      %v495 = vadd.f32 0.0, %v494
      %v496 = vpop.f32.mrb[0].mxu0
      %497 = vdwg.mxu0
      %v519 = vunpack.c.l.b16 %v265
      %v520 = vunpack.c.l.b16 %v266
      %v521 = vunpack.c.l.b16 %v267
      %v522 = vunpack.c.l.b16 %v268
      %v523 = vunpack.c.l.b16 %v269
      %v524 = vunpack.c.l.b16 %v270
      %v525 = vunpack.c.l.b16 %v271
      %v526 = vunpack.c.l.b16 %v272
      %v527 = vunpack.c.l.b16 %v273
      %v528 = vunpack.c.l.b16 %v274
      %v529 = vunpack.c.l.b16 %v275
      %v530 = vunpack.c.l.b16 %v276
      %v531 = vunpack.c.l.b16 %v277
      %v532 = vunpack.c.l.b16 %v278
      %v533 = vunpack.c.l.b16 %v279
      %v534 = vunpack.c.l.b16 %v280
      %v535 = vpack.c.b16 %v520, %v519
      %v536 = vpack.c.b16 %v522, %v521
      %v537 = vpack.c.b16 %v524, %v523
      %v538 = vpack.c.b16 %v526, %v525
      %v539 = vpack.c.b16 %v528, %v527
      %v540 = vpack.c.b16 %v530, %v529
      %v541 = vpack.c.b16 %v532, %v531
      %v542 = vpack.c.b16 %v534, %v533
      %551 = vmatprep.subr.bf16.mxu0 0
      %552 = vmatpush1.bf16.msra.mxu0 %v535
      %553 = vmatprep.subr.bf16.mxu0 0
      %554 = vmatpush1.bf16.msra.mxu0 %v536
      %555 = vmatprep.subr.bf16.mxu0 0
      %556 = vmatpush1.bf16.msra.mxu0 %v537
      %557 = vmatprep.subr.bf16.mxu0 0
      %558 = vmatpush1.bf16.msra.mxu0 %v538
      %559 = vmatprep.subr.bf16.mxu0 0
      %560 = vmatpush1.bf16.msra.mxu0 %v539
      %561 = vmatprep.subr.bf16.mxu0 0
      %562 = vmatpush1.bf16.msra.mxu0 %v540
      %563 = vmatprep.subr.bf16.mxu0 0
      %564 = vmatpush1.bf16.msra.mxu0 %v541
      %565 = vmatprep.subr.bf16.mxu0 0
      %566 = vmatpush1.bf16.msra.mxu0 %v542
      %567 = vmatprep.subr.bf16.mxu0 0
      %568 = vmatpush1.bf16.msra.mxu0 0
      %569 = vmatprep.subr.bf16.mxu0 0
      %570 = vmatpush1.bf16.msra.mxu0 0
      %571 = vmatprep.subr.bf16.mxu0 0
      %572 = vmatpush1.bf16.msra.mxu0 0
      %573 = vmatprep.subr.bf16.mxu0 0
      %574 = vmatpush1.bf16.msra.mxu0 0
      %575 = vmatprep.subr.bf16.mxu0 0
      %576 = vmatpush1.bf16.msra.mxu0 0
      %577 = vmatprep.subr.bf16.mxu0 0
      %578 = vmatpush1.bf16.msra.mxu0 0
      %579 = vmatprep.subr.bf16.mxu0 0
      %580 = vmatpush1.bf16.msra.mxu0 0
      %581 = vmatprep.subr.bf16.mxu0 0
      %582 = vmatpush1.bf16.msra.mxu0 0
      %583 = vmatprep.mubr.bf16.mxu0 0
      %584 = vmatmul.mubr.bf16.gmra.mrb[0].mxu0 %v321
      %v585 = vpop.f32.mrb[0].mxu0
      %v586 = vadd.f32 %v460, %v585
      %v587 = vpop.f32.mrb[0].mxu0
      %v588 = vpop.f32.mrb[0].mxu0
      %v589 = vadd.f32 %v463, %v588
      %v590 = vpop.f32.mrb[0].mxu0
      %591 = vmatprep.mubr.bf16.mxu0 0
      %592 = vmatmul.mubr.bf16.gmra.mrb[0].mxu0 %v322
      %v593 = vpop.f32.mrb[0].mxu0
      %v594 = vadd.f32 %v468, %v593
      %v595 = vpop.f32.mrb[0].mxu0
      %v596 = vpop.f32.mrb[0].mxu0
      %v597 = vadd.f32 %v471, %v596
      %v598 = vpop.f32.mrb[0].mxu0
      %599 = vmatprep.mubr.bf16.mxu0 0
      %600 = vmatmul.mubr.bf16.gmra.mrb[0].mxu0 %v323
      %v601 = vpop.f32.mrb[0].mxu0
      %v602 = vadd.f32 %v476, %v601
      %v603 = vpop.f32.mrb[0].mxu0
      %v604 = vpop.f32.mrb[0].mxu0
      %v605 = vadd.f32 %v479, %v604
      %v606 = vpop.f32.mrb[0].mxu0
      %607 = vmatprep.mubr.bf16.mxu0 0
      %608 = vmatmul.mubr.bf16.gmra.mrb[0].mxu0 %v324
      %v609 = vpop.f32.mrb[0].mxu0
      %v610 = vadd.f32 %v484, %v609
      %v611 = vpop.f32.mrb[0].mxu0
      %v612 = vpop.f32.mrb[0].mxu0
      %v613 = vadd.f32 %v487, %v612
      %v614 = vpop.f32.mrb[0].mxu0
      %615 = vmatprep.mubr.bf16.mxu0 0
      %616 = vmatmul.mubr.bf16.gmra.mrb[0].mxu0 %v325
      %v617 = vpop.f32.mrb[0].mxu0
      %v618 = vadd.f32 %v492, %v617
      %v619 = vpop.f32.mrb[0].mxu0
      %v620 = vpop.f32.mrb[0].mxu0
      %v621 = vadd.f32 %v495, %v620
      %v622 = vpop.f32.mrb[0].mxu0
      %623 = vdwg.mxu0
      %v624 = vld [vmem:[%s234] sm:$0xe]
      %s625 = scalar_lea.vmem %s238, 128
      %v626 = vld [vmem:[%s625] sm:$0xf]
      %v627 = vld [vmem:[%s625 + $0x4] sm:$0xf]
      %v628 = vld [vmem:[%s625 + $0x8] sm:$0xf]
      %v629 = vld [vmem:[%s625 + $0xc] sm:$0xf]
      %v630 = vld [vmem:[%s625 + $0x10] sm:$0xf]
      %v631 = vld [vmem:[%s625 + $0x14] sm:$0xf]
      %v632 = vld [vmem:[%s625 + $0x18] sm:$0xf]
      %v633 = vld [vmem:[%s625 + $0x1c] sm:$0xf]
      %v634 = vld [vmem:[%s625 + $0x20] sm:$0xf]
      %v635 = vld [vmem:[%s625 + $0x24] sm:$0xf]
      %v636 = vld [vmem:[%s625 + $0x28] sm:$0xf]
      %v637 = vld [vmem:[%s625 + $0x2c] sm:$0xf]
      %v638 = vld [vmem:[%s625 + $0x30] sm:$0xf]
      %v639 = vld [vmem:[%s625 + $0x34] sm:$0xf]
      %v640 = vld [vmem:[%s625 + $0x38] sm:$0xf]
      %v641 = vld [vmem:[%s625 + $0x3c] sm:$0xf]
      %v643 = vunpack.c.l.b16 %v624
      %v644 = vpack.c.b16 %v311, %v643
      %vm645 = vcmask 1046528
      %v646 = vrot.slane %v644, 1
      %v647 = vrot.slane %v322, 1
      %v648 = vsel %vm645, %v646, %v647
      %v649 = vrot.slane %v323, 1
      %v650 = vsel %vm645, %v647, %v649
      %v651 = vrot.slane %v324, 1
      %v652 = vsel %vm645, %v649, %v651
      %v653 = vrot.slane %v325, 1
      %v654 = vsel %vm645, %v651, %v653
      %v655 = vrot.slane %v326, 1
      %v656 = vsel %vm645, %v653, %v655
      %v678 = vunpack.c.l.b16 %v626
      %v679 = vunpack.c.l.b16 %v627
      %v680 = vunpack.c.l.b16 %v628
      %v681 = vunpack.c.l.b16 %v629
      %v682 = vunpack.c.l.b16 %v630
      %v683 = vunpack.c.l.b16 %v631
      %v684 = vunpack.c.l.b16 %v632
      %v685 = vunpack.c.l.b16 %v633
      %v686 = vunpack.c.l.b16 %v634
      %v687 = vunpack.c.l.b16 %v635
      %v688 = vunpack.c.l.b16 %v636
      %v689 = vunpack.c.l.b16 %v637
      %v690 = vunpack.c.l.b16 %v638
      %v691 = vunpack.c.l.b16 %v639
      %v692 = vunpack.c.l.b16 %v640
      %v693 = vunpack.c.l.b16 %v641
      %v694 = vpack.c.b16 %v679, %v678
      %v695 = vpack.c.b16 %v681, %v680
      %v696 = vpack.c.b16 %v683, %v682
      %v697 = vpack.c.b16 %v685, %v684
      %v698 = vpack.c.b16 %v687, %v686
      %v699 = vpack.c.b16 %v689, %v688
      %v700 = vpack.c.b16 %v691, %v690
      %v701 = vpack.c.b16 %v693, %v692
      %710 = vmatprep.subr.bf16.mxu0 0
      %711 = vmatpush1.bf16.msra.mxu0 %v694
      %712 = vmatprep.subr.bf16.mxu0 0
      %713 = vmatpush1.bf16.msra.mxu0 %v695
      %714 = vmatprep.subr.bf16.mxu0 0
      %715 = vmatpush1.bf16.msra.mxu0 %v696
      %716 = vmatprep.subr.bf16.mxu0 0
      %717 = vmatpush1.bf16.msra.mxu0 %v697
      %718 = vmatprep.subr.bf16.mxu0 0
      %719 = vmatpush1.bf16.msra.mxu0 %v698
      %720 = vmatprep.subr.bf16.mxu0 0
      %721 = vmatpush1.bf16.msra.mxu0 %v699
      %722 = vmatprep.subr.bf16.mxu0 0
      %723 = vmatpush1.bf16.msra.mxu0 %v700
      %724 = vmatprep.subr.bf16.mxu0 0
      %725 = vmatpush1.bf16.msra.mxu0 %v701
      %726 = vmatprep.subr.bf16.mxu0 0
      %727 = vmatpush1.bf16.msra.mxu0 0
      %728 = vmatprep.subr.bf16.mxu0 0
      %729 = vmatpush1.bf16.msra.mxu0 0
      %730 = vmatprep.subr.bf16.mxu0 0
      %731 = vmatpush1.bf16.msra.mxu0 0
      %732 = vmatprep.subr.bf16.mxu0 0
      %733 = vmatpush1.bf16.msra.mxu0 0
      %734 = vmatprep.subr.bf16.mxu0 0
      %735 = vmatpush1.bf16.msra.mxu0 0
      %736 = vmatprep.subr.bf16.mxu0 0
      %737 = vmatpush1.bf16.msra.mxu0 0
      %738 = vmatprep.subr.bf16.mxu0 0
      %739 = vmatpush1.bf16.msra.mxu0 0
      %740 = vmatprep.subr.bf16.mxu0 0
      %741 = vmatpush1.bf16.msra.mxu0 0
      %742 = vmatprep.mubr.bf16.mxu0 0
      %743 = vmatmul.mubr.bf16.gmra.mrb[0].mxu0 %v648
      %v744 = vpop.f32.mrb[0].mxu0
      %v745 = vadd.f32 0.0, %v744
      %v746 = vpop.f32.mrb[0].mxu0
      %v747 = vpop.f32.mrb[0].mxu0
      %v748 = vadd.f32 0.0, %v747
      %v749 = vpop.f32.mrb[0].mxu0
      %750 = vmatprep.mubr.bf16.mxu0 0
      %751 = vmatmul.mubr.bf16.gmra.mrb[0].mxu0 %v650
      %v752 = vpop.f32.mrb[0].mxu0
      %v753 = vadd.f32 0.0, %v752
      %v754 = vpop.f32.mrb[0].mxu0
      %v755 = vpop.f32.mrb[0].mxu0
      %v756 = vadd.f32 0.0, %v755
      %v757 = vpop.f32.mrb[0].mxu0
      %758 = vmatprep.mubr.bf16.mxu0 0
      %759 = vmatmul.mubr.bf16.gmra.mrb[0].mxu0 %v652
      %v760 = vpop.f32.mrb[0].mxu0
      %v761 = vadd.f32 0.0, %v760
      %v762 = vpop.f32.mrb[0].mxu0
      %v763 = vpop.f32.mrb[0].mxu0
      %v764 = vadd.f32 0.0, %v763
      %v765 = vpop.f32.mrb[0].mxu0
      %766 = vmatprep.mubr.bf16.mxu0 0
      %767 = vmatmul.mubr.bf16.gmra.mrb[0].mxu0 %v654
      %v768 = vpop.f32.mrb[0].mxu0
      %v769 = vadd.f32 0.0, %v768
      %v770 = vpop.f32.mrb[0].mxu0
      %v771 = vpop.f32.mrb[0].mxu0
      %v772 = vadd.f32 0.0, %v771
      %v773 = vpop.f32.mrb[0].mxu0
      %774 = vmatprep.mubr.bf16.mxu0 0
      %775 = vmatmul.mubr.bf16.gmra.mrb[0].mxu0 %v656
      %v776 = vpop.f32.mrb[0].mxu0
      %v777 = vadd.f32 0.0, %v776
      %v778 = vpop.f32.mrb[0].mxu0
      %v779 = vpop.f32.mrb[0].mxu0
      %v780 = vadd.f32 0.0, %v779
      %v781 = vpop.f32.mrb[0].mxu0
      %782 = vdwg.mxu0
      %v783 = vadd.f32 %v586, %v745
      %v784 = vadd.f32 %v589, %v748
      %v785 = vadd.f32 %v594, %v753
      %v786 = vadd.f32 %v597, %v756
      %v787 = vadd.f32 %v602, %v761
      %v788 = vadd.f32 %v605, %v764
      %v789 = vadd.f32 %v610, %v769
      %v790 = vadd.f32 %v613, %v772
      %v791 = vadd.f32 %v618, %v777
      %v792 = vadd.f32 %v621, %v780
      %v793 = vld [vmem:[%s234 + $0x4] sm:$0xe]
      %v794 = vld [vmem:[%s234 + $0x8] sm:$0xf]
      %v795 = vld [vmem:[%s234 + $0xc] sm:$0xf]
      %v796 = vld [vmem:[%s234 + $0x10] sm:$0xf]
      %v797 = vld [vmem:[%s234 + $0x14] sm:$0xf]
      %v798 = vld [vmem:[%s234 + $0x18] sm:$0xf]
      %v799 = vld [vmem:[%s234 + $0x1c] sm:$0xf]
      %v800 = vld [vmem:[%s234 + $0x20] sm:$0xf]
      %v801 = vld [vmem:[%s234 + $0x24] sm:$0xf]
      %v802 = vld [vmem:[%s234 + $0x28] sm:$0xf]
      %v803 = vld [vmem:[%s234 + $0x2c] sm:$0x1]
      %s804 = scalar_lea.vmem %s238, 192
      %v805 = vld [vmem:[%s804] sm:$0xf]
      %v806 = vld [vmem:[%s804 + $0x4] sm:$0xf]
      %v807 = vld [vmem:[%s804 + $0x8] sm:$0xf]
      %v808 = vld [vmem:[%s804 + $0xc] sm:$0xf]
      %v809 = vld [vmem:[%s804 + $0x10] sm:$0xf]
      %v810 = vld [vmem:[%s804 + $0x14] sm:$0xf]
      %v811 = vld [vmem:[%s804 + $0x18] sm:$0xf]
      %v812 = vld [vmem:[%s804 + $0x1c] sm:$0xf]
      %v813 = vld [vmem:[%s804 + $0x20] sm:$0xf]
      %v814 = vld [vmem:[%s804 + $0x24] sm:$0xf]
      %v815 = vld [vmem:[%s804 + $0x28] sm:$0xf]
      %v816 = vld [vmem:[%s804 + $0x2c] sm:$0xf]
      %v817 = vld [vmem:[%s804 + $0x30] sm:$0xf]
      %v818 = vld [vmem:[%s804 + $0x34] sm:$0xf]
      %v819 = vld [vmem:[%s804 + $0x38] sm:$0xf]
      %v820 = vld [vmem:[%s804 + $0x3c] sm:$0xf]
      %v832 = vunpack.c.l.b16 %v793
      %v833 = vunpack.c.l.b16 %v794
      %v834 = vunpack.c.l.b16 %v795
      %v835 = vunpack.c.l.b16 %v796
      %v836 = vunpack.c.l.b16 %v797
      %v837 = vunpack.c.l.b16 %v798
      %v838 = vunpack.c.l.b16 %v799
      %v839 = vunpack.c.l.b16 %v800
      %v840 = vunpack.c.l.b16 %v801
      %v841 = vunpack.c.l.b16 %v802
      %v842 = vunpack.c.l.b16 %v803
      %v843 = vpack.c.b16 %v833, %v832
      %v844 = vpack.c.b16 %v835, %v834
      %v845 = vpack.c.b16 %v837, %v836
      %v846 = vpack.c.b16 %v839, %v838
      %v847 = vpack.c.b16 %v841, %v840
      %v848 = vpack.c.b16 %v842, %v842
      %v849 = vrot.slane %v843, 1
      %v850 = vrot.slane %v844, 1
      %v851 = vsel %vm645, %v849, %v850
      %v852 = vrot.slane %v845, 1
      %v853 = vsel %vm645, %v850, %v852
      %v854 = vrot.slane %v846, 1
      %v855 = vsel %vm645, %v852, %v854
      %v856 = vrot.slane %v847, 1
      %v857 = vsel %vm645, %v854, %v856
      %v858 = vrot.slane %v848, 1
      %v859 = vsel %vm645, %v856, %v858
      %v881 = vunpack.c.l.b16 %v805
      %v882 = vunpack.c.l.b16 %v806
      %v883 = vunpack.c.l.b16 %v807
      %v884 = vunpack.c.l.b16 %v808
      %v885 = vunpack.c.l.b16 %v809
      %v886 = vunpack.c.l.b16 %v810
      %v887 = vunpack.c.l.b16 %v811
      %v888 = vunpack.c.l.b16 %v812
      %v889 = vunpack.c.l.b16 %v813
      %v890 = vunpack.c.l.b16 %v814
      %v891 = vunpack.c.l.b16 %v815
      %v892 = vunpack.c.l.b16 %v816
      %v893 = vunpack.c.l.b16 %v817
      %v894 = vunpack.c.l.b16 %v818
      %v895 = vunpack.c.l.b16 %v819
      %v896 = vunpack.c.l.b16 %v820
      %v897 = vpack.c.b16 %v882, %v881
      %v898 = vpack.c.b16 %v884, %v883
      %v899 = vpack.c.b16 %v886, %v885
      %v900 = vpack.c.b16 %v888, %v887
      %v901 = vpack.c.b16 %v890, %v889
      %v902 = vpack.c.b16 %v892, %v891
      %v903 = vpack.c.b16 %v894, %v893
      %v904 = vpack.c.b16 %v896, %v895
      %913 = vmatprep.subr.bf16.mxu0 0
      %914 = vmatpush1.bf16.msra.mxu0 %v897
      %915 = vmatprep.subr.bf16.mxu0 0
      %916 = vmatpush1.bf16.msra.mxu0 %v898
      %917 = vmatprep.subr.bf16.mxu0 0
      %918 = vmatpush1.bf16.msra.mxu0 %v899
      %919 = vmatprep.subr.bf16.mxu0 0
      %920 = vmatpush1.bf16.msra.mxu0 %v900
      %921 = vmatprep.subr.bf16.mxu0 0
      %922 = vmatpush1.bf16.msra.mxu0 %v901
      %923 = vmatprep.subr.bf16.mxu0 0
      %924 = vmatpush1.bf16.msra.mxu0 %v902
      %925 = vmatprep.subr.bf16.mxu0 0
      %926 = vmatpush1.bf16.msra.mxu0 %v903
      %927 = vmatprep.subr.bf16.mxu0 0
      %928 = vmatpush1.bf16.msra.mxu0 %v904
      %929 = vmatprep.subr.bf16.mxu0 0
      %930 = vmatpush1.bf16.msra.mxu0 0
      %931 = vmatprep.subr.bf16.mxu0 0
      %932 = vmatpush1.bf16.msra.mxu0 0
      %933 = vmatprep.subr.bf16.mxu0 0
      %934 = vmatpush1.bf16.msra.mxu0 0
      %935 = vmatprep.subr.bf16.mxu0 0
      %936 = vmatpush1.bf16.msra.mxu0 0
      %937 = vmatprep.subr.bf16.mxu0 0
      %938 = vmatpush1.bf16.msra.mxu0 0
      %939 = vmatprep.subr.bf16.mxu0 0
      %940 = vmatpush1.bf16.msra.mxu0 0
      %941 = vmatprep.subr.bf16.mxu0 0
      %942 = vmatpush1.bf16.msra.mxu0 0
      %943 = vmatprep.subr.bf16.mxu0 0
      %944 = vmatpush1.bf16.msra.mxu0 0
      %945 = vmatprep.mubr.bf16.mxu0 0
      %946 = vmatmul.mubr.bf16.gmra.mrb[0].mxu0 %v851
      %v947 = vpop.f32.mrb[0].mxu0
      %v948 = vadd.f32 0.0, %v947
      %v949 = vpop.f32.mrb[0].mxu0
      %v950 = vpop.f32.mrb[0].mxu0
      %v951 = vadd.f32 0.0, %v950
      %v952 = vpop.f32.mrb[0].mxu0
      %953 = vmatprep.mubr.bf16.mxu0 0
      %954 = vmatmul.mubr.bf16.gmra.mrb[0].mxu0 %v853
      %v955 = vpop.f32.mrb[0].mxu0
      %v956 = vadd.f32 0.0, %v955
      %v957 = vpop.f32.mrb[0].mxu0
      %v958 = vpop.f32.mrb[0].mxu0
      %v959 = vadd.f32 0.0, %v958
      %v960 = vpop.f32.mrb[0].mxu0
      %961 = vmatprep.mubr.bf16.mxu0 0
      %962 = vmatmul.mubr.bf16.gmra.mrb[0].mxu0 %v855
      %v963 = vpop.f32.mrb[0].mxu0
      %v964 = vadd.f32 0.0, %v963
      %v965 = vpop.f32.mrb[0].mxu0
      %v966 = vpop.f32.mrb[0].mxu0
      %v967 = vadd.f32 0.0, %v966
      %v968 = vpop.f32.mrb[0].mxu0
      %969 = vmatprep.mubr.bf16.mxu0 0
      %970 = vmatmul.mubr.bf16.gmra.mrb[0].mxu0 %v857
      %v971 = vpop.f32.mrb[0].mxu0
      %v972 = vadd.f32 0.0, %v971
      %v973 = vpop.f32.mrb[0].mxu0
      %v974 = vpop.f32.mrb[0].mxu0
      %v975 = vadd.f32 0.0, %v974
      %v976 = vpop.f32.mrb[0].mxu0
      %977 = vmatprep.mubr.bf16.mxu0 0
      %978 = vmatmul.mubr.bf16.gmra.mrb[0].mxu0 %v859
      %v979 = vpop.f32.mrb[0].mxu0
      %v980 = vadd.f32 0.0, %v979
      %v981 = vpop.f32.mrb[0].mxu0
      %v982 = vpop.f32.mrb[0].mxu0
      %v983 = vadd.f32 0.0, %v982
      %v984 = vpop.f32.mrb[0].mxu0
      %985 = vdwg.mxu0
      %v986 = vadd.f32 %v783, %v948
      %v987 = vadd.f32 %v784, %v951
      %v988 = vadd.f32 %v785, %v956
      %v989 = vadd.f32 %v786, %v959
      %v990 = vadd.f32 %v787, %v964
      %v991 = vadd.f32 %v788, %v967
      %v992 = vadd.f32 %v789, %v972
      %v993 = vadd.f32 %v790, %v975
      %v994 = vadd.f32 %v791, %v980
      %v995 = vadd.f32 %v792, %v983
      %v996 = vld [vmem:[%s234 + $0x2c] sm:$0x3]
      %s997 = scalar_lea.vmem %s238, 256
      %v998 = vld [vmem:[%s997] sm:$0xf]
      %v999 = vld [vmem:[%s997 + $0x4] sm:$0xf]
      %v1000 = vld [vmem:[%s997 + $0x8] sm:$0xf]
      %v1001 = vld [vmem:[%s997 + $0xc] sm:$0xf]
      %v1002 = vld [vmem:[%s997 + $0x10] sm:$0xf]
      %v1003 = vld [vmem:[%s997 + $0x14] sm:$0xf]
      %v1004 = vld [vmem:[%s997 + $0x18] sm:$0xf]
      %v1005 = vld [vmem:[%s997 + $0x1c] sm:$0xf]
      %v1006 = vld [vmem:[%s997 + $0x20] sm:$0xf]
      %v1007 = vld [vmem:[%s997 + $0x24] sm:$0xf]
      %v1008 = vld [vmem:[%s997 + $0x28] sm:$0xf]
      %v1009 = vld [vmem:[%s997 + $0x2c] sm:$0xf]
      %v1010 = vld [vmem:[%s997 + $0x30] sm:$0xf]
      %v1011 = vld [vmem:[%s997 + $0x34] sm:$0xf]
      %v1012 = vld [vmem:[%s997 + $0x38] sm:$0xf]
      %v1013 = vld [vmem:[%s997 + $0x3c] sm:$0xf]
      %v1015 = vunpack.c.l.b16 %v996
      %v1016 = vpack.c.b16 %v1015, %v1015
      %vm1017 = vsmask.f32 6400
      %v1019 = vshrl.u32 %v843, 16
      %v1021 = vrot.slane %v1019, 1
      %v1022 = vshll.u32 %v843, 16
      %v1024 = vrot.slane %v1022, 2
      %v1025 = vor.u32 %v1021, %v1024
      %v1027 = vshrl.u32 %v844, 16
      %v1029 = vrot.slane %v1027, 1
      %v1030 = vshll.u32 %v844, 16
      %v1032 = vrot.slane %v1030, 2
      %v1033 = vor.u32 %v1029, %v1032
      %v1034 = vsel %vm1017, %v1025, %v1033
      %v1036 = vshrl.u32 %v845, 16
      %v1038 = vrot.slane %v1036, 1
      %v1039 = vshll.u32 %v845, 16
      %v1041 = vrot.slane %v1039, 2
      %v1042 = vor.u32 %v1038, %v1041
      %v1043 = vsel %vm1017, %v1033, %v1042
      %v1045 = vshrl.u32 %v846, 16
      %v1047 = vrot.slane %v1045, 1
      %v1048 = vshll.u32 %v846, 16
      %v1050 = vrot.slane %v1048, 2
      %v1051 = vor.u32 %v1047, %v1050
      %v1052 = vsel %vm1017, %v1042, %v1051
      %v1054 = vshrl.u32 %v847, 16
      %v1056 = vrot.slane %v1054, 1
      %v1057 = vshll.u32 %v847, 16
      %v1059 = vrot.slane %v1057, 2
      %v1060 = vor.u32 %v1056, %v1059
      %v1061 = vsel %vm1017, %v1051, %v1060
      %v1063 = vshrl.u32 %v1016, 16
      %v1065 = vrot.slane %v1063, 1
      %v1066 = vshll.u32 %v1016, 16
      %v1068 = vrot.slane %v1066, 2
      %v1069 = vor.u32 %v1065, %v1068
      %v1070 = vsel %vm1017, %v1060, %v1069
      %v1092 = vunpack.c.l.b16 %v998
      %v1093 = vunpack.c.l.b16 %v999
      %v1094 = vunpack.c.l.b16 %v1000
      %v1095 = vunpack.c.l.b16 %v1001
      %v1096 = vunpack.c.l.b16 %v1002
      %v1097 = vunpack.c.l.b16 %v1003
      %v1098 = vunpack.c.l.b16 %v1004
      %v1099 = vunpack.c.l.b16 %v1005
      %v1100 = vunpack.c.l.b16 %v1006
      %v1101 = vunpack.c.l.b16 %v1007
      %v1102 = vunpack.c.l.b16 %v1008
      %v1103 = vunpack.c.l.b16 %v1009
      %v1104 = vunpack.c.l.b16 %v1010
      %v1105 = vunpack.c.l.b16 %v1011
      %v1106 = vunpack.c.l.b16 %v1012
      %v1107 = vunpack.c.l.b16 %v1013
      %v1108 = vpack.c.b16 %v1093, %v1092
      %v1109 = vpack.c.b16 %v1095, %v1094
      %v1110 = vpack.c.b16 %v1097, %v1096
      %v1111 = vpack.c.b16 %v1099, %v1098
      %v1112 = vpack.c.b16 %v1101, %v1100
      %v1113 = vpack.c.b16 %v1103, %v1102
      %v1114 = vpack.c.b16 %v1105, %v1104
      %v1115 = vpack.c.b16 %v1107, %v1106
      %1124 = vmatprep.subr.bf16.mxu0 0
      %1125 = vmatpush1.bf16.msra.mxu0 %v1108
      %1126 = vmatprep.subr.bf16.mxu0 0
      %1127 = vmatpush1.bf16.msra.mxu0 %v1109
      %1128 = vmatprep.subr.bf16.mxu0 0
      %1129 = vmatpush1.bf16.msra.mxu0 %v1110
      %1130 = vmatprep.subr.bf16.mxu0 0
      %1131 = vmatpush1.bf16.msra.mxu0 %v1111
      %1132 = vmatprep.subr.bf16.mxu0 0
      %1133 = vmatpush1.bf16.msra.mxu0 %v1112
      %1134 = vmatprep.subr.bf16.mxu0 0
      %1135 = vmatpush1.bf16.msra.mxu0 %v1113
      %1136 = vmatprep.subr.bf16.mxu0 0
      %1137 = vmatpush1.bf16.msra.mxu0 %v1114
      %1138 = vmatprep.subr.bf16.mxu0 0
      %1139 = vmatpush1.bf16.msra.mxu0 %v1115
      %1140 = vmatprep.subr.bf16.mxu0 0
      %1141 = vmatpush1.bf16.msra.mxu0 0
      %1142 = vmatprep.subr.bf16.mxu0 0
      %1143 = vmatpush1.bf16.msra.mxu0 0
      %1144 = vmatprep.subr.bf16.mxu0 0
      %1145 = vmatpush1.bf16.msra.mxu0 0
      %1146 = vmatprep.subr.bf16.mxu0 0
      %1147 = vmatpush1.bf16.msra.mxu0 0
      %1148 = vmatprep.subr.bf16.mxu0 0
      %1149 = vmatpush1.bf16.msra.mxu0 0
      %1150 = vmatprep.subr.bf16.mxu0 0
      %1151 = vmatpush1.bf16.msra.mxu0 0
      %1152 = vmatprep.subr.bf16.mxu0 0
      %1153 = vmatpush1.bf16.msra.mxu0 0
      %1154 = vmatprep.subr.bf16.mxu0 0
      %1155 = vmatpush1.bf16.msra.mxu0 0
      %1156 = vmatprep.mubr.bf16.mxu0 0
      %1157 = vmatmul.mubr.bf16.gmra.mrb[0].mxu0 %v1034
      %v1158 = vpop.f32.mrb[0].mxu0
      %v1159 = vadd.f32 0.0, %v1158
      %v1160 = vpop.f32.mrb[0].mxu0
      %v1161 = vpop.f32.mrb[0].mxu0
      %v1162 = vadd.f32 0.0, %v1161
      %v1163 = vpop.f32.mrb[0].mxu0
      %1164 = vmatprep.mubr.bf16.mxu0 0
      %1165 = vmatmul.mubr.bf16.gmra.mrb[0].mxu0 %v1043
      %v1166 = vpop.f32.mrb[0].mxu0
      %v1167 = vadd.f32 0.0, %v1166
      %v1168 = vpop.f32.mrb[0].mxu0
      %v1169 = vpop.f32.mrb[0].mxu0
      %v1170 = vadd.f32 0.0, %v1169
      %v1171 = vpop.f32.mrb[0].mxu0
      %1172 = vmatprep.mubr.bf16.mxu0 0
      %1173 = vmatmul.mubr.bf16.gmra.mrb[0].mxu0 %v1052
      %v1174 = vpop.f32.mrb[0].mxu0
      %v1175 = vadd.f32 0.0, %v1174
      %v1176 = vpop.f32.mrb[0].mxu0
      %v1177 = vpop.f32.mrb[0].mxu0
      %v1178 = vadd.f32 0.0, %v1177
      %v1179 = vpop.f32.mrb[0].mxu0
      %1180 = vmatprep.mubr.bf16.mxu0 0
      %1181 = vmatmul.mubr.bf16.gmra.mrb[0].mxu0 %v1061
      %v1182 = vpop.f32.mrb[0].mxu0
      %v1183 = vadd.f32 0.0, %v1182
      %v1184 = vpop.f32.mrb[0].mxu0
      %v1185 = vpop.f32.mrb[0].mxu0
      %v1186 = vadd.f32 0.0, %v1185
      %v1187 = vpop.f32.mrb[0].mxu0
      %1188 = vmatprep.mubr.bf16.mxu0 0
      %1189 = vmatmul.mubr.bf16.gmra.mrb[0].mxu0 %v1070
      %v1190 = vpop.f32.mrb[0].mxu0
      %v1191 = vadd.f32 0.0, %v1190
      %v1192 = vpop.f32.mrb[0].mxu0
      %v1193 = vpop.f32.mrb[0].mxu0
      %v1194 = vadd.f32 0.0, %v1193
      %v1195 = vpop.f32.mrb[0].mxu0
      %1196 = vdwg.mxu0
      %v1197 = vadd.f32 %v986, %v1159
      %v1198 = vadd.f32 %v987, %v1162
      %v1199 = vadd.f32 %v988, %v1167
      %v1200 = vadd.f32 %v989, %v1170
      %v1201 = vadd.f32 %v990, %v1175
      %v1202 = vadd.f32 %v991, %v1178
      %v1203 = vadd.f32 %v992, %v1183
      %v1204 = vadd.f32 %v993, %v1186
      %v1205 = vadd.f32 %v994, %v1191
      %v1206 = vadd.f32 %v995, %v1194
      %v1207 = vld [vmem:[%s234 + $0x4] sm:$0xc]
      %s1208 = scalar_lea.vmem %s238, 320
      %v1209 = vld [vmem:[%s1208] sm:$0xf]
      %v1210 = vld [vmem:[%s1208 + $0x4] sm:$0xf]
      %v1211 = vld [vmem:[%s1208 + $0x8] sm:$0xf]
      %v1212 = vld [vmem:[%s1208 + $0xc] sm:$0xf]
      %v1213 = vld [vmem:[%s1208 + $0x10] sm:$0xf]
      %v1214 = vld [vmem:[%s1208 + $0x14] sm:$0xf]
      %v1215 = vld [vmem:[%s1208 + $0x18] sm:$0xf]
      %v1216 = vld [vmem:[%s1208 + $0x1c] sm:$0xf]
      %v1217 = vld [vmem:[%s1208 + $0x20] sm:$0xf]
      %v1218 = vld [vmem:[%s1208 + $0x24] sm:$0xf]
      %v1219 = vld [vmem:[%s1208 + $0x28] sm:$0xf]
      %v1220 = vld [vmem:[%s1208 + $0x2c] sm:$0xf]
      %v1221 = vld [vmem:[%s1208 + $0x30] sm:$0xf]
      %v1222 = vld [vmem:[%s1208 + $0x34] sm:$0xf]
      %v1223 = vld [vmem:[%s1208 + $0x38] sm:$0xf]
      %v1224 = vld [vmem:[%s1208 + $0x3c] sm:$0xf]
      %v1226 = vunpack.c.l.b16 %v1207
      %v1227 = vpack.c.b16 %v833, %v1226
      %vm1228 = vcmask 1045504
      %v1229 = vrot.slane %v1227, 2
      %v1230 = vrot.slane %v844, 2
      %v1231 = vsel %vm1228, %v1229, %v1230
      %v1232 = vrot.slane %v845, 2
      %v1233 = vsel %vm1228, %v1230, %v1232
      %v1234 = vrot.slane %v846, 2
      %v1235 = vsel %vm1228, %v1232, %v1234
      %v1236 = vrot.slane %v847, 2
      %v1237 = vsel %vm1228, %v1234, %v1236
      %v1238 = vrot.slane %v1016, 2
      %v1239 = vsel %vm1228, %v1236, %v1238
      %v1261 = vunpack.c.l.b16 %v1209
      %v1262 = vunpack.c.l.b16 %v1210
      %v1263 = vunpack.c.l.b16 %v1211
      %v1264 = vunpack.c.l.b16 %v1212
      %v1265 = vunpack.c.l.b16 %v1213
      %v1266 = vunpack.c.l.b16 %v1214
      %v1267 = vunpack.c.l.b16 %v1215
      %v1268 = vunpack.c.l.b16 %v1216
      %v1269 = vunpack.c.l.b16 %v1217
      %v1270 = vunpack.c.l.b16 %v1218
      %v1271 = vunpack.c.l.b16 %v1219
      %v1272 = vunpack.c.l.b16 %v1220
      %v1273 = vunpack.c.l.b16 %v1221
      %v1274 = vunpack.c.l.b16 %v1222
      %v1275 = vunpack.c.l.b16 %v1223
      %v1276 = vunpack.c.l.b16 %v1224
      %v1277 = vpack.c.b16 %v1262, %v1261
      %v1278 = vpack.c.b16 %v1264, %v1263
      %v1279 = vpack.c.b16 %v1266, %v1265
      %v1280 = vpack.c.b16 %v1268, %v1267
      %v1281 = vpack.c.b16 %v1270, %v1269
      %v1282 = vpack.c.b16 %v1272, %v1271
      %v1283 = vpack.c.b16 %v1274, %v1273
      %v1284 = vpack.c.b16 %v1276, %v1275
      %1293 = vmatprep.subr.bf16.mxu0 0
      %1294 = vmatpush1.bf16.msra.mxu0 %v1277
      %1295 = vmatprep.subr.bf16.mxu0 0
      %1296 = vmatpush1.bf16.msra.mxu0 %v1278
      %1297 = vmatprep.subr.bf16.mxu0 0
      %1298 = vmatpush1.bf16.msra.mxu0 %v1279
      %1299 = vmatprep.subr.bf16.mxu0 0
      %1300 = vmatpush1.bf16.msra.mxu0 %v1280
      %1301 = vmatprep.subr.bf16.mxu0 0
      %1302 = vmatpush1.bf16.msra.mxu0 %v1281
      %1303 = vmatprep.subr.bf16.mxu0 0
      %1304 = vmatpush1.bf16.msra.mxu0 %v1282
      %1305 = vmatprep.subr.bf16.mxu0 0
      %1306 = vmatpush1.bf16.msra.mxu0 %v1283
      %1307 = vmatprep.subr.bf16.mxu0 0
      %1308 = vmatpush1.bf16.msra.mxu0 %v1284
      %1309 = vmatprep.subr.bf16.mxu0 0
      %1310 = vmatpush1.bf16.msra.mxu0 0
      %1311 = vmatprep.subr.bf16.mxu0 0
      %1312 = vmatpush1.bf16.msra.mxu0 0
      %1313 = vmatprep.subr.bf16.mxu0 0
      %1314 = vmatpush1.bf16.msra.mxu0 0
      %1315 = vmatprep.subr.bf16.mxu0 0
      %1316 = vmatpush1.bf16.msra.mxu0 0
      %1317 = vmatprep.subr.bf16.mxu0 0
      %1318 = vmatpush1.bf16.msra.mxu0 0
      %1319 = vmatprep.subr.bf16.mxu0 0
      %1320 = vmatpush1.bf16.msra.mxu0 0
      %1321 = vmatprep.subr.bf16.mxu0 0
      %1322 = vmatpush1.bf16.msra.mxu0 0
      %1323 = vmatprep.subr.bf16.mxu0 0
      %1324 = vmatpush1.bf16.msra.mxu0 0
      %1325 = vmatprep.mubr.bf16.mxu0 0
      %1326 = vmatmul.mubr.bf16.gmra.mrb[0].mxu0 %v1231
      %v1327 = vpop.f32.mrb[0].mxu0
      %v1328 = vadd.f32 0.0, %v1327
      %v1329 = vpop.f32.mrb[0].mxu0
      %v1330 = vpop.f32.mrb[0].mxu0
      %v1331 = vadd.f32 0.0, %v1330
      %v1332 = vpop.f32.mrb[0].mxu0
      %1333 = vmatprep.mubr.bf16.mxu0 0
      %1334 = vmatmul.mubr.bf16.gmra.mrb[0].mxu0 %v1233
      %v1335 = vpop.f32.mrb[0].mxu0
      %v1336 = vadd.f32 0.0, %v1335
      %v1337 = vpop.f32.mrb[0].mxu0
      %v1338 = vpop.f32.mrb[0].mxu0
      %v1339 = vadd.f32 0.0, %v1338
      %v1340 = vpop.f32.mrb[0].mxu0
      %1341 = vmatprep.mubr.bf16.mxu0 0
      %1342 = vmatmul.mubr.bf16.gmra.mrb[0].mxu0 %v1235
      %v1343 = vpop.f32.mrb[0].mxu0
      %v1344 = vadd.f32 0.0, %v1343
      %v1345 = vpop.f32.mrb[0].mxu0
      %v1346 = vpop.f32.mrb[0].mxu0
      %v1347 = vadd.f32 0.0, %v1346
      %v1348 = vpop.f32.mrb[0].mxu0
      %1349 = vmatprep.mubr.bf16.mxu0 0
      %1350 = vmatmul.mubr.bf16.gmra.mrb[0].mxu0 %v1237
      %v1351 = vpop.f32.mrb[0].mxu0
      %v1352 = vadd.f32 0.0, %v1351
      %v1353 = vpop.f32.mrb[0].mxu0
      %v1354 = vpop.f32.mrb[0].mxu0
      %v1355 = vadd.f32 0.0, %v1354
      %v1356 = vpop.f32.mrb[0].mxu0
      %1357 = vmatprep.mubr.bf16.mxu0 0
      %1358 = vmatmul.mubr.bf16.gmra.mrb[0].mxu0 %v1239
      %v1359 = vpop.f32.mrb[0].mxu0
      %v1360 = vadd.f32 0.0, %v1359
      %v1361 = vpop.f32.mrb[0].mxu0
      %v1362 = vpop.f32.mrb[0].mxu0
      %v1363 = vadd.f32 0.0, %v1362
      %v1364 = vpop.f32.mrb[0].mxu0
      %1365 = vdwg.mxu0
      %v1366 = vadd.f32 %v1197, %v1328
      %v1367 = vadd.f32 %v1198, %v1331
      %v1368 = vadd.f32 %v1199, %v1336
      %v1369 = vadd.f32 %v1200, %v1339
      %v1370 = vadd.f32 %v1201, %v1344
      %v1371 = vadd.f32 %v1202, %v1347
      %v1372 = vadd.f32 %v1203, %v1352
      %v1373 = vadd.f32 %v1204, %v1355
      %v1374 = vadd.f32 %v1205, %v1360
      %v1375 = vadd.f32 %v1206, %v1363
      %v1376 = vld [vmem:[%s234 + $0x8] sm:$0xc]
      %v1377 = vld [vmem:[%s234 + $0xc] sm:$0xf]
      %v1378 = vld [vmem:[%s234 + $0x10] sm:$0xf]
      %v1379 = vld [vmem:[%s234 + $0x14] sm:$0xf]
      %v1380 = vld [vmem:[%s234 + $0x18] sm:$0xf]
      %v1381 = vld [vmem:[%s234 + $0x1c] sm:$0xf]
      %v1382 = vld [vmem:[%s234 + $0x20] sm:$0xf]
      %v1383 = vld [vmem:[%s234 + $0x24] sm:$0xf]
      %v1384 = vld [vmem:[%s234 + $0x28] sm:$0xf]
      %v1385 = vld [vmem:[%s234 + $0x2c] sm:$0xf]
      %v1386 = vld [vmem:[%s234 + $0x30] sm:$0x3]
      %s1387 = scalar_lea.vmem %s238, 384
      %v1388 = vld [vmem:[%s1387] sm:$0xf]
      %v1389 = vld [vmem:[%s1387 + $0x4] sm:$0xf]
      %v1390 = vld [vmem:[%s1387 + $0x8] sm:$0xf]
      %v1391 = vld [vmem:[%s1387 + $0xc] sm:$0xf]
      %v1392 = vld [vmem:[%s1387 + $0x10] sm:$0xf]
      %v1393 = vld [vmem:[%s1387 + $0x14] sm:$0xf]
      %v1394 = vld [vmem:[%s1387 + $0x18] sm:$0xf]
      %v1395 = vld [vmem:[%s1387 + $0x1c] sm:$0xf]
      %v1396 = vld [vmem:[%s1387 + $0x20] sm:$0xf]
      %v1397 = vld [vmem:[%s1387 + $0x24] sm:$0xf]
      %v1398 = vld [vmem:[%s1387 + $0x28] sm:$0xf]
      %v1399 = vld [vmem:[%s1387 + $0x2c] sm:$0xf]
      %v1400 = vld [vmem:[%s1387 + $0x30] sm:$0xf]
      %v1401 = vld [vmem:[%s1387 + $0x34] sm:$0xf]
      %v1402 = vld [vmem:[%s1387 + $0x38] sm:$0xf]
      %v1403 = vld [vmem:[%s1387 + $0x3c] sm:$0xf]
      %v1415 = vunpack.c.l.b16 %v1376
      %v1416 = vunpack.c.l.b16 %v1377
      %v1417 = vunpack.c.l.b16 %v1378
      %v1418 = vunpack.c.l.b16 %v1379
      %v1419 = vunpack.c.l.b16 %v1380
      %v1420 = vunpack.c.l.b16 %v1381
      %v1421 = vunpack.c.l.b16 %v1382
      %v1422 = vunpack.c.l.b16 %v1383
      %v1423 = vunpack.c.l.b16 %v1384
      %v1424 = vunpack.c.l.b16 %v1385
      %v1425 = vunpack.c.l.b16 %v1386
      %v1426 = vpack.c.b16 %v1416, %v1415
      %v1427 = vpack.c.b16 %v1418, %v1417
      %v1428 = vpack.c.b16 %v1420, %v1419
      %v1429 = vpack.c.b16 %v1422, %v1421
      %v1430 = vpack.c.b16 %v1424, %v1423
      %v1431 = vpack.c.b16 %v1425, %v1425
      %v1432 = vrot.slane %v1426, 2
      %v1433 = vrot.slane %v1427, 2
      %v1434 = vsel %vm1228, %v1432, %v1433
      %v1435 = vrot.slane %v1428, 2
      %v1436 = vsel %vm1228, %v1433, %v1435
      %v1437 = vrot.slane %v1429, 2
      %v1438 = vsel %vm1228, %v1435, %v1437
      %v1439 = vrot.slane %v1430, 2
      %v1440 = vsel %vm1228, %v1437, %v1439
      %v1441 = vrot.slane %v1431, 2
      %v1442 = vsel %vm1228, %v1439, %v1441
      %v1464 = vunpack.c.l.b16 %v1388
      %v1465 = vunpack.c.l.b16 %v1389
      %v1466 = vunpack.c.l.b16 %v1390
      %v1467 = vunpack.c.l.b16 %v1391
      %v1468 = vunpack.c.l.b16 %v1392
      %v1469 = vunpack.c.l.b16 %v1393
      %v1470 = vunpack.c.l.b16 %v1394
      %v1471 = vunpack.c.l.b16 %v1395
      %v1472 = vunpack.c.l.b16 %v1396
      %v1473 = vunpack.c.l.b16 %v1397
      %v1474 = vunpack.c.l.b16 %v1398
      %v1475 = vunpack.c.l.b16 %v1399
      %v1476 = vunpack.c.l.b16 %v1400
      %v1477 = vunpack.c.l.b16 %v1401
      %v1478 = vunpack.c.l.b16 %v1402
      %v1479 = vunpack.c.l.b16 %v1403
      %v1480 = vpack.c.b16 %v1465, %v1464
      %v1481 = vpack.c.b16 %v1467, %v1466
      %v1482 = vpack.c.b16 %v1469, %v1468
      %v1483 = vpack.c.b16 %v1471, %v1470
      %v1484 = vpack.c.b16 %v1473, %v1472
      %v1485 = vpack.c.b16 %v1475, %v1474
      %v1486 = vpack.c.b16 %v1477, %v1476
      %v1487 = vpack.c.b16 %v1479, %v1478
      %1496 = vmatprep.subr.bf16.mxu0 0
      %1497 = vmatpush1.bf16.msra.mxu0 %v1480
      %1498 = vmatprep.subr.bf16.mxu0 0
      %1499 = vmatpush1.bf16.msra.mxu0 %v1481
      %1500 = vmatprep.subr.bf16.mxu0 0
      %1501 = vmatpush1.bf16.msra.mxu0 %v1482
      %1502 = vmatprep.subr.bf16.mxu0 0
      %1503 = vmatpush1.bf16.msra.mxu0 %v1483
      %1504 = vmatprep.subr.bf16.mxu0 0
      %1505 = vmatpush1.bf16.msra.mxu0 %v1484
      %1506 = vmatprep.subr.bf16.mxu0 0
      %1507 = vmatpush1.bf16.msra.mxu0 %v1485
      %1508 = vmatprep.subr.bf16.mxu0 0
      %1509 = vmatpush1.bf16.msra.mxu0 %v1486
      %1510 = vmatprep.subr.bf16.mxu0 0
      %1511 = vmatpush1.bf16.msra.mxu0 %v1487
      %1512 = vmatprep.subr.bf16.mxu0 0
      %1513 = vmatpush1.bf16.msra.mxu0 0
      %1514 = vmatprep.subr.bf16.mxu0 0
      %1515 = vmatpush1.bf16.msra.mxu0 0
      %1516 = vmatprep.subr.bf16.mxu0 0
      %1517 = vmatpush1.bf16.msra.mxu0 0
      %1518 = vmatprep.subr.bf16.mxu0 0
      %1519 = vmatpush1.bf16.msra.mxu0 0
      %1520 = vmatprep.subr.bf16.mxu0 0
      %1521 = vmatpush1.bf16.msra.mxu0 0
      %1522 = vmatprep.subr.bf16.mxu0 0
      %1523 = vmatpush1.bf16.msra.mxu0 0
      %1524 = vmatprep.subr.bf16.mxu0 0
      %1525 = vmatpush1.bf16.msra.mxu0 0
      %1526 = vmatprep.subr.bf16.mxu0 0
      %1527 = vmatpush1.bf16.msra.mxu0 0
      %1528 = vmatprep.mubr.bf16.mxu0 0
      %1529 = vmatmul.mubr.bf16.gmra.mrb[0].mxu0 %v1434
      %v1530 = vpop.f32.mrb[0].mxu0
      %v1531 = vadd.f32 0.0, %v1530
      %v1532 = vpop.f32.mrb[0].mxu0
      %v1533 = vpop.f32.mrb[0].mxu0
      %v1534 = vadd.f32 0.0, %v1533
      %v1535 = vpop.f32.mrb[0].mxu0
      %1536 = vmatprep.mubr.bf16.mxu0 0
      %1537 = vmatmul.mubr.bf16.gmra.mrb[0].mxu0 %v1436
      %v1538 = vpop.f32.mrb[0].mxu0
      %v1539 = vadd.f32 0.0, %v1538
      %v1540 = vpop.f32.mrb[0].mxu0
      %v1541 = vpop.f32.mrb[0].mxu0
      %v1542 = vadd.f32 0.0, %v1541
      %v1543 = vpop.f32.mrb[0].mxu0
      %1544 = vmatprep.mubr.bf16.mxu0 0
      %1545 = vmatmul.mubr.bf16.gmra.mrb[0].mxu0 %v1438
      %v1546 = vpop.f32.mrb[0].mxu0
      %v1547 = vadd.f32 0.0, %v1546
      %v1548 = vpop.f32.mrb[0].mxu0
      %v1549 = vpop.f32.mrb[0].mxu0
      %v1550 = vadd.f32 0.0, %v1549
      %v1551 = vpop.f32.mrb[0].mxu0
      %1552 = vmatprep.mubr.bf16.mxu0 0
      %1553 = vmatmul.mubr.bf16.gmra.mrb[0].mxu0 %v1440
      %v1554 = vpop.f32.mrb[0].mxu0
      %v1555 = vadd.f32 0.0, %v1554
      %v1556 = vpop.f32.mrb[0].mxu0
      %v1557 = vpop.f32.mrb[0].mxu0
      %v1558 = vadd.f32 0.0, %v1557
      %v1559 = vpop.f32.mrb[0].mxu0
      %1560 = vmatprep.mubr.bf16.mxu0 0
      %1561 = vmatmul.mubr.bf16.gmra.mrb[0].mxu0 %v1442
      %v1562 = vpop.f32.mrb[0].mxu0
      %v1563 = vadd.f32 0.0, %v1562
      %v1564 = vpop.f32.mrb[0].mxu0
      %v1565 = vpop.f32.mrb[0].mxu0
      %v1566 = vadd.f32 0.0, %v1565
      %v1567 = vpop.f32.mrb[0].mxu0
      %1568 = vdwg.mxu0
      %v1569 = vadd.f32 %v1366, %v1531
      %v1570 = vadd.f32 %v1367, %v1534
      %v1571 = vadd.f32 %v1368, %v1539
      %v1572 = vadd.f32 %v1369, %v1542
      %v1573 = vadd.f32 %v1370, %v1547
      %v1574 = vadd.f32 %v1371, %v1550
      %v1575 = vadd.f32 %v1372, %v1555
      %v1576 = vadd.f32 %v1373, %v1558
      %v1577 = vadd.f32 %v1374, %v1563
      %v1578 = vadd.f32 %v1375, %v1566
      %v1579 = vld [vmem:[%s234 + $0x30] sm:$0x7]
      %s1580 = scalar_lea.vmem %s238, 448
      %v1581 = vld [vmem:[%s1580] sm:$0xf]
      %v1582 = vld [vmem:[%s1580 + $0x4] sm:$0xf]
      %v1583 = vld [vmem:[%s1580 + $0x8] sm:$0xf]
      %v1584 = vld [vmem:[%s1580 + $0xc] sm:$0xf]
      %v1585 = vld [vmem:[%s1580 + $0x10] sm:$0xf]
      %v1586 = vld [vmem:[%s1580 + $0x14] sm:$0xf]
      %v1587 = vld [vmem:[%s1580 + $0x18] sm:$0xf]
      %v1588 = vld [vmem:[%s1580 + $0x1c] sm:$0xf]
      %v1589 = vld [vmem:[%s1580 + $0x20] sm:$0xf]
      %v1590 = vld [vmem:[%s1580 + $0x24] sm:$0xf]
      %v1591 = vld [vmem:[%s1580 + $0x28] sm:$0xf]
      %v1592 = vld [vmem:[%s1580 + $0x2c] sm:$0xf]
      %v1593 = vld [vmem:[%s1580 + $0x30] sm:$0xf]
      %v1594 = vld [vmem:[%s1580 + $0x34] sm:$0xf]
      %v1595 = vld [vmem:[%s1580 + $0x38] sm:$0xf]
      %v1596 = vld [vmem:[%s1580 + $0x3c] sm:$0xf]
      %v1598 = vunpack.c.l.b16 %v1579
      %v1599 = vpack.c.b16 %v1598, %v1598
      %vm1600 = vsmask.f32 5376
      %v1602 = vshrl.u32 %v1426, 16
      %v1604 = vrot.slane %v1602, 2
      %v1605 = vshll.u32 %v1426, 16
      %v1607 = vrot.slane %v1605, 3
      %v1608 = vor.u32 %v1604, %v1607
      %v1610 = vshrl.u32 %v1427, 16
      %v1612 = vrot.slane %v1610, 2
      %v1613 = vshll.u32 %v1427, 16
      %v1615 = vrot.slane %v1613, 3
      %v1616 = vor.u32 %v1612, %v1615
      %v1617 = vsel %vm1600, %v1608, %v1616
      %v1619 = vshrl.u32 %v1428, 16
      %v1621 = vrot.slane %v1619, 2
      %v1622 = vshll.u32 %v1428, 16
      %v1624 = vrot.slane %v1622, 3
      %v1625 = vor.u32 %v1621, %v1624
      %v1626 = vsel %vm1600, %v1616, %v1625
      %v1628 = vshrl.u32 %v1429, 16
      %v1630 = vrot.slane %v1628, 2
      %v1631 = vshll.u32 %v1429, 16
      %v1633 = vrot.slane %v1631, 3
      %v1634 = vor.u32 %v1630, %v1633
      %v1635 = vsel %vm1600, %v1625, %v1634
      %v1637 = vshrl.u32 %v1430, 16
      %v1639 = vrot.slane %v1637, 2
      %v1640 = vshll.u32 %v1430, 16
      %v1642 = vrot.slane %v1640, 3
      %v1643 = vor.u32 %v1639, %v1642
      %v1644 = vsel %vm1600, %v1634, %v1643
      %v1646 = vshrl.u32 %v1599, 16
      %v1648 = vrot.slane %v1646, 2
      %v1649 = vshll.u32 %v1599, 16
      %v1651 = vrot.slane %v1649, 3
      %v1652 = vor.u32 %v1648, %v1651
      %v1653 = vsel %vm1600, %v1643, %v1652
      %v1675 = vunpack.c.l.b16 %v1581
      %v1676 = vunpack.c.l.b16 %v1582
      %v1677 = vunpack.c.l.b16 %v1583
      %v1678 = vunpack.c.l.b16 %v1584
      %v1679 = vunpack.c.l.b16 %v1585
      %v1680 = vunpack.c.l.b16 %v1586
      %v1681 = vunpack.c.l.b16 %v1587
      %v1682 = vunpack.c.l.b16 %v1588
      %v1683 = vunpack.c.l.b16 %v1589
      %v1684 = vunpack.c.l.b16 %v1590
      %v1685 = vunpack.c.l.b16 %v1591
      %v1686 = vunpack.c.l.b16 %v1592
      %v1687 = vunpack.c.l.b16 %v1593
      %v1688 = vunpack.c.l.b16 %v1594
      %v1689 = vunpack.c.l.b16 %v1595
      %v1690 = vunpack.c.l.b16 %v1596
      %v1691 = vpack.c.b16 %v1676, %v1675
      %v1692 = vpack.c.b16 %v1678, %v1677
      %v1693 = vpack.c.b16 %v1680, %v1679
      %v1694 = vpack.c.b16 %v1682, %v1681
      %v1695 = vpack.c.b16 %v1684, %v1683
      %v1696 = vpack.c.b16 %v1686, %v1685
      %v1697 = vpack.c.b16 %v1688, %v1687
      %v1698 = vpack.c.b16 %v1690, %v1689
      %1707 = vmatprep.subr.bf16.mxu0 0
      %1708 = vmatpush1.bf16.msra.mxu0 %v1691
      %1709 = vmatprep.subr.bf16.mxu0 0
      %1710 = vmatpush1.bf16.msra.mxu0 %v1692
      %1711 = vmatprep.subr.bf16.mxu0 0
      %1712 = vmatpush1.bf16.msra.mxu0 %v1693
      %1713 = vmatprep.subr.bf16.mxu0 0
      %1714 = vmatpush1.bf16.msra.mxu0 %v1694
      %1715 = vmatprep.subr.bf16.mxu0 0
      %1716 = vmatpush1.bf16.msra.mxu0 %v1695
      %1717 = vmatprep.subr.bf16.mxu0 0
      %1718 = vmatpush1.bf16.msra.mxu0 %v1696
      %1719 = vmatprep.subr.bf16.mxu0 0
      %1720 = vmatpush1.bf16.msra.mxu0 %v1697
      %1721 = vmatprep.subr.bf16.mxu0 0
      %1722 = vmatpush1.bf16.msra.mxu0 %v1698
      %1723 = vmatprep.subr.bf16.mxu0 0
      %1724 = vmatpush1.bf16.msra.mxu0 0
      %1725 = vmatprep.subr.bf16.mxu0 0
      %1726 = vmatpush1.bf16.msra.mxu0 0
      %1727 = vmatprep.subr.bf16.mxu0 0
      %1728 = vmatpush1.bf16.msra.mxu0 0
      %1729 = vmatprep.subr.bf16.mxu0 0
      %1730 = vmatpush1.bf16.msra.mxu0 0
      %1731 = vmatprep.subr.bf16.mxu0 0
      %1732 = vmatpush1.bf16.msra.mxu0 0
      %1733 = vmatprep.subr.bf16.mxu0 0
      %1734 = vmatpush1.bf16.msra.mxu0 0
      %1735 = vmatprep.subr.bf16.mxu0 0
      %1736 = vmatpush1.bf16.msra.mxu0 0
      %1737 = vmatprep.subr.bf16.mxu0 0
      %1738 = vmatpush1.bf16.msra.mxu0 0
      %1739 = vmatprep.mubr.bf16.mxu0 0
      %1740 = vmatmul.mubr.bf16.gmra.mrb[0].mxu0 %v1617
      %v1741 = vpop.f32.mrb[0].mxu0
      %v1742 = vadd.f32 0.0, %v1741
      %v1743 = vpop.f32.mrb[0].mxu0
      %v1744 = vpop.f32.mrb[0].mxu0
      %v1745 = vadd.f32 0.0, %v1744
      %v1746 = vpop.f32.mrb[0].mxu0
      %1747 = vmatprep.mubr.bf16.mxu0 0
      %1748 = vmatmul.mubr.bf16.gmra.mrb[0].mxu0 %v1626
      %v1749 = vpop.f32.mrb[0].mxu0
      %v1750 = vadd.f32 0.0, %v1749
      %v1751 = vpop.f32.mrb[0].mxu0
      %v1752 = vpop.f32.mrb[0].mxu0
      %v1753 = vadd.f32 0.0, %v1752
      %v1754 = vpop.f32.mrb[0].mxu0
      %1755 = vmatprep.mubr.bf16.mxu0 0
      %1756 = vmatmul.mubr.bf16.gmra.mrb[0].mxu0 %v1635
      %v1757 = vpop.f32.mrb[0].mxu0
      %v1758 = vadd.f32 0.0, %v1757
      %v1759 = vpop.f32.mrb[0].mxu0
      %v1760 = vpop.f32.mrb[0].mxu0
      %v1761 = vadd.f32 0.0, %v1760
      %v1762 = vpop.f32.mrb[0].mxu0
      %1763 = vmatprep.mubr.bf16.mxu0 0
      %1764 = vmatmul.mubr.bf16.gmra.mrb[0].mxu0 %v1644
      %v1765 = vpop.f32.mrb[0].mxu0
      %v1766 = vadd.f32 0.0, %v1765
      %v1767 = vpop.f32.mrb[0].mxu0
      %v1768 = vpop.f32.mrb[0].mxu0
      %v1769 = vadd.f32 0.0, %v1768
      %v1770 = vpop.f32.mrb[0].mxu0
      %1771 = vmatprep.mubr.bf16.mxu0 0
      %1772 = vmatmul.mubr.bf16.gmra.mrb[0].mxu0 %v1653
      %v1773 = vpop.f32.mrb[0].mxu0
      %v1774 = vadd.f32 0.0, %v1773
      %v1775 = vpop.f32.mrb[0].mxu0
      %v1776 = vpop.f32.mrb[0].mxu0
      %v1777 = vadd.f32 0.0, %v1776
      %v1778 = vpop.f32.mrb[0].mxu0
      %1779 = vdwg.mxu0
      %v1780 = vadd.f32 %v1569, %v1742
      %v1781 = vadd.f32 %v1570, %v1745
      %v1782 = vadd.f32 %v1571, %v1750
      %v1783 = vadd.f32 %v1572, %v1753
      %v1784 = vadd.f32 %v1573, %v1758
      %v1785 = vadd.f32 %v1574, %v1761
      %v1786 = vadd.f32 %v1575, %v1766
      %v1787 = vadd.f32 %v1576, %v1769
      %v1788 = vadd.f32 %v1577, %v1774
      %v1789 = vadd.f32 %v1578, %v1777
      %v1790 = vld [vmem:[%s234 + $0x8] sm:$0x8]
      %s1791 = scalar_lea.vmem %s238, 512
      %v1792 = vld [vmem:[%s1791] sm:$0xf]
      %v1793 = vld [vmem:[%s1791 + $0x4] sm:$0xf]
      %v1794 = vld [vmem:[%s1791 + $0x8] sm:$0xf]
      %v1795 = vld [vmem:[%s1791 + $0xc] sm:$0xf]
      %v1796 = vld [vmem:[%s1791 + $0x10] sm:$0xf]
      %v1797 = vld [vmem:[%s1791 + $0x14] sm:$0xf]
      %v1798 = vld [vmem:[%s1791 + $0x18] sm:$0xf]
      %v1799 = vld [vmem:[%s1791 + $0x1c] sm:$0xf]
      %v1800 = vld [vmem:[%s1791 + $0x20] sm:$0xf]
      %v1801 = vld [vmem:[%s1791 + $0x24] sm:$0xf]
      %v1802 = vld [vmem:[%s1791 + $0x28] sm:$0xf]
      %v1803 = vld [vmem:[%s1791 + $0x2c] sm:$0xf]
      %v1804 = vld [vmem:[%s1791 + $0x30] sm:$0xf]
      %v1805 = vld [vmem:[%s1791 + $0x34] sm:$0xf]
      %v1806 = vld [vmem:[%s1791 + $0x38] sm:$0xf]
      %v1807 = vld [vmem:[%s1791 + $0x3c] sm:$0xf]
      %v1809 = vunpack.c.l.b16 %v1790
      %v1810 = vpack.c.b16 %v1416, %v1809
      %vm1811 = vcmask 1044480
      %v1812 = vrot.slane %v1810, 3
      %v1813 = vrot.slane %v1427, 3
      %v1814 = vsel %vm1811, %v1812, %v1813
      %v1815 = vrot.slane %v1428, 3
      %v1816 = vsel %vm1811, %v1813, %v1815
      %v1817 = vrot.slane %v1429, 3
      %v1818 = vsel %vm1811, %v1815, %v1817
      %v1819 = vrot.slane %v1430, 3
      %v1820 = vsel %vm1811, %v1817, %v1819
      %v1821 = vrot.slane %v1599, 3
      %v1822 = vsel %vm1811, %v1819, %v1821
      %v1844 = vunpack.c.l.b16 %v1792
      %v1845 = vunpack.c.l.b16 %v1793
      %v1846 = vunpack.c.l.b16 %v1794
      %v1847 = vunpack.c.l.b16 %v1795
      %v1848 = vunpack.c.l.b16 %v1796
      %v1849 = vunpack.c.l.b16 %v1797
      %v1850 = vunpack.c.l.b16 %v1798
      %v1851 = vunpack.c.l.b16 %v1799
      %v1852 = vunpack.c.l.b16 %v1800
      %v1853 = vunpack.c.l.b16 %v1801
      %v1854 = vunpack.c.l.b16 %v1802
      %v1855 = vunpack.c.l.b16 %v1803
      %v1856 = vunpack.c.l.b16 %v1804
      %v1857 = vunpack.c.l.b16 %v1805
      %v1858 = vunpack.c.l.b16 %v1806
      %v1859 = vunpack.c.l.b16 %v1807
      %v1860 = vpack.c.b16 %v1845, %v1844
      %v1861 = vpack.c.b16 %v1847, %v1846
      %v1862 = vpack.c.b16 %v1849, %v1848
      %v1863 = vpack.c.b16 %v1851, %v1850
      %v1864 = vpack.c.b16 %v1853, %v1852
      %v1865 = vpack.c.b16 %v1855, %v1854
      %v1866 = vpack.c.b16 %v1857, %v1856
      %v1867 = vpack.c.b16 %v1859, %v1858
      %1876 = vmatprep.subr.bf16.mxu0 0
      %1877 = vmatpush1.bf16.msra.mxu0 %v1860
      %1878 = vmatprep.subr.bf16.mxu0 0
      %1879 = vmatpush1.bf16.msra.mxu0 %v1861
      %1880 = vmatprep.subr.bf16.mxu0 0
      %1881 = vmatpush1.bf16.msra.mxu0 %v1862
      %1882 = vmatprep.subr.bf16.mxu0 0
      %1883 = vmatpush1.bf16.msra.mxu0 %v1863
      %1884 = vmatprep.subr.bf16.mxu0 0
      %1885 = vmatpush1.bf16.msra.mxu0 %v1864
      %1886 = vmatprep.subr.bf16.mxu0 0
      %1887 = vmatpush1.bf16.msra.mxu0 %v1865
      %1888 = vmatprep.subr.bf16.mxu0 0
      %1889 = vmatpush1.bf16.msra.mxu0 %v1866
      %1890 = vmatprep.subr.bf16.mxu0 0
      %1891 = vmatpush1.bf16.msra.mxu0 %v1867
      %1892 = vmatprep.subr.bf16.mxu0 0
      %1893 = vmatpush1.bf16.msra.mxu0 0
      %1894 = vmatprep.subr.bf16.mxu0 0
      %1895 = vmatpush1.bf16.msra.mxu0 0
      %1896 = vmatprep.subr.bf16.mxu0 0
      %1897 = vmatpush1.bf16.msra.mxu0 0
      %1898 = vmatprep.subr.bf16.mxu0 0
      %1899 = vmatpush1.bf16.msra.mxu0 0
      %1900 = vmatprep.subr.bf16.mxu0 0
      %1901 = vmatpush1.bf16.msra.mxu0 0
      %1902 = vmatprep.subr.bf16.mxu0 0
      %1903 = vmatpush1.bf16.msra.mxu0 0
      %1904 = vmatprep.subr.bf16.mxu0 0
      %1905 = vmatpush1.bf16.msra.mxu0 0
      %1906 = vmatprep.subr.bf16.mxu0 0
      %1907 = vmatpush1.bf16.msra.mxu0 0
      %1908 = vmatprep.mubr.bf16.mxu0 0
      %1909 = vmatmul.mubr.bf16.gmra.mrb[0].mxu0 %v1814
      %v1910 = vpop.f32.mrb[0].mxu0
      %v1911 = vadd.f32 0.0, %v1910
      %v1912 = vpop.f32.mrb[0].mxu0
      %v1913 = vpop.f32.mrb[0].mxu0
      %v1914 = vadd.f32 0.0, %v1913
      %v1915 = vpop.f32.mrb[0].mxu0
      %1916 = vmatprep.mubr.bf16.mxu0 0
      %1917 = vmatmul.mubr.bf16.gmra.mrb[0].mxu0 %v1816
      %v1918 = vpop.f32.mrb[0].mxu0
      %v1919 = vadd.f32 0.0, %v1918
      %v1920 = vpop.f32.mrb[0].mxu0
      %v1921 = vpop.f32.mrb[0].mxu0
      %v1922 = vadd.f32 0.0, %v1921
      %v1923 = vpop.f32.mrb[0].mxu0
      %1924 = vmatprep.mubr.bf16.mxu0 0
      %1925 = vmatmul.mubr.bf16.gmra.mrb[0].mxu0 %v1818
      %v1926 = vpop.f32.mrb[0].mxu0
      %v1927 = vadd.f32 0.0, %v1926
      %v1928 = vpop.f32.mrb[0].mxu0
      %v1929 = vpop.f32.mrb[0].mxu0
      %v1930 = vadd.f32 0.0, %v1929
      %v1931 = vpop.f32.mrb[0].mxu0
      %1932 = vmatprep.mubr.bf16.mxu0 0
      %1933 = vmatmul.mubr.bf16.gmra.mrb[0].mxu0 %v1820
      %v1934 = vpop.f32.mrb[0].mxu0
      %v1935 = vadd.f32 0.0, %v1934
      %v1936 = vpop.f32.mrb[0].mxu0
      %v1937 = vpop.f32.mrb[0].mxu0
      %v1938 = vadd.f32 0.0, %v1937
      %v1939 = vpop.f32.mrb[0].mxu0
      %1940 = vmatprep.mubr.bf16.mxu0 0
      %1941 = vmatmul.mubr.bf16.gmra.mrb[0].mxu0 %v1822
      %v1942 = vpop.f32.mrb[0].mxu0
      %v1943 = vadd.f32 0.0, %v1942
      %v1944 = vpop.f32.mrb[0].mxu0
      %v1945 = vpop.f32.mrb[0].mxu0
      %v1946 = vadd.f32 0.0, %v1945
      %v1947 = vpop.f32.mrb[0].mxu0
      %1948 = vdwg.mxu0
      %v1949 = vadd.f32 %v1780, %v1911
      %v1950 = vadd.f32 %v1781, %v1914
      %v1951 = vadd.f32 %v1782, %v1919
      %v1952 = vadd.f32 %v1783, %v1922
      %v1953 = vadd.f32 %v1784, %v1927
      %v1954 = vadd.f32 %v1785, %v1930
      %v1955 = vadd.f32 %v1786, %v1935
      %v1956 = vadd.f32 %v1787, %v1938
      %v1957 = vadd.f32 %v1788, %v1943
      %v1958 = vadd.f32 %v1789, %v1946
      %v1959 = vpack.c.bf16 %v1950, %v1949
      %v1960 = vpack.c.bf16 %v1952, %v1951
      %v1961 = vpack.c.bf16 %v1954, %v1953
      %v1962 = vpack.c.bf16 %v1956, %v1955
      %v1963 = vpack.c.bf16 %v1958, %v1957
      %v1969 = vunpack.c.l.b16 %v1959
      %v1970 = vunpack.c.h.b16 %v1959
      %v1971 = vunpack.c.l.b16 %v1960
      %v1972 = vunpack.c.h.b16 %v1960
      %v1973 = vunpack.c.l.b16 %v1961
      %v1974 = vunpack.c.h.b16 %v1961
      %v1975 = vunpack.c.l.b16 %v1962
      %v1976 = vunpack.c.h.b16 %v1962
      %v1977 = vunpack.c.l.b16 %v1963
      %v1978 = vunpack.c.h.b16 %v1963
      %v1979 = vpack.c.b16 %v1969, %v1969
      %v1980 = vpack.c.b16 %v1970, %v1970
      %v1981 = vpack.c.b16 %v1971, %v1971
      %v1982 = vpack.c.b16 %v1972, %v1972
      %v1983 = vpack.c.b16 %v1973, %v1973
      %v1984 = vpack.c.b16 %v1974, %v1974
      %v1985 = vpack.c.b16 %v1975, %v1975
      %v1986 = vpack.c.b16 %v1976, %v1976
      %v1987 = vpack.c.b16 %v1977, %v1977
      %v1988 = vpack.c.b16 %v1978, %v1978
      %1999 = vst [vmem:[%s246] sm:$0xf] %v1979
      %2000 = vst [vmem:[%s246 + $0x4] sm:$0xf] %v1980
      %2001 = vst [vmem:[%s246 + $0x8] sm:$0xf] %v1981
      %2002 = vst [vmem:[%s246 + $0xc] sm:$0xf] %v1982
      %2003 = vst [vmem:[%s246 + $0x10] sm:$0xf] %v1983
      %2004 = vst [vmem:[%s246 + $0x14] sm:$0xf] %v1984
      %2005 = vst [vmem:[%s246 + $0x18] sm:$0xf] %v1985
      %2006 = vst [vmem:[%s246 + $0x1c] sm:$0xf] %v1986
      %2007 = vst [vmem:[%s246 + $0x20] sm:$0xf] %v1987
      %2008 = vst [vmem:[%s246 + $0x24] sm:$0xf] %v1988
      %v2009 = vunpack.c.l.bf16 %v1959
      %v2010 = vunpack.c.h.bf16 %v1959
      %v2011 = vunpack.c.l.bf16 %v1960
      %v2012 = vunpack.c.h.bf16 %v1960
      %v2013 = vunpack.c.l.bf16 %v1961
      %v2014 = vunpack.c.h.bf16 %v1961
      %v2015 = vunpack.c.l.bf16 %v1962
      %v2016 = vunpack.c.h.bf16 %v1962
      %v2017 = vunpack.c.l.bf16 %v1963
      %v2018 = vunpack.c.h.bf16 %v1963
      %v2019 = vld [vmem:[%s2] sm:$0xff]
      %v2020 = vld [vmem:[%s2 + $0x8] sm:$0xff]
      %v2021 = vld [vmem:[%s2 + $0x10] sm:$0xff]
      %v2022 = vld [vmem:[%s2 + $0x18] sm:$0xff]
      %v2023 = vld [vmem:[%s2 + $0x20] sm:$0xff]
      %v2024 = vld [vmem:[%s2 + $0x28] sm:$0xff]
      %v2025 = vld [vmem:[%s2 + $0x30] sm:$0xff]
      %v2026 = vld [vmem:[%s2 + $0x38] sm:$0xff]
      %v2027 = vld [vmem:[%s2 + $0x40] sm:$0xff]
      %v2028 = vld [vmem:[%s2 + $0x48] sm:$0xff]
      %2030 = vset.pattern.permute.xlu0 0
      %2031 = vperm.xlu0 %2030, %v2019
      %v2032 = vpop.permute.xlu0 %2031
      %2035 = vset.pattern.permute.xlu0 0
      %2036 = vperm.xlu0 %2035, %v2020
      %v2037 = vpop.permute.xlu0 %2036
      %2040 = vset.pattern.permute.xlu0 0
      %2041 = vperm.xlu0 %2040, %v2021
      %v2042 = vpop.permute.xlu0 %2041
      %2045 = vset.pattern.permute.xlu0 0
      %2046 = vperm.xlu0 %2045, %v2022
      %v2047 = vpop.permute.xlu0 %2046
      %2050 = vset.pattern.permute.xlu0 0
      %2051 = vperm.xlu0 %2050, %v2023
      %v2052 = vpop.permute.xlu0 %2051
      %2055 = vset.pattern.permute.xlu0 0
      %2056 = vperm.xlu0 %2055, %v2024
      %v2057 = vpop.permute.xlu0 %2056
      %2060 = vset.pattern.permute.xlu0 0
      %2061 = vperm.xlu0 %2060, %v2025
      %v2062 = vpop.permute.xlu0 %2061
      %2065 = vset.pattern.permute.xlu0 0
      %2066 = vperm.xlu0 %2065, %v2026
      %v2067 = vpop.permute.xlu0 %2066
      %2070 = vset.pattern.permute.xlu0 0
      %2071 = vperm.xlu0 %2070, %v2027
      %v2072 = vpop.permute.xlu0 %2071
      %2075 = vset.pattern.permute.xlu0 0
      %2076 = vperm.xlu0 %2075, %v2028
      %v2077 = vpop.permute.xlu0 %2076
      %v2079 = vmul.f32 %v2009, %v2032
      %v2080 = vmul.f32 %v2010, %v2037
      %v2081 = vmul.f32 %v2011, %v2042
      %v2082 = vmul.f32 %v2012, %v2047
      %v2083 = vmul.f32 %v2013, %v2052
      %v2084 = vmul.f32 %v2014, %v2057
      %v2085 = vmul.f32 %v2015, %v2062
      %v2086 = vmul.f32 %v2016, %v2067
      %v2087 = vmul.f32 %v2017, %v2072
      %v2088 = vmul.f32 %v2018, %v2077
      %v2089 = vadd.f32 %v2079, %v2080
      %v2090 = vadd.f32 %v2089, %v2081
      %v2091 = vadd.f32 %v2090, %v2082
      %v2092 = vadd.f32 %v2091, %v2083
      %v2093 = vadd.f32 %v2092, %v2084
      %v2094 = vadd.f32 %v2093, %v2085
      %v2095 = vadd.f32 %v2094, %v2086
      %v2096 = vadd.f32 %v2095, %v2087
      %v2097 = vadd.f32 %v2096, %v2088
      %v2098 = vrot.slane %v2097, 4
      %v2099 = vadd.f32 %v2097, %v2098
      %v2100 = vrot.slane %v2099, 2
      %v2101 = vadd.f32 %v2099, %v2100
      %v2102 = vrot.slane %v2101, 1
      %v2103 = vadd.f32 %v2101, %v2102
      %v2104 = vadd.f32 %v2103, 0.0
      %v2105 = vmul.f32 %v2079, %v2009
      %v2106 = vmul.f32 %v2080, %v2010
      %v2107 = vmul.f32 %v2081, %v2011
      %v2108 = vmul.f32 %v2082, %v2012
      %v2109 = vmul.f32 %v2083, %v2013
      %v2110 = vmul.f32 %v2084, %v2014
      %v2111 = vmul.f32 %v2085, %v2015
      %v2112 = vmul.f32 %v2086, %v2016
      %v2113 = vmul.f32 %v2087, %v2017
      %v2114 = vmul.f32 %v2088, %v2018
      %v2115 = vadd.f32 %v2105, %v2106
      %v2116 = vadd.f32 %v2115, %v2107
      %v2117 = vadd.f32 %v2116, %v2108
      %v2118 = vadd.f32 %v2117, %v2109
      %v2119 = vadd.f32 %v2118, %v2110
      %v2120 = vadd.f32 %v2119, %v2111
      %v2121 = vadd.f32 %v2120, %v2112
      %v2122 = vadd.f32 %v2121, %v2113
      %v2123 = vadd.f32 %v2122, %v2114
      %v2124 = vrot.slane %v2123, 4
      %v2125 = vadd.f32 %v2123, %v2124
      %v2126 = vrot.slane %v2125, 2
      %v2127 = vadd.f32 %v2125, %v2126
      %v2128 = vrot.slane %v2127, 1
      %v2129 = vadd.f32 %v2127, %v2128
      %v2130 = vadd.f32 %v2129, 0.0
      %2131 = vst [vmem:[%s253] sm:$0x1] %v2104
      %2132 = vst [vmem:[%s253 + $0x1] sm:$0x1] %v2130
      %p2133 = scmp.lt.s32.totalorder %s20, 1
      %s2134 = scalar_select %p2133, %s20, 1
      %p2135 = scmp.lt.s32.totalorder %s21, 0
      %s2136 = scalar_select %p2135, %s21, 0
      %s2137 = smul.addr %s2134, 10
      %s2138 = sadd.s32 %s2136, %s2137
      %s2139 = smul.addr %s2138, 4
      %s2140 = scalar_lea.vmem %s3, %s2139
      %p2141 = scmp.lt.s32.totalorder %s20, 1
      %s2142 = scalar_select %p2141, %s20, 1
      %p2143 = scmp.lt.s32.totalorder %s21, 0
      %s2144 = scalar_select %p2143, %s21, 0
      %s2145 = sadd.s32 %s2144, %s2142
      %s2146 = smul.addr %s2145, 2
      %s2147 = scalar_lea.vmem %s4, %s2146
      // Predicated region
      $region33: #{a_call__.7} parent=31 // pred_check
        %p2148 = pneg %p121
      $region34: #{a_call__.7} parent=31 // pred_check_branch
        %2150 = sbr.rel (%p2148) target = $region36
      $region35: #{a_call__.7} parent=31 // pred_region
        _
      $region36: #{a_call__.7} parent=31 // pred_fallthru
        _
      // Predicated region
      $region37: #{a_call__.7} parent=31 // pred_check
        %p2151 = pneg %p149
      $region38: #{a_call__.7} parent=31 // pred_check_branch
        %2153 = sbr.rel (%p2151) target = $region40
      $region39: #{a_call__.7} parent=31 // pred_region
        _
      $region40: #{a_call__.7} parent=31 // pred_fallthru
        _
    $region32: #{a_call__.7} parent=5 // pred_fallthru
      _
    %p2154 = scmp.le.s32.totalorder 2, %s11
    // Predicated region
    $region41: #{a_call__.7} parent=5 // pred_check
      %p2155 = pneg %p2154
    $region42: #{a_call__.7} parent=5 // pred_check_branch
      %2157 = sbr.rel (%p2155) target = $region44
    $region43: #{a_call__.7} parent=5 // pred_region
      %s2158 = ssub.s32 %s11, 2
      // Predicated region
      $region45: #{a_call__.7} parent=43 // pred_check
        %p2159 = pneg %p127
      $region46: #{a_call__.7} parent=43 // pred_check_branch
        %2161 = sbr.rel (%p2159) target = $region48
      $region47: #{a_call__.7} parent=43 // pred_region
        %p2162 = scmp.lt.s32.totalorder %s22, 1
        %s2163 = scalar_select %p2162, %s22, 1
        %p2164 = scmp.lt.s32.totalorder %s23, 0
        %s2165 = scalar_select %p2164, %s23, 0
        %s2166 = smul.addr %s2163, 10
        %s2167 = sadd.s32 %s2165, %s2166
        %s2168 = smul.addr %s2167, 4
        %s2169 = scalar_lea.vmem %s3, %s2168
      $region48: #{a_call__.7} parent=43 // pred_fallthru
        _
      // Predicated region
      $region49: #{a_call__.7} parent=43 // pred_check
        %p2170 = pneg %p155
      $region50: #{a_call__.7} parent=43 // pred_check_branch
        %2172 = sbr.rel (%p2170) target = $region52
      $region51: #{a_call__.7} parent=43 // pred_region
        %p2173 = scmp.lt.s32.totalorder %s22, 1
        %s2174 = scalar_select %p2173, %s22, 1
        %p2175 = scmp.lt.s32.totalorder %s23, 0
        %s2176 = scalar_select %p2175, %s23, 0
        %s2177 = sadd.s32 %s2176, %s2174
        %s2178 = smul.addr %s2177, 2
        %s2179 = scalar_lea.vmem %s4, %s2178
      $region52: #{a_call__.7} parent=43 // pred_fallthru
        _
    $region44: #{a_call__.7} parent=5 // pred_fallthru
      _
  $region6: #{a_call__.7} parent=0 // loop_footer
    %s15 = sadd.s32 1, %s11
  $region7: #{a_call__.7} parent=0 // loop_footer_branch
    %10 = sbr.rel target = $region3
  $region8: #{a_call__.7} parent=0 // loop_exit
    _

</llo_original>
